<compile_context>
chip_gen: v6e
topology: v6e:2x2x1
jax: 0.10.0
libtpu: 0.0.40
codegen_flags: <defaults>
</compile_context>

<pallas_src>
import functools

import jax
import jax.numpy as jnp
from jax.experimental import pallas as pl
from jax.experimental.pallas import tpu as pltpu

EPS = 1e-5

# Tiled (large-graph) path tile sizes.
TM = 512          # node-row tile
TK = 1024         # contraction tile over the neighbor axis


def _round_up(v, m):
    return (v + m - 1) // m * m


def _detect_vmem_limit():
    """Generation-adaptive VMEM budget: ~3/4 of physical, capped at 100 MiB
    (=> ~96 MiB on v5e/v6e with 128 MiB physical, 48 MiB on v7x's 64 MiB)."""
    try:
        cap = int(pltpu.get_tpu_info().vmem_capacity_bytes)
    except Exception:
        return 48 * 1024 * 1024
    return max(32 * 1024 * 1024, min(cap * 3 // 4, 100 * 1024 * 1024))


VMEM_LIMIT = _detect_vmem_limit()


def _cparams(dims=None):
    return pltpu.CompilerParams(dimension_semantics=dims,
                                vmem_limit_bytes=VMEM_LIMIT)


def _pad2(a, rows, cols, dtype=jnp.float32):
    out = jnp.zeros((rows, cols), dtype)
    return out.at[: a.shape[0], : a.shape[1]].set(a.astype(dtype))


def _pad_vec(v, m):
    v = v.reshape(-1).astype(jnp.float32)
    return jnp.zeros((m,), jnp.float32).at[: v.shape[0]].set(v)


# ==========================================================================
# Fused single-kernel path (small / medium graphs: everything VMEM-resident)
# ==========================================================================
def _fused_kernel(x_ref, adj_ref, w1_ref, w2_ref, w3_ref,
                  wf1_ref, wf2_ref, wf3_ref, bf_ref, g_ref, b_ref,
                  o_ref, *, n, np_, hp):
    adj = adj_ref[...]                                        # (Np, Np) bf16
    inv_n = 1.0 / n
    row = jax.lax.broadcasted_iota(jnp.int32, (np_, 1), 0)
    valid = (row < n).astype(jnp.float32)                     # (Np, 1) row mask

    def gcn_bn_relu(h_bf, w_ref, idx):
        # GCNConv: agg = A_hat @ (H @ W)   (bias cancels under batch-stat BN)
        hw = jnp.dot(h_bf, w_ref[...], preferred_element_type=jnp.float32)
        agg = jnp.dot(adj, hw.astype(jnp.bfloat16),
                      preferred_element_type=jnp.float32)     # padded rows == 0
        # Exact two-pass BN batch statistics (stable; padded rows masked).
        mean = jnp.sum(agg, axis=0, keepdims=True) * inv_n
        cent = (agg - mean) * valid
        var = jnp.sum(cent * cent, axis=0, keepdims=True) * inv_n
        scale = g_ref[idx:idx + 1, :] * jax.lax.rsqrt(var + EPS)
        shift = b_ref[idx:idx + 1, :] - mean * scale
        return jnp.maximum(agg * scale + shift, 0.0)          # (Np, Hp) f32

    h1 = gcn_bn_relu(x_ref[...].astype(jnp.bfloat16), w1_ref, 0)
    h2 = gcn_bn_relu(h1.astype(jnp.bfloat16), w2_ref, 1)
    h3 = gcn_bn_relu(h2.astype(jnp.bfloat16), w3_ref, 2)

    # concat([h1,h2,h3]) @ Wf  ==  h1@Wf1 + h2@Wf2 + h3@Wf3
    acc = jnp.dot(h1.astype(jnp.bfloat16), wf1_ref[...],
                  preferred_element_type=jnp.float32)
    acc += jnp.dot(h2.astype(jnp.bfloat16), wf2_ref[...],
                   preferred_element_type=jnp.float32)
    acc += jnp.dot(h3.astype(jnp.bfloat16), wf3_ref[...],
                   preferred_element_type=jnp.float32)
    o_ref[...] = acc + bf_ref[...]


def _forward_fused(x_p, adj_bf, prm, n, np_, fp, hp, cp):
    kern = functools.partial(_fused_kernel, n=n, np_=np_, hp=hp)
    vmem = pl.BlockSpec(memory_space=pltpu.MemorySpace.VMEM)
    return pl.pallas_call(
        kern,
        out_shape=jax.ShapeDtypeStruct((np_, cp), jnp.float32),
        in_specs=[vmem] * 11,
        out_specs=vmem,
        compiler_params=pltpu.CompilerParams(vmem_limit_bytes=VMEM_LIMIT),
    )(x_p, adj_bf, prm["w1"], prm["w2"], prm["w3"],
      prm["wf1"], prm["wf2"], prm["wf3"], prm["bf"],
      prm["gamma"], prm["beta"])


# ==========================================================================
# Tiled / streaming path (large graphs)
# ==========================================================================
def _xw_first_kernel(x_ref, w_ref, hw_ref):
    # Layer-1 XW (no BN/ReLU on the raw input features).
    hw_ref[...] = jnp.dot(x_ref[...].astype(jnp.bfloat16), w_ref[...],
                          preferred_element_type=jnp.float32
                          ).astype(jnp.bfloat16)


def _xw_bnrelu_kernel(agg_ref, sc_ref, sh_ref, w_ref, hw_ref):
    # BN+ReLU of the previous layer fused into its consumer: no f32 "h" in HBM.
    h = jnp.maximum(agg_ref[...] * sc_ref[...] + sh_ref[...], 0.0)
    hw_ref[...] = jnp.dot(h.astype(jnp.bfloat16), w_ref[...],
                          preferred_element_type=jnp.float32
                          ).astype(jnp.bfloat16)


def _agg_kernel(adj_ref, hw_ref, agg_ref):
    # AGG[i] = sum_k A_hat[i, k-tile] @ HW[k-tile]; HW is a VMEM-resident slab
    # (constant index map), adjacency streamed in (TM, TK) bf16 tiles; the f32
    # output block is the accumulator across the "arbitrary" k axis.
    k = pl.program_id(1)

    @pl.when(k == 0)
    def _():
        agg_ref[...] = jnp.zeros_like(agg_ref)

    kk = pl.multiple_of(k * TK, TK)
    agg_ref[...] += jnp.dot(adj_ref[...], hw_ref[pl.ds(kk, TK), :],
                            preferred_element_type=jnp.float32)


def _head_kernel(a1_ref, a2_ref, a3_ref, sc_ref, sh_ref,
                 wf1_ref, wf2_ref, wf3_ref, bf_ref, o_ref):
    # h_l = relu(agg_l * scale_l + shift_l);  out = sum_l h_l @ Wf_l + bf
    def act(a_ref, i):
        return jnp.maximum(a_ref[...] * sc_ref[i:i + 1, :] + sh_ref[i:i + 1, :],
                           0.0)

    acc = jnp.dot(act(a1_ref, 0).astype(jnp.bfloat16), wf1_ref[...],
                  preferred_element_type=jnp.float32)
    acc += jnp.dot(act(a2_ref, 1).astype(jnp.bfloat16), wf2_ref[...],
                   preferred_element_type=jnp.float32)
    acc += jnp.dot(act(a3_ref, 2).astype(jnp.bfloat16), wf3_ref[...],
                   preferred_element_type=jnp.float32)
    o_ref[...] = acc + bf_ref[...]


def _xw_first(x, w, np_, fp, hp):
    return pl.pallas_call(
        _xw_first_kernel,
        out_shape=jax.ShapeDtypeStruct((np_, hp), jnp.bfloat16),
        grid=(np_ // TM,),
        in_specs=[pl.BlockSpec((TM, fp), lambda i: (i, 0)),
                  pl.BlockSpec((fp, hp), lambda i: (0, 0))],
        out_specs=pl.BlockSpec((TM, hp), lambda i: (i, 0)),
        compiler_params=_cparams(("parallel",)),
    )(x, w)


def _xw_bnrelu(agg, scale, shift, w, np_, hp):
    return pl.pallas_call(
        _xw_bnrelu_kernel,
        out_shape=jax.ShapeDtypeStruct((np_, hp), jnp.bfloat16),
        grid=(np_ // TM,),
        in_specs=[pl.BlockSpec((TM, hp), lambda i: (i, 0)),
                  pl.BlockSpec((1, hp), lambda i: (0, 0)),
                  pl.BlockSpec((1, hp), lambda i: (0, 0)),
                  pl.BlockSpec((hp, hp), lambda i: (0, 0))],
        out_specs=pl.BlockSpec((TM, hp), lambda i: (i, 0)),
        compiler_params=_cparams(("parallel",)),
    )(agg, scale, shift, w)


def _aggregate(adj_bf, hw, np_, hp):
    # NOTE: pipeline_mode=pl.Buffered(3) on the adjacency spec is a further
    # few-% option once the loop is purely DMA-bound; default double-buffering
    # kept here for robustness.  For extremely large Np on v7x, the resident
    # HW slab (np_*hp*2 B, x2 buffers) should be re-budgeted against 48 MiB.
    t, kt = np_ // TM, np_ // TK
    return pl.pallas_call(
        _agg_kernel,
        out_shape=jax.ShapeDtypeStruct((np_, hp), jnp.float32),
        grid=(t, kt),
        in_specs=[pl.BlockSpec((TM, TK), lambda i, k: (i, k)),
                  pl.BlockSpec((np_, hp), lambda i, k: (0, 0))],   # resident HW
        out_specs=pl.BlockSpec((TM, hp), lambda i, k: (i, 0)),
        compiler_params=_cparams(("parallel", "arbitrary")),
        cost_estimate=pl.CostEstimate(
            flops=2 * np_ * np_ * hp, transcendentals=0,
            bytes_accessed=np_ * np_ * 2 + np_ * hp * 2 + np_ * hp * 4),
    )(adj_bf, hw)


def _head(a1, a2, a3, sc, sh, wf1, wf2, wf3, bf, np_, hp, cp):
    return pl.pallas_call(
        _head_kernel,
        out_shape=jax.ShapeDtypeStruct((np_, cp), jnp.float32),
        grid=(np_ // TM,),
        in_specs=[pl.BlockSpec((TM, hp), lambda i: (i, 0)),
                  pl.BlockSpec((TM, hp), lambda i: (i, 0)),
                  pl.BlockSpec((TM, hp), lambda i: (i, 0)),
                  pl.BlockSpec((3, hp), lambda i: (0, 0)),
                  pl.BlockSpec((3, hp), lambda i: (0, 0)),
                  pl.BlockSpec((hp, cp), lambda i: (0, 0)),
                  pl.BlockSpec((hp, cp), lambda i: (0, 0)),
                  pl.BlockSpec((hp, cp), lambda i: (0, 0)),
                  pl.BlockSpec((1, cp), lambda i: (0, 0))],
        out_specs=pl.BlockSpec((TM, cp), lambda i: (i, 0)),
        compiler_params=_cparams(("parallel",)),
    )(a1, a2, a3, sc, sh, wf1, wf2, wf3, bf)


def _forward_tiled(x_p, adj_bf, prm, n, np_, fp, hp, cp):
    ws = (prm["w1"], prm["w2"], prm["w3"])
    aggs, scales, shifts = [], [], []
    for layer in range(3):
        if layer == 0:
            hw = _xw_first(x_p, ws[0], np_, fp, hp)
        else:
            hw = _xw_bnrelu(aggs[-1], scales[-1].reshape(1, hp),
                            shifts[-1].reshape(1, hp), ws[layer], np_, hp)
        agg = _aggregate(adj_bf, hw, np_, hp)

        # Exact two-pass BN batch stats over the n real rows (stable; the
        # O(Np*hp) traffic is negligible vs the Np^2 adjacency stream).
        mean = jnp.sum(agg[:n], axis=0) / n
        var = jnp.sum(jnp.square(agg[:n] - mean), axis=0) / n
        scale = prm["gamma"][layer] * jax.lax.rsqrt(var + EPS)
        shift = prm["beta"][layer] - mean * scale

        aggs.append(agg)
        scales.append(scale)
        shifts.append(shift)

    sc = jnp.stack(scales)          # (3, hp)
    sh = jnp.stack(shifts)          # (3, hp)
    return _head(aggs[0], aggs[1], aggs[2], sc, sh,
                 prm["wf1"], prm["wf2"], prm["wf3"], prm["bf"], np_, hp, cp)


# ==========================================================================
# Forward pass, planning & preprocessing
# ==========================================================================
def padded_num_nodes(n, fused):
    if fused:
        return _round_up(max(n, 256), 256)
    return _round_up(max(n, TK), TK)       # divisible by both TM and TK


def use_fused_path(n, dim_node, dim_hidden):
    """Pick the fully fused single-kernel path when the resident working set
    (adjacency counted twice for safety + activations) fits the VMEM budget."""
    np_f = padded_num_nodes(n, fused=True)
    fp = _round_up(dim_node, 128)
    hp = _round_up(dim_hidden, 128)
    est = (2 * np_f * np_f * 2          # bf16 adjacency (buffer + loaded value)
           + np_f * fp * 4              # padded features
           + 8 * np_f * hp * 4)         # live f32 activations / temporaries
    return np_f <= 2048 and est <= VMEM_LIMIT // 2


def preprocess_adjacency(adj_norm, np_):
    """Pad the dense normalized adjacency to (np_, np_) and cast to bf16.
    Done once per graph, OUTSIDE the per-call forward (perf review item)."""
    return _pad2(adj_norm, np_, np_, jnp.bfloat16)


def _prepare_params(params, h, fp, hp, cp):
    wf = params["wf"]                      # (3*hidden, classes)
    return dict(
        w1=_pad2(params["w1"], fp, hp, jnp.bfloat16),
        w2=_pad2(params["w2"], hp, hp, jnp.bfloat16),
        w3=_pad2(params["w3"], hp, hp, jnp.bfloat16),
        wf1=_pad2(wf[:h], hp, cp, jnp.bfloat16),
        wf2=_pad2(wf[h:2 * h], hp, cp, jnp.bfloat16),
        wf3=_pad2(wf[2 * h:], hp, cp, jnp.bfloat16),
        bf=_pad2(params["bf"].reshape(1, -1), 1, cp, jnp.float32),
        gamma=jnp.stack([_pad_vec(params[k], hp) for k in ("g1", "g2", "g3")]),
        beta=jnp.stack([_pad_vec(params[k], hp) for k in ("be1", "be2", "be3")]),
    )
    # NOTE: GCNConv biases (b1/b2/b3) cancel exactly under training-mode
    # BatchNorm (constant per-feature shift removed by the batch mean).


def gcn_3l_agg_forward(x, adj_bf, params, *, n, fused):
    """x: (N, dim_node) f32; adj_bf: (Np, Np) bf16 pre-padded normalized
    adjacency (see preprocess_adjacency); params: dict of arrays."""
    f = x.shape[1]
    h = params["w1"].shape[1]
    c = params["wf"].shape[1]
    np_ = adj_bf.shape[0]
    fp = _round_up(f, 128)
    hp = _round_up(h, 128)
    cp = _round_up(c, 128)

    prm = _prepare_params(params, h, fp, hp, cp)
    x_p = _pad2(x, np_, fp, jnp.float32)

    if fused:
        out_p = _forward_fused(x_p, adj_bf, prm, n, np_, fp, hp, cp)
    else:
        out_p = _forward_tiled(x_p, adj_bf, prm, n, np_, fp, hp, cp)
    # Readout is identity (node-level); Dropout is identity (inference).
    return out_p[:n, :c]


# ==========================================================================
# Graph preprocessing, params, pure-JAX reference (for validation)
# ==========================================================================
def build_norm_adj(edge_index, num_nodes):
    """Dense symmetric-normalized adjacency with self loops (GCNConv norm)."""
    src, dst = edge_index[0], edge_index[1]
    a = jnp.zeros((num_nodes, num_nodes), jnp.float32)
    a = a.at[dst, src].add(1.0)                      # messages flow src -> dst
    a = a + jnp.eye(num_nodes, dtype=jnp.float32)    # self loops
    deg = jnp.sum(a, axis=1)
    dinv = jnp.where(deg > 0, jax.lax.rsqrt(deg), 0.0)
    return dinv[:, None] * a * dinv[None, :]


def xavier_uniform(key, fan_in, fan_out):
    bound = (6.0 / (fan_in + fan_out)) ** 0.5
    return jax.random.uniform(key, (fan_in, fan_out), jnp.float32,
                              minval=-bound, maxval=bound)


def init_params(key, dim_node, dim_hidden, num_classes):
    k = jax.random.split(key, 4)
    return {
        "w1": xavier_uniform(k[0], dim_node, dim_hidden),
        "b1": jnp.zeros((1, dim_hidden), jnp.float32),
        "w2": xavier_uniform(k[1], dim_hidden, dim_hidden),
        "b2": jnp.zeros((1, dim_hidden), jnp.float32),
        "w3": xavier_uniform(k[2], dim_hidden, dim_hidden),
        "b3": jnp.zeros((1, dim_hidden), jnp.float32),
        "g1": jnp.ones((1, dim_hidden), jnp.float32),
        "be1": jnp.zeros((1, dim_hidden), jnp.float32),
        "g2": jnp.ones((1, dim_hidden), jnp.float32),
        "be2": jnp.zeros((1, dim_hidden), jnp.float32),
        "g3": jnp.ones((1, dim_hidden), jnp.float32),
        "be3": jnp.zeros((1, dim_hidden), jnp.float32),
        "wf": xavier_uniform(k[3], dim_hidden * 3, num_classes),
        "bf": jnp.zeros((1, num_classes), jnp.float32),
    }


def reference_forward(x, adj, params):
    """Pure f32 JAX reference of the PyTorch module (training-mode BN)."""
    h = x
    stack = []
    for wk, gk, bk in (("w1", "g1", "be1"), ("w2", "g2", "be2"),
                       ("w3", "g3", "be3")):
        agg = adj @ (h @ params[wk])
        mean = jnp.mean(agg, axis=0)
        var = jnp.mean((agg - mean) ** 2, axis=0)
        hn = (agg - mean) * (params[gk].reshape(-1) * jax.lax.rsqrt(var + EPS))
        hn = hn + params[bk].reshape(-1)
        h = jnp.maximum(hn, 0.0)
        stack.append(h)
    cat = jnp.concatenate(stack, axis=1)
    return cat @ params["wf"] + params["bf"].reshape(-1)


# ==========================================================================
if __name__ == "__main__":
    key = jax.random.PRNGKey(0)
    k_x, k_e, k_p = jax.random.split(key, 3)

    num_nodes, dim_node, dim_hidden, num_classes, num_edges = 16, 8, 32, 4, 40

    x = jax.random.normal(k_x, (num_nodes, dim_node), jnp.float32)
    edge_index = jax.random.randint(k_e, (2, num_edges), 0, num_nodes,
                                    dtype=jnp.int32)
    adj_norm = build_norm_adj(edge_index, num_nodes)
    params = init_params(k_p, dim_node, dim_hidden, num_classes)

    # ---- fused single-kernel path (what this graph size actually uses) ----
    assert use_fused_path(num_nodes, dim_node, dim_hidden)
    np_f = padded_num_nodes(num_nodes, fused=True)
    adj_f = preprocess_adjacency(adj_norm, np_f)          # once per graph
    fwd_fused = jax.jit(lambda xx, aa, pp: gcn_3l_agg_forward(
        xx, aa, pp, n=num_nodes, fused=True))
    out = fwd_fused(x, adj_f, params)
    jax.block_until_ready(out)
    assert out.shape == (num_nodes, num_classes)
    assert bool(jnp.all(jnp.isfinite(out)))

    # ---- tiled / streaming path (large-graph code path), exercised too ----
    np_t = padded_num_nodes(num_nodes, fused=False)
    adj_t = preprocess_adjacency(adj_norm, np_t)          # once per graph
    fwd_tiled = jax.jit(lambda xx, aa, pp: gcn_3l_agg_forward(
        xx, aa, pp, n=num_nodes, fused=False))
    out_t = fwd_tiled(x, adj_t, params)
    jax.block_until_ready(out_t)
    assert out_t.shape == (num_nodes, num_classes)

    # ---- validation against the pure-f32 JAX reference ----
    ref = reference_forward(x, adj_norm, params)
    d_paths = float(jnp.max(jnp.abs(out - out_t)))
    d_ref = float(jnp.max(jnp.abs(out - ref)))
    assert d_paths < 5e-2, f"fused vs tiled mismatch: {d_paths}"
    assert d_ref < 5e-1, f"kernel vs f32 reference mismatch: {d_ref}"

    print("KERNEL_OK")
</pallas_src>

<mosaic_0001>
module attributes {stable_mosaic.version = 11 : i64} {
  func.func @_fused_kernel(%arg0: memref<256x128xf32, #tpu.memory_space<vmem>>, %arg1: memref<256x256xbf16, #tpu.memory_space<vmem>>, %arg2: memref<128x128xbf16, #tpu.memory_space<vmem>>, %arg3: memref<128x128xbf16, #tpu.memory_space<vmem>>, %arg4: memref<128x128xbf16, #tpu.memory_space<vmem>>, %arg5: memref<128x128xbf16, #tpu.memory_space<vmem>>, %arg6: memref<128x128xbf16, #tpu.memory_space<vmem>>, %arg7: memref<128x128xbf16, #tpu.memory_space<vmem>>, %arg8: memref<1x128xf32, #tpu.memory_space<vmem>>, %arg9: memref<3x128xf32, #tpu.memory_space<vmem>>, %arg10: memref<3x128xf32, #tpu.memory_space<vmem>>, %arg11: memref<256x128xf32, #tpu.memory_space<vmem>>) attributes {dimension_semantics = [], scalar_prefetch = 0 : i64, scratch_operands = 0 : i64, tpu.core_type = #tpu.core_type<tc>} {
    %c0 = arith.constant 0 : index
    %c0_0 = arith.constant 0 : index
    %0 = vector.load %arg1[%c0, %c0_0] : memref<256x256xbf16, #tpu.memory_space<vmem>>, vector<256x256xbf16>
    %1 = tpu.iota {dimensions = array<i32: 0>} : vector<256x1xi32>
    %c16_i32 = arith.constant 16 : i32
    %2 = vector.broadcast %c16_i32 : i32 to vector<256x1xi32>
    %3 = arith.cmpi slt, %1, %2 : vector<256x1xi32>
    %4 = arith.extui %3 : vector<256x1xi1> to vector<256x1xi32>
    %5 = arith.sitofp %4 : vector<256x1xi32> to vector<256x1xf32>
    %c0_1 = arith.constant 0 : index
    %c0_2 = arith.constant 0 : index
    %6 = vector.load %arg0[%c0_1, %c0_2] : memref<256x128xf32, #tpu.memory_space<vmem>>, vector<256x128xf32>
    %7 = arith.truncf %6 : vector<256x128xf32> to vector<256x128xbf16>
    %c0_3 = arith.constant 0 : index
    %c0_4 = arith.constant 0 : index
    %8 = vector.load %arg2[%c0_3, %c0_4] : memref<128x128xbf16, #tpu.memory_space<vmem>>, vector<128x128xbf16>
    %cst = arith.constant dense<0.000000e+00> : vector<256x128xf32>
    %9 = tpu.matmul %7, %8, %cst {dimension_numbers = #tpu.dot_dimension_numbers<[1], [0], [0], [1], [0, 0, 1, 1], [], []>} : vector<256x128xbf16>, vector<128x128xbf16>, vector<256x128xf32> -> vector<256x128xf32>
    %10 = arith.truncf %9 : vector<256x128xf32> to vector<256x128xbf16>
    %cst_5 = arith.constant dense<0.000000e+00> : vector<256x128xf32>
    %11 = tpu.matmul %0, %10, %cst_5 {dimension_numbers = #tpu.dot_dimension_numbers<[1], [0], [0], [1], [0, 0, 1, 1], [], []>} : vector<256x256xbf16>, vector<256x128xbf16>, vector<256x128xf32> -> vector<256x128xf32>
    %cst_6 = arith.constant dense<0.000000e+00> : vector<128xf32>
    %12 = vector.multi_reduction <add>, %11, %cst_6 [0] : vector<256x128xf32> to vector<128xf32>
    %13 = vector.shape_cast %12 : vector<128xf32> to vector<1x128xf32>
    %cst_7 = arith.constant 6.250000e-02 : f32
    %14 = vector.broadcast %cst_7 : f32 to vector<1x128xf32>
    %15 = arith.mulf %13, %14 : vector<1x128xf32>
    %16 = vector.broadcast %15 : vector<1x128xf32> to vector<256x128xf32>
    %17 = arith.subf %11, %16 : vector<256x128xf32>
    %18 = vector.broadcast %5 : vector<256x1xf32> to vector<256x128xf32>
    %19 = arith.mulf %17, %18 : vector<256x128xf32>
    %20 = arith.mulf %19, %19 : vector<256x128xf32>
    %cst_8 = arith.constant dense<0.000000e+00> : vector<128xf32>
    %21 = vector.multi_reduction <add>, %20, %cst_8 [0] : vector<256x128xf32> to vector<128xf32>
    %22 = vector.shape_cast %21 : vector<128xf32> to vector<1x128xf32>
    %cst_9 = arith.constant 6.250000e-02 : f32
    %23 = vector.broadcast %cst_9 : f32 to vector<1x128xf32>
    %24 = arith.mulf %22, %23 : vector<1x128xf32>
    %c0_10 = arith.constant 0 : index
    %c0_11 = arith.constant 0 : index
    %25 = vector.load %arg9[%c0_10, %c0_11] : memref<3x128xf32, #tpu.memory_space<vmem>>, vector<1x128xf32>
    %cst_12 = arith.constant 9.99999974E-6 : f32
    %26 = vector.broadcast %cst_12 : f32 to vector<1x128xf32>
    %27 = arith.addf %24, %26 : vector<1x128xf32>
    %28 = math.rsqrt %27 : vector<1x128xf32>
    %29 = arith.mulf %25, %28 : vector<1x128xf32>
    %c0_13 = arith.constant 0 : index
    %c0_14 = arith.constant 0 : index
    %30 = vector.load %arg10[%c0_13, %c0_14] : memref<3x128xf32, #tpu.memory_space<vmem>>, vector<1x128xf32>
    %31 = arith.mulf %15, %29 : vector<1x128xf32>
    %32 = arith.subf %30, %31 : vector<1x128xf32>
    %33 = vector.broadcast %29 : vector<1x128xf32> to vector<256x128xf32>
    %34 = arith.mulf %11, %33 : vector<256x128xf32>
    %35 = vector.broadcast %32 : vector<1x128xf32> to vector<256x128xf32>
    %36 = arith.addf %34, %35 : vector<256x128xf32>
    %cst_15 = arith.constant 0.000000e+00 : f32
    %37 = vector.broadcast %cst_15 : f32 to vector<256x128xf32>
    %38 = arith.maximumf %36, %37 : vector<256x128xf32>
    %39 = arith.truncf %38 : vector<256x128xf32> to vector<256x128xbf16>
    %c0_16 = arith.constant 0 : index
    %c0_17 = arith.constant 0 : index
    %40 = vector.load %arg3[%c0_16, %c0_17] : memref<128x128xbf16, #tpu.memory_space<vmem>>, vector<128x128xbf16>
    %cst_18 = arith.constant dense<0.000000e+00> : vector<256x128xf32>
    %41 = tpu.matmul %39, %40, %cst_18 {dimension_numbers = #tpu.dot_dimension_numbers<[1], [0], [0], [1], [0, 0, 1, 1], [], []>} : vector<256x128xbf16>, vector<128x128xbf16>, vector<256x128xf32> -> vector<256x128xf32>
    %42 = arith.truncf %41 : vector<256x128xf32> to vector<256x128xbf16>
    %cst_19 = arith.constant dense<0.000000e+00> : vector<256x128xf32>
    %43 = tpu.matmul %0, %42, %cst_19 {dimension_numbers = #tpu.dot_dimension_numbers<[1], [0], [0], [1], [0, 0, 1, 1], [], []>} : vector<256x256xbf16>, vector<256x128xbf16>, vector<256x128xf32> -> vector<256x128xf32>
    %cst_20 = arith.constant dense<0.000000e+00> : vector<128xf32>
    %44 = vector.multi_reduction <add>, %43, %cst_20 [0] : vector<256x128xf32> to vector<128xf32>
    %45 = vector.shape_cast %44 : vector<128xf32> to vector<1x128xf32>
    %cst_21 = arith.constant 6.250000e-02 : f32
    %46 = vector.broadcast %cst_21 : f32 to vector<1x128xf32>
    %47 = arith.mulf %45, %46 : vector<1x128xf32>
    %48 = vector.broadcast %47 : vector<1x128xf32> to vector<256x128xf32>
    %49 = arith.subf %43, %48 : vector<256x128xf32>
    %50 = vector.broadcast %5 : vector<256x1xf32> to vector<256x128xf32>
    %51 = arith.mulf %49, %50 : vector<256x128xf32>
    %52 = arith.mulf %51, %51 : vector<256x128xf32>
    %cst_22 = arith.constant dense<0.000000e+00> : vector<128xf32>
    %53 = vector.multi_reduction <add>, %52, %cst_22 [0] : vector<256x128xf32> to vector<128xf32>
    %54 = vector.shape_cast %53 : vector<128xf32> to vector<1x128xf32>
    %cst_23 = arith.constant 6.250000e-02 : f32
    %55 = vector.broadcast %cst_23 : f32 to vector<1x128xf32>
    %56 = arith.mulf %54, %55 : vector<1x128xf32>
    %c1 = arith.constant 1 : index
    %c0_24 = arith.constant 0 : index
    %57 = vector.load %arg9[%c1, %c0_24] : memref<3x128xf32, #tpu.memory_space<vmem>>, vector<1x128xf32>
    %cst_25 = arith.constant 9.99999974E-6 : f32
    %58 = vector.broadcast %cst_25 : f32 to vector<1x128xf32>
    %59 = arith.addf %56, %58 : vector<1x128xf32>
    %60 = math.rsqrt %59 : vector<1x128xf32>
    %61 = arith.mulf %57, %60 : vector<1x128xf32>
    %c1_26 = arith.constant 1 : index
    %c0_27 = arith.constant 0 : index
    %62 = vector.load %arg10[%c1_26, %c0_27] : memref<3x128xf32, #tpu.memory_space<vmem>>, vector<1x128xf32>
    %63 = arith.mulf %47, %61 : vector<1x128xf32>
    %64 = arith.subf %62, %63 : vector<1x128xf32>
    %65 = vector.broadcast %61 : vector<1x128xf32> to vector<256x128xf32>
    %66 = arith.mulf %43, %65 : vector<256x128xf32>
    %67 = vector.broadcast %64 : vector<1x128xf32> to vector<256x128xf32>
    %68 = arith.addf %66, %67 : vector<256x128xf32>
    %cst_28 = arith.constant 0.000000e+00 : f32
    %69 = vector.broadcast %cst_28 : f32 to vector<256x128xf32>
    %70 = arith.maximumf %68, %69 : vector<256x128xf32>
    %71 = arith.truncf %70 : vector<256x128xf32> to vector<256x128xbf16>
    %c0_29 = arith.constant 0 : index
    %c0_30 = arith.constant 0 : index
    %72 = vector.load %arg4[%c0_29, %c0_30] : memref<128x128xbf16, #tpu.memory_space<vmem>>, vector<128x128xbf16>
    %cst_31 = arith.constant dense<0.000000e+00> : vector<256x128xf32>
    %73 = tpu.matmul %71, %72, %cst_31 {dimension_numbers = #tpu.dot_dimension_numbers<[1], [0], [0], [1], [0, 0, 1, 1], [], []>} : vector<256x128xbf16>, vector<128x128xbf16>, vector<256x128xf32> -> vector<256x128xf32>
    %74 = arith.truncf %73 : vector<256x128xf32> to vector<256x128xbf16>
    %cst_32 = arith.constant dense<0.000000e+00> : vector<256x128xf32>
    %75 = tpu.matmul %0, %74, %cst_32 {dimension_numbers = #tpu.dot_dimension_numbers<[1], [0], [0], [1], [0, 0, 1, 1], [], []>} : vector<256x256xbf16>, vector<256x128xbf16>, vector<256x128xf32> -> vector<256x128xf32>
    %cst_33 = arith.constant dense<0.000000e+00> : vector<128xf32>
    %76 = vector.multi_reduction <add>, %75, %cst_33 [0] : vector<256x128xf32> to vector<128xf32>
    %77 = vector.shape_cast %76 : vector<128xf32> to vector<1x128xf32>
    %cst_34 = arith.constant 6.250000e-02 : f32
    %78 = vector.broadcast %cst_34 : f32 to vector<1x128xf32>
    %79 = arith.mulf %77, %78 : vector<1x128xf32>
    %80 = vector.broadcast %79 : vector<1x128xf32> to vector<256x128xf32>
    %81 = arith.subf %75, %80 : vector<256x128xf32>
    %82 = vector.broadcast %5 : vector<256x1xf32> to vector<256x128xf32>
    %83 = arith.mulf %81, %82 : vector<256x128xf32>
    %84 = arith.mulf %83, %83 : vector<256x128xf32>
    %cst_35 = arith.constant dense<0.000000e+00> : vector<128xf32>
    %85 = vector.multi_reduction <add>, %84, %cst_35 [0] : vector<256x128xf32> to vector<128xf32>
    %86 = vector.shape_cast %85 : vector<128xf32> to vector<1x128xf32>
    %cst_36 = arith.constant 6.250000e-02 : f32
    %87 = vector.broadcast %cst_36 : f32 to vector<1x128xf32>
    %88 = arith.mulf %86, %87 : vector<1x128xf32>
    %c2 = arith.constant 2 : index
    %c0_37 = arith.constant 0 : index
    %89 = vector.load %arg9[%c2, %c0_37] : memref<3x128xf32, #tpu.memory_space<vmem>>, vector<1x128xf32>
    %cst_38 = arith.constant 9.99999974E-6 : f32
    %90 = vector.broadcast %cst_38 : f32 to vector<1x128xf32>
    %91 = arith.addf %88, %90 : vector<1x128xf32>
    %92 = math.rsqrt %91 : vector<1x128xf32>
    %93 = arith.mulf %89, %92 : vector<1x128xf32>
    %c2_39 = arith.constant 2 : index
    %c0_40 = arith.constant 0 : index
    %94 = vector.load %arg10[%c2_39, %c0_40] : memref<3x128xf32, #tpu.memory_space<vmem>>, vector<1x128xf32>
    %95 = arith.mulf %79, %93 : vector<1x128xf32>
    %96 = arith.subf %94, %95 : vector<1x128xf32>
    %97 = vector.broadcast %93 : vector<1x128xf32> to vector<256x128xf32>
    %98 = arith.mulf %75, %97 : vector<256x128xf32>
    %99 = vector.broadcast %96 : vector<1x128xf32> to vector<256x128xf32>
    %100 = arith.addf %98, %99 : vector<256x128xf32>
    %cst_41 = arith.constant 0.000000e+00 : f32
    %101 = vector.broadcast %cst_41 : f32 to vector<256x128xf32>
    %102 = arith.maximumf %100, %101 : vector<256x128xf32>
    %103 = arith.truncf %38 : vector<256x128xf32> to vector<256x128xbf16>
    %c0_42 = arith.constant 0 : index
    %c0_43 = arith.constant 0 : index
    %104 = vector.load %arg5[%c0_42, %c0_43] : memref<128x128xbf16, #tpu.memory_space<vmem>>, vector<128x128xbf16>
    %cst_44 = arith.constant dense<0.000000e+00> : vector<256x128xf32>
    %105 = tpu.matmul %103, %104, %cst_44 {dimension_numbers = #tpu.dot_dimension_numbers<[1], [0], [0], [1], [0, 0, 1, 1], [], []>} : vector<256x128xbf16>, vector<128x128xbf16>, vector<256x128xf32> -> vector<256x128xf32>
    %106 = arith.truncf %70 : vector<256x128xf32> to vector<256x128xbf16>
    %c0_45 = arith.constant 0 : index
    %c0_46 = arith.constant 0 : index
    %107 = vector.load %arg6[%c0_45, %c0_46] : memref<128x128xbf16, #tpu.memory_space<vmem>>, vector<128x128xbf16>
    %cst_47 = arith.constant dense<0.000000e+00> : vector<256x128xf32>
    %108 = tpu.matmul %106, %107, %cst_47 {dimension_numbers = #tpu.dot_dimension_numbers<[1], [0], [0], [1], [0, 0, 1, 1], [], []>} : vector<256x128xbf16>, vector<128x128xbf16>, vector<256x128xf32> -> vector<256x128xf32>
    %109 = arith.addf %105, %108 : vector<256x128xf32>
    %110 = arith.truncf %102 : vector<256x128xf32> to vector<256x128xbf16>
    %c0_48 = arith.constant 0 : index
    %c0_49 = arith.constant 0 : index
    %111 = vector.load %arg7[%c0_48, %c0_49] : memref<128x128xbf16, #tpu.memory_space<vmem>>, vector<128x128xbf16>
    %cst_50 = arith.constant dense<0.000000e+00> : vector<256x128xf32>
    %112 = tpu.matmul %110, %111, %cst_50 {dimension_numbers = #tpu.dot_dimension_numbers<[1], [0], [0], [1], [0, 0, 1, 1], [], []>} : vector<256x128xbf16>, vector<128x128xbf16>, vector<256x128xf32> -> vector<256x128xf32>
    %113 = arith.addf %109, %112 : vector<256x128xf32>
    %c0_51 = arith.constant 0 : index
    %c0_52 = arith.constant 0 : index
    %114 = vector.load %arg8[%c0_51, %c0_52] : memref<1x128xf32, #tpu.memory_space<vmem>>, vector<1x128xf32>
    %115 = vector.broadcast %114 : vector<1x128xf32> to vector<256x128xf32>
    %116 = arith.addf %113, %115 : vector<256x128xf32>
    %c0_53 = arith.constant 0 : index
    %c0_54 = arith.constant 0 : index
    %117 = vector.load %arg11[%c0_53, %c0_54] : memref<256x128xf32, #tpu.memory_space<vmem>>, vector<256x128xf32>
    tpu.vector_store %arg11[%c0_53, %c0_54], %116 {strides = array<i32>} : memref<256x128xf32, #tpu.memory_space<vmem>>, vector<256x128xf32>,
    return
  }
}

</mosaic_0001>

<llo_original>
// kernel: _lambda_.1
$region0: #{_lambda_.1}
  #allocation0 [shape = 'u32[]', space=smem, size = 0x4, offset = 0x4, fixed_abs, tag = 'smem constant byte address 0x4 - core index']
  #allocation1 [shape = 'u32[144,128]{1,0:T(1,128)}', space=vmem, size = 0x12000, scoped, tag = 'internal scratch']
  %s0 = inlined_call_operand.vmem [shape: f32[256,128], index: 0, kind: input, shape index: {}]
  %s1 = inlined_call_operand.vmem [shape: bf16[256,256], index: 1, kind: input, shape index: {}]
  %s2 = inlined_call_operand.vmem [shape: bf16[128,128], index: 2, kind: input, shape index: {}]
  %s3 = inlined_call_operand.vmem [shape: bf16[128,128], index: 3, kind: input, shape index: {}]
  %s4 = inlined_call_operand.vmem [shape: bf16[128,128], index: 4, kind: input, shape index: {}]
  %s5 = inlined_call_operand.vmem [shape: bf16[128,128], index: 5, kind: input, shape index: {}]
  %s6 = inlined_call_operand.vmem [shape: bf16[128,128], index: 6, kind: input, shape index: {}]
  %s7 = inlined_call_operand.vmem [shape: bf16[128,128], index: 7, kind: input, shape index: {}]
  %s8 = inlined_call_operand.vmem [shape: f32[1,128], index: 8, kind: input, shape index: {}]
  %s9 = inlined_call_operand.vmem [shape: f32[3,128], index: 9, kind: input, shape index: {}]
  %s10 = inlined_call_operand.vmem [shape: f32[3,128], index: 10, kind: input, shape index: {}]
  %s11 = inlined_call_operand.vmem [shape: f32[256,128], index: 11, kind: output, shape index: {}]
  %s12 = sld [smem:[#allocation0]]
  $region54: #{_lambda_.1} parent=0
    _
  %s14 = ssub.s32 1, %s12
  %s15 = scalar_select 0, %s14, %s12
  // Predicated region
  $region2: #{_lambda_.1} parent=0 // pred_check
    _
  $region3: #{_lambda_.1} parent=0 // pred_check_branch
    %17 = sbr.rel (0) target = $region5
  $region4: #{_lambda_.1} parent=0 // pred_region
    _
  $region5: #{_lambda_.1} parent=0 // pred_fallthru
    _
  // Predicated region
  $region6: #{_lambda_.1} parent=0 // pred_check
    _
  $region7: #{_lambda_.1} parent=0 // pred_check_branch
    %19 = sbr.rel (0) target = $region9
  $region8: #{_lambda_.1} parent=0 // pred_region
    _
  $region9: #{_lambda_.1} parent=0 // pred_fallthru
    _
  // Predicated region
  $region10: #{_lambda_.1} parent=0 // pred_check
    _
  $region11: #{_lambda_.1} parent=0 // pred_check_branch
    %21 = sbr.rel (0) target = $region13
  $region12: #{_lambda_.1} parent=0 // pred_region
    _
  $region13: #{_lambda_.1} parent=0 // pred_fallthru
    _
  // Predicated region
  $region14: #{_lambda_.1} parent=0 // pred_check
    _
  $region15: #{_lambda_.1} parent=0 // pred_check_branch
    %23 = sbr.rel (0) target = $region17
  $region16: #{_lambda_.1} parent=0 // pred_region
    _
  $region17: #{_lambda_.1} parent=0 // pred_fallthru
    _
  // Predicated region
  $region18: #{_lambda_.1} parent=0 // pred_check
    _
  $region19: #{_lambda_.1} parent=0 // pred_check_branch
    %25 = sbr.rel (0) target = $region21
  $region20: #{_lambda_.1} parent=0 // pred_region
    _
  $region21: #{_lambda_.1} parent=0 // pred_fallthru
    _
  // Predicated region
  $region22: #{_lambda_.1} parent=0 // pred_check
    _
  $region23: #{_lambda_.1} parent=0 // pred_check_branch
    %27 = sbr.rel (0) target = $region25
  $region24: #{_lambda_.1} parent=0 // pred_region
    _
  $region25: #{_lambda_.1} parent=0 // pred_fallthru
    _
  // Predicated region
  $region26: #{_lambda_.1} parent=0 // pred_check
    _
  $region27: #{_lambda_.1} parent=0 // pred_check_branch
    %29 = sbr.rel (0) target = $region29
  $region28: #{_lambda_.1} parent=0 // pred_region
    _
  $region29: #{_lambda_.1} parent=0 // pred_fallthru
    _
  // Predicated region
  $region30: #{_lambda_.1} parent=0 // pred_check
    _
  $region31: #{_lambda_.1} parent=0 // pred_check_branch
    %31 = sbr.rel (0) target = $region33
  $region32: #{_lambda_.1} parent=0 // pred_region
    _
  $region33: #{_lambda_.1} parent=0 // pred_fallthru
    _
  // Predicated region
  $region34: #{_lambda_.1} parent=0 // pred_check
    _
  $region35: #{_lambda_.1} parent=0 // pred_check_branch
    %33 = sbr.rel (0) target = $region37
  $region36: #{_lambda_.1} parent=0 // pred_region
    _
  $region37: #{_lambda_.1} parent=0 // pred_fallthru
    _
  // Predicated region
  $region38: #{_lambda_.1} parent=0 // pred_check
    _
  $region39: #{_lambda_.1} parent=0 // pred_check_branch
    %35 = sbr.rel (0) target = $region41
  $region40: #{_lambda_.1} parent=0 // pred_region
    _
  $region41: #{_lambda_.1} parent=0 // pred_fallthru
    _
  // Predicated region
  $region42: #{_lambda_.1} parent=0 // pred_check
    _
  $region43: #{_lambda_.1} parent=0 // pred_check_branch
    %37 = sbr.rel (0) target = $region45
  $region44: #{_lambda_.1} parent=0 // pred_region
    _
  $region45: #{_lambda_.1} parent=0 // pred_fallthru
    _
  %v39 = vld [vmem:[%s1] sm:$0xff]
  %v40 = vld [vmem:[%s1 + $0x8] sm:$0xff]
  %v41 = vld [vmem:[%s1 + $0x10] sm:$0xff]
  %v42 = vld [vmem:[%s1 + $0x18] sm:$0xff]
  %v43 = vld [vmem:[%s1 + $0x20] sm:$0xff]
  %v44 = vld [vmem:[%s1 + $0x28] sm:$0xff]
  %v45 = vld [vmem:[%s1 + $0x30] sm:$0xff]
  %v46 = vld [vmem:[%s1 + $0x38] sm:$0xff]
  %v47 = vld [vmem:[%s1 + $0x40] sm:$0xff]
  %v48 = vld [vmem:[%s1 + $0x48] sm:$0xff]
  %v49 = vld [vmem:[%s1 + $0x50] sm:$0xff]
  %v50 = vld [vmem:[%s1 + $0x58] sm:$0xff]
  %v51 = vld [vmem:[%s1 + $0x60] sm:$0xff]
  %v52 = vld [vmem:[%s1 + $0x68] sm:$0xff]
  %v53 = vld [vmem:[%s1 + $0x70] sm:$0xff]
  %v54 = vld [vmem:[%s1 + $0x78] sm:$0xff]
  %v55 = vld [vmem:[%s1 + $0x80] sm:$0xff]
  %v56 = vld [vmem:[%s1 + $0x88] sm:$0xff]
  %v57 = vld [vmem:[%s1 + $0x90] sm:$0xff]
  %v58 = vld [vmem:[%s1 + $0x98] sm:$0xff]
  %v59 = vld [vmem:[%s1 + $0xa0] sm:$0xff]
  %v60 = vld [vmem:[%s1 + $0xa8] sm:$0xff]
  %v61 = vld [vmem:[%s1 + $0xb0] sm:$0xff]
  %v62 = vld [vmem:[%s1 + $0xb8] sm:$0xff]
  %v63 = vld [vmem:[%s1 + $0xc0] sm:$0xff]
  %v64 = vld [vmem:[%s1 + $0xc8] sm:$0xff]
  %v65 = vld [vmem:[%s1 + $0xd0] sm:$0xff]
  %v66 = vld [vmem:[%s1 + $0xd8] sm:$0xff]
  %v67 = vld [vmem:[%s1 + $0xe0] sm:$0xff]
  %v68 = vld [vmem:[%s1 + $0xe8] sm:$0xff]
  %v69 = vld [vmem:[%s1 + $0xf0] sm:$0xff]
  %v70 = vld [vmem:[%s1 + $0xf8] sm:$0xff]
  %v71 = vlaneseq
  %v72 = vshrl.u32 %v71, 7
  %v73 = vadd.s32 %v72, 8
  %v74 = vadd.s32 %v72, 16
  %v75 = vadd.s32 %v72, 24
  %v76 = vadd.s32 %v72, 32
  %v77 = vadd.s32 %v72, 40
  %v78 = vadd.s32 %v72, 48
  %v79 = vadd.s32 %v72, 56
  %v80 = vadd.s32 %v72, 64
  %v81 = vadd.s32 %v72, 72
  %v82 = vadd.s32 %v72, 80
  %v83 = vadd.s32 %v72, 88
  %v84 = vadd.s32 %v72, 96
  %v85 = vadd.s32 %v72, 104
  %v86 = vadd.s32 %v72, 112
  %v87 = vadd.s32 %v72, 120
  %v88 = vadd.s32 %v72, 128
  %v89 = vadd.s32 %v72, 136
  %v90 = vadd.s32 %v72, 144
  %v91 = vadd.s32 %v72, 152
  %v92 = vadd.s32 %v72, 160
  %v93 = vadd.s32 %v72, 168
  %v94 = vadd.s32 %v72, 176
  %v95 = vadd.s32 %v72, 184
  %v96 = vadd.s32 %v72, 192
  %v97 = vadd.s32 %v72, 200
  %v98 = vadd.s32 %v72, 208
  %v99 = vadd.s32 %v72, 216
  %v100 = vadd.s32 %v72, 224
  %v101 = vadd.s32 %v72, 232
  %v102 = vadd.s32 %v72, 240
  %v103 = vadd.s32 %v72, 248
  %vm104 = vcmp.lt.s32.totalorder %v72, 16
  %vm105 = vcmp.lt.s32.totalorder %v73, 16
  %vm106 = vcmp.lt.s32.totalorder %v74, 16
  %vm107 = vcmp.lt.s32.totalorder %v75, 16
  %vm108 = vcmp.lt.s32.totalorder %v76, 16
  %vm109 = vcmp.lt.s32.totalorder %v77, 16
  %vm110 = vcmp.lt.s32.totalorder %v78, 16
  %vm111 = vcmp.lt.s32.totalorder %v79, 16
  %vm112 = vcmp.lt.s32.totalorder %v80, 16
  %vm113 = vcmp.lt.s32.totalorder %v81, 16
  %vm114 = vcmp.lt.s32.totalorder %v82, 16
  %vm115 = vcmp.lt.s32.totalorder %v83, 16
  %vm116 = vcmp.lt.s32.totalorder %v84, 16
  %vm117 = vcmp.lt.s32.totalorder %v85, 16
  %vm118 = vcmp.lt.s32.totalorder %v86, 16
  %vm119 = vcmp.lt.s32.totalorder %v87, 16
  %vm120 = vcmp.lt.s32.totalorder %v88, 16
  %vm121 = vcmp.lt.s32.totalorder %v89, 16
  %vm122 = vcmp.lt.s32.totalorder %v90, 16
  %vm123 = vcmp.lt.s32.totalorder %v91, 16
  %vm124 = vcmp.lt.s32.totalorder %v92, 16
  %vm125 = vcmp.lt.s32.totalorder %v93, 16
  %vm126 = vcmp.lt.s32.totalorder %v94, 16
  %vm127 = vcmp.lt.s32.totalorder %v95, 16
  %vm128 = vcmp.lt.s32.totalorder %v96, 16
  %vm129 = vcmp.lt.s32.totalorder %v97, 16
  %vm130 = vcmp.lt.s32.totalorder %v98, 16
  %vm131 = vcmp.lt.s32.totalorder %v99, 16
  %vm132 = vcmp.lt.s32.totalorder %v100, 16
  %vm133 = vcmp.lt.s32.totalorder %v101, 16
  %vm134 = vcmp.lt.s32.totalorder %v102, 16
  %vm135 = vcmp.lt.s32.totalorder %v103, 16
  %v136 = vsel %vm104, 1, 0
  %v137 = vsel %vm105, 1, 0
  %v138 = vsel %vm106, 1, 0
  %v139 = vsel %vm107, 1, 0
  %v140 = vsel %vm108, 1, 0
  %v141 = vsel %vm109, 1, 0
  %v142 = vsel %vm110, 1, 0
  %v143 = vsel %vm111, 1, 0
  %v144 = vsel %vm112, 1, 0
  %v145 = vsel %vm113, 1, 0
  %v146 = vsel %vm114, 1, 0
  %v147 = vsel %vm115, 1, 0
  %v148 = vsel %vm116, 1, 0
  %v149 = vsel %vm117, 1, 0
  %v150 = vsel %vm118, 1, 0
  %v151 = vsel %vm119, 1, 0
  %v152 = vsel %vm120, 1, 0
  %v153 = vsel %vm121, 1, 0
  %v154 = vsel %vm122, 1, 0
  %v155 = vsel %vm123, 1, 0
  %v156 = vsel %vm124, 1, 0
  %v157 = vsel %vm125, 1, 0
  %v158 = vsel %vm126, 1, 0
  %v159 = vsel %vm127, 1, 0
  %v160 = vsel %vm128, 1, 0
  %v161 = vsel %vm129, 1, 0
  %v162 = vsel %vm130, 1, 0
  %v163 = vsel %vm131, 1, 0
  %v164 = vsel %vm132, 1, 0
  %v165 = vsel %vm133, 1, 0
  %v166 = vsel %vm134, 1, 0
  %v167 = vsel %vm135, 1, 0
  %v168 = vcvt.s32.f32 %v136
  %v169 = vcvt.s32.f32 %v137
  %v170 = vcvt.s32.f32 %v138
  %v171 = vcvt.s32.f32 %v139
  %v172 = vcvt.s32.f32 %v140
  %v173 = vcvt.s32.f32 %v141
  %v174 = vcvt.s32.f32 %v142
  %v175 = vcvt.s32.f32 %v143
  %v176 = vcvt.s32.f32 %v144
  %v177 = vcvt.s32.f32 %v145
  %v178 = vcvt.s32.f32 %v146
  %v179 = vcvt.s32.f32 %v147
  %v180 = vcvt.s32.f32 %v148
  %v181 = vcvt.s32.f32 %v149
  %v182 = vcvt.s32.f32 %v150
  %v183 = vcvt.s32.f32 %v151
  %v184 = vcvt.s32.f32 %v152
  %v185 = vcvt.s32.f32 %v153
  %v186 = vcvt.s32.f32 %v154
  %v187 = vcvt.s32.f32 %v155
  %v188 = vcvt.s32.f32 %v156
  %v189 = vcvt.s32.f32 %v157
  %v190 = vcvt.s32.f32 %v158
  %v191 = vcvt.s32.f32 %v159
  %v192 = vcvt.s32.f32 %v160
  %v193 = vcvt.s32.f32 %v161
  %v194 = vcvt.s32.f32 %v162
  %v195 = vcvt.s32.f32 %v163
  %v196 = vcvt.s32.f32 %v164
  %v197 = vcvt.s32.f32 %v165
  %v198 = vcvt.s32.f32 %v166
  %v199 = vcvt.s32.f32 %v167
  %v200 = vld [vmem:[%s0] sm:$0xff]
  %v201 = vld [vmem:[%s0 + $0x8] sm:$0xff]
  %v202 = vld [vmem:[%s0 + $0x10] sm:$0xff]
  %v203 = vld [vmem:[%s0 + $0x18] sm:$0xff]
  %v204 = vld [vmem:[%s0 + $0x20] sm:$0xff]
  %v205 = vld [vmem:[%s0 + $0x28] sm:$0xff]
  %v206 = vld [vmem:[%s0 + $0x30] sm:$0xff]
  %v207 = vld [vmem:[%s0 + $0x38] sm:$0xff]
  %v208 = vld [vmem:[%s0 + $0x40] sm:$0xff]
  %v209 = vld [vmem:[%s0 + $0x48] sm:$0xff]
  %v210 = vld [vmem:[%s0 + $0x50] sm:$0xff]
  %v211 = vld [vmem:[%s0 + $0x58] sm:$0xff]
  %v212 = vld [vmem:[%s0 + $0x60] sm:$0xff]
  %v213 = vld [vmem:[%s0 + $0x68] sm:$0xff]
  %v214 = vld [vmem:[%s0 + $0x70] sm:$0xff]
  %v215 = vld [vmem:[%s0 + $0x78] sm:$0xff]
  %v216 = vld [vmem:[%s0 + $0x80] sm:$0xff]
  %v217 = vld [vmem:[%s0 + $0x88] sm:$0xff]
  %v218 = vld [vmem:[%s0 + $0x90] sm:$0xff]
  %v219 = vld [vmem:[%s0 + $0x98] sm:$0xff]
  %v220 = vld [vmem:[%s0 + $0xa0] sm:$0xff]
  %v221 = vld [vmem:[%s0 + $0xa8] sm:$0xff]
  %v222 = vld [vmem:[%s0 + $0xb0] sm:$0xff]
  %v223 = vld [vmem:[%s0 + $0xb8] sm:$0xff]
  %v224 = vld [vmem:[%s0 + $0xc0] sm:$0xff]
  %v225 = vld [vmem:[%s0 + $0xc8] sm:$0xff]
  %v226 = vld [vmem:[%s0 + $0xd0] sm:$0xff]
  %v227 = vld [vmem:[%s0 + $0xd8] sm:$0xff]
  %v228 = vld [vmem:[%s0 + $0xe0] sm:$0xff]
  %v229 = vld [vmem:[%s0 + $0xe8] sm:$0xff]
  %v230 = vld [vmem:[%s0 + $0xf0] sm:$0xff]
  %v231 = vld [vmem:[%s0 + $0xf8] sm:$0xff]
  %v232 = vpack.c.bf16 %v201, %v200
  %v233 = vpack.c.bf16 %v203, %v202
  %v234 = vpack.c.bf16 %v205, %v204
  %v235 = vpack.c.bf16 %v207, %v206
  %v236 = vpack.c.bf16 %v209, %v208
  %v237 = vpack.c.bf16 %v211, %v210
  %v238 = vpack.c.bf16 %v213, %v212
  %v239 = vpack.c.bf16 %v215, %v214
  %v240 = vpack.c.bf16 %v217, %v216
  %v241 = vpack.c.bf16 %v219, %v218
  %v242 = vpack.c.bf16 %v221, %v220
  %v243 = vpack.c.bf16 %v223, %v222
  %v244 = vpack.c.bf16 %v225, %v224
  %v245 = vpack.c.bf16 %v227, %v226
  %v246 = vpack.c.bf16 %v229, %v228
  %v247 = vpack.c.bf16 %v231, %v230
  %v248 = vld [vmem:[%s2] sm:$0xf]
  %v249 = vld [vmem:[%s2 + $0x4] sm:$0xf]
  %v250 = vld [vmem:[%s2 + $0x8] sm:$0xf]
  %v251 = vld [vmem:[%s2 + $0xc] sm:$0xf]
  %v252 = vld [vmem:[%s2 + $0x10] sm:$0xf]
  %v253 = vld [vmem:[%s2 + $0x14] sm:$0xf]
  %v254 = vld [vmem:[%s2 + $0x18] sm:$0xf]
  %v255 = vld [vmem:[%s2 + $0x1c] sm:$0xf]
  %v256 = vld [vmem:[%s2 + $0x20] sm:$0xf]
  %v257 = vld [vmem:[%s2 + $0x24] sm:$0xf]
  %v258 = vld [vmem:[%s2 + $0x28] sm:$0xf]
  %v259 = vld [vmem:[%s2 + $0x2c] sm:$0xf]
  %v260 = vld [vmem:[%s2 + $0x30] sm:$0xf]
  %v261 = vld [vmem:[%s2 + $0x34] sm:$0xf]
  %v262 = vld [vmem:[%s2 + $0x38] sm:$0xf]
  %v263 = vld [vmem:[%s2 + $0x3c] sm:$0xf]
  %v280 = vunpack.c.l.b16 %v248
  %v281 = vunpack.c.l.b16 %v249
  %v282 = vunpack.c.l.b16 %v250
  %v283 = vunpack.c.l.b16 %v251
  %v284 = vunpack.c.l.b16 %v252
  %v285 = vunpack.c.l.b16 %v253
  %v286 = vunpack.c.l.b16 %v254
  %v287 = vunpack.c.l.b16 %v255
  %v288 = vunpack.c.l.b16 %v256
  %v289 = vunpack.c.l.b16 %v257
  %v290 = vunpack.c.l.b16 %v258
  %v291 = vunpack.c.l.b16 %v259
  %v292 = vunpack.c.l.b16 %v260
  %v293 = vunpack.c.l.b16 %v261
  %v294 = vunpack.c.l.b16 %v262
  %v295 = vunpack.c.l.b16 %v263
  %v296 = vpack.c.b16 %v281, %v280
  %v297 = vpack.c.b16 %v283, %v282
  %v298 = vpack.c.b16 %v285, %v284
  %v299 = vpack.c.b16 %v287, %v286
  %v300 = vpack.c.b16 %v289, %v288
  %v301 = vpack.c.b16 %v291, %v290
  %v302 = vpack.c.b16 %v293, %v292
  %v303 = vpack.c.b16 %v295, %v294
  %312 = vmatprep.subr.bf16.mxu0 0
  %313 = vmatpush1.bf16.msra.mxu0 %v303
  %314 = vmatprep.subr.bf16.mxu0 0
  %315 = vmatpush1.bf16.msra.mxu0 %v302
  %316 = vmatprep.subr.bf16.mxu0 0
  %317 = vmatpush1.bf16.msra.mxu0 %v301
  %318 = vmatprep.subr.bf16.mxu0 0
  %319 = vmatpush1.bf16.msra.mxu0 %v300
  %320 = vmatprep.subr.bf16.mxu0 0
  %321 = vmatpush1.bf16.msra.mxu0 %v299
  %322 = vmatprep.subr.bf16.mxu0 0
  %323 = vmatpush1.bf16.msra.mxu0 %v298
  %324 = vmatprep.subr.bf16.mxu0 0
  %325 = vmatpush1.bf16.msra.mxu0 %v297
  %326 = vmatprep.subr.bf16.mxu0 0
  %327 = vmatpush1.bf16.msra.mxu0 %v296
  %328 = vmatprep.subr.bf16.mxu0 0
  %329 = vmatpush2.bf16.msra.mxu0 0
  %330 = vmatprep.subr.bf16.mxu0 0
  %331 = vmatpush2.bf16.msra.mxu0 0
  %332 = vmatprep.subr.bf16.mxu0 0
  %333 = vmatpush2.bf16.msra.mxu0 0
  %334 = vmatprep.subr.bf16.mxu0 0
  %335 = vmatpush2.bf16.msra.mxu0 0
  %336 = vmatprep.subr.bf16.mxu0 0
  %337 = vmatpush2.bf16.msra.mxu0 0
  %338 = vmatprep.subr.bf16.mxu0 0
  %339 = vmatpush2.bf16.msra.mxu0 0
  %340 = vmatprep.subr.bf16.mxu0 0
  %341 = vmatpush2.bf16.msra.mxu0 0
  %342 = vmatprep.subr.bf16.mxu0 0
  %343 = vmatpush2.bf16.msra.mxu0 0
  %344 = vmatprep.mubr.bf16.mxu0 0
  %345 = vmatmul.mubr.bf16.gmra.mxu0 %v232
  %v346 = vpop.f32.mrf.mxu0
  %v347 = vadd.f32 0.0, %v346
  %v348 = vpop.f32.mrf.mxu0
  %v349 = vpop.f32.mrf.mxu0
  %v350 = vadd.f32 0.0, %v349
  %v351 = vpop.f32.mrf.mxu0
  %352 = vmatprep.mubr.bf16.mxu0 0
  %353 = vmatmul.mubr.bf16.gmra.mxu0 %v233
  %v354 = vpop.f32.mrf.mxu0
  %v355 = vadd.f32 0.0, %v354
  %v356 = vpop.f32.mrf.mxu0
  %v357 = vpop.f32.mrf.mxu0
  %v358 = vadd.f32 0.0, %v357
  %v359 = vpop.f32.mrf.mxu0
  %360 = vmatprep.mubr.bf16.mxu0 0
  %361 = vmatmul.mubr.bf16.gmra.mxu0 %v234
  %v362 = vpop.f32.mrf.mxu0
  %v363 = vadd.f32 0.0, %v362
  %v364 = vpop.f32.mrf.mxu0
  %v365 = vpop.f32.mrf.mxu0
  %v366 = vadd.f32 0.0, %v365
  %v367 = vpop.f32.mrf.mxu0
  %368 = vmatprep.mubr.bf16.mxu0 0
  %369 = vmatmul.mubr.bf16.gmra.mxu0 %v235
  %v370 = vpop.f32.mrf.mxu0
  %v371 = vadd.f32 0.0, %v370
  %v372 = vpop.f32.mrf.mxu0
  %v373 = vpop.f32.mrf.mxu0
  %v374 = vadd.f32 0.0, %v373
  %v375 = vpop.f32.mrf.mxu0
  %376 = vmatprep.mubr.bf16.mxu0 0
  %377 = vmatmul.mubr.bf16.gmra.mxu0 %v236
  %v378 = vpop.f32.mrf.mxu0
  %v379 = vadd.f32 0.0, %v378
  %v380 = vpop.f32.mrf.mxu0
  %v381 = vpop.f32.mrf.mxu0
  %v382 = vadd.f32 0.0, %v381
  %v383 = vpop.f32.mrf.mxu0
  %384 = vmatprep.mubr.bf16.mxu0 0
  %385 = vmatmul.mubr.bf16.gmra.mxu0 %v237
  %v386 = vpop.f32.mrf.mxu0
  %v387 = vadd.f32 0.0, %v386
  %v388 = vpop.f32.mrf.mxu0
  %v389 = vpop.f32.mrf.mxu0
  %v390 = vadd.f32 0.0, %v389
  %v391 = vpop.f32.mrf.mxu0
  %392 = vmatprep.mubr.bf16.mxu0 0
  %393 = vmatmul.mubr.bf16.gmra.mxu0 %v238
  %v394 = vpop.f32.mrf.mxu0
  %v395 = vadd.f32 0.0, %v394
  %v396 = vpop.f32.mrf.mxu0
  %v397 = vpop.f32.mrf.mxu0
  %v398 = vadd.f32 0.0, %v397
  %v399 = vpop.f32.mrf.mxu0
  %400 = vmatprep.mubr.bf16.mxu0 0
  %401 = vmatmul.mubr.bf16.gmra.mxu0 %v239
  %v402 = vpop.f32.mrf.mxu0
  %v403 = vadd.f32 0.0, %v402
  %v404 = vpop.f32.mrf.mxu0
  %v405 = vpop.f32.mrf.mxu0
  %v406 = vadd.f32 0.0, %v405
  %v407 = vpop.f32.mrf.mxu0
  %408 = vmatprep.mubr.bf16.mxu0 0
  %409 = vmatmul.mubr.bf16.gmra.mxu0 %v240
  %v410 = vpop.f32.mrf.mxu0
  %v411 = vadd.f32 0.0, %v410
  %v412 = vpop.f32.mrf.mxu0
  %v413 = vpop.f32.mrf.mxu0
  %v414 = vadd.f32 0.0, %v413
  %v415 = vpop.f32.mrf.mxu0
  %416 = vmatprep.mubr.bf16.mxu0 0
  %417 = vmatmul.mubr.bf16.gmra.mxu0 %v241
  %v418 = vpop.f32.mrf.mxu0
  %v419 = vadd.f32 0.0, %v418
  %v420 = vpop.f32.mrf.mxu0
  %v421 = vpop.f32.mrf.mxu0
  %v422 = vadd.f32 0.0, %v421
  %v423 = vpop.f32.mrf.mxu0
  %424 = vmatprep.mubr.bf16.mxu0 0
  %425 = vmatmul.mubr.bf16.gmra.mxu0 %v242
  %v426 = vpop.f32.mrf.mxu0
  %v427 = vadd.f32 0.0, %v426
  %v428 = vpop.f32.mrf.mxu0
  %v429 = vpop.f32.mrf.mxu0
  %v430 = vadd.f32 0.0, %v429
  %v431 = vpop.f32.mrf.mxu0
  %432 = vmatprep.mubr.bf16.mxu0 0
  %433 = vmatmul.mubr.bf16.gmra.mxu0 %v243
  %v434 = vpop.f32.mrf.mxu0
  %v435 = vadd.f32 0.0, %v434
  %v436 = vpop.f32.mrf.mxu0
  %v437 = vpop.f32.mrf.mxu0
  %v438 = vadd.f32 0.0, %v437
  %v439 = vpop.f32.mrf.mxu0
  %440 = vmatprep.mubr.bf16.mxu0 0
  %441 = vmatmul.mubr.bf16.gmra.mxu0 %v244
  %v442 = vpop.f32.mrf.mxu0
  %v443 = vadd.f32 0.0, %v442
  %v444 = vpop.f32.mrf.mxu0
  %v445 = vpop.f32.mrf.mxu0
  %v446 = vadd.f32 0.0, %v445
  %v447 = vpop.f32.mrf.mxu0
  %448 = vmatprep.mubr.bf16.mxu0 0
  %449 = vmatmul.mubr.bf16.gmra.mxu0 %v245
  %v450 = vpop.f32.mrf.mxu0
  %v451 = vadd.f32 0.0, %v450
  %v452 = vpop.f32.mrf.mxu0
  %v453 = vpop.f32.mrf.mxu0
  %v454 = vadd.f32 0.0, %v453
  %v455 = vpop.f32.mrf.mxu0
  %456 = vmatprep.mubr.bf16.mxu0 0
  %457 = vmatmul.mubr.bf16.gmra.mxu0 %v246
  %v458 = vpop.f32.mrf.mxu0
  %v459 = vadd.f32 0.0, %v458
  %v460 = vpop.f32.mrf.mxu0
  %v461 = vpop.f32.mrf.mxu0
  %v462 = vadd.f32 0.0, %v461
  %v463 = vpop.f32.mrf.mxu0
  %464 = vmatprep.mubr.bf16.mxu0 0
  %465 = vmatmul.mubr.bf16.gmra.mxu0 %v247
  %v466 = vpop.f32.mrf.mxu0
  %v467 = vadd.f32 0.0, %v466
  %v468 = vpop.f32.mrf.mxu0
  %v469 = vpop.f32.mrf.mxu0
  %v470 = vadd.f32 0.0, %v469
  %v471 = vpop.f32.mrf.mxu0
  %472 = vdwg.mxu0
  %v473 = vpack.c.bf16 %v350, %v347
  %v474 = vpack.c.bf16 %v358, %v355
  %v475 = vpack.c.bf16 %v366, %v363
  %v476 = vpack.c.bf16 %v374, %v371
  %v477 = vpack.c.bf16 %v382, %v379
  %v478 = vpack.c.bf16 %v390, %v387
  %v479 = vpack.c.bf16 %v398, %v395
  %v480 = vpack.c.bf16 %v406, %v403
  %v481 = vpack.c.bf16 %v414, %v411
  %v482 = vpack.c.bf16 %v422, %v419
  %v483 = vpack.c.bf16 %v430, %v427
  %v484 = vpack.c.bf16 %v438, %v435
  %v485 = vpack.c.bf16 %v446, %v443
  %v486 = vpack.c.bf16 %v454, %v451
  %v487 = vpack.c.bf16 %v462, %v459
  %v488 = vpack.c.bf16 %v470, %v467
  %v521 = vunpack.c.l.b16 %v39
  %v522 = vunpack.c.h.b16 %v39
  %v523 = vunpack.c.l.b16 %v40
  %v524 = vunpack.c.h.b16 %v40
  %v525 = vunpack.c.l.b16 %v41
  %v526 = vunpack.c.h.b16 %v41
  %v527 = vunpack.c.l.b16 %v42
  %v528 = vunpack.c.h.b16 %v42
  %v529 = vunpack.c.l.b16 %v43
  %v530 = vunpack.c.h.b16 %v43
  %v531 = vunpack.c.l.b16 %v44
  %v532 = vunpack.c.h.b16 %v44
  %v533 = vunpack.c.l.b16 %v45
  %v534 = vunpack.c.h.b16 %v45
  %v535 = vunpack.c.l.b16 %v46
  %v536 = vunpack.c.h.b16 %v46
  %v537 = vunpack.c.l.b16 %v47
  %v538 = vunpack.c.h.b16 %v47
  %v539 = vunpack.c.l.b16 %v48
  %v540 = vunpack.c.h.b16 %v48
  %v541 = vunpack.c.l.b16 %v49
  %v542 = vunpack.c.h.b16 %v49
  %v543 = vunpack.c.l.b16 %v50
  %v544 = vunpack.c.h.b16 %v50
  %v545 = vunpack.c.l.b16 %v51
  %v546 = vunpack.c.h.b16 %v51
  %v547 = vunpack.c.l.b16 %v52
  %v548 = vunpack.c.h.b16 %v52
  %v549 = vunpack.c.l.b16 %v53
  %v550 = vunpack.c.h.b16 %v53
  %v551 = vunpack.c.l.b16 %v54
  %v552 = vunpack.c.h.b16 %v54
  %v553 = vunpack.c.l.b16 %v55
  %v554 = vunpack.c.h.b16 %v55
  %v555 = vunpack.c.l.b16 %v56
  %v556 = vunpack.c.h.b16 %v56
  %v557 = vunpack.c.l.b16 %v57
  %v558 = vunpack.c.h.b16 %v57
  %v559 = vunpack.c.l.b16 %v58
  %v560 = vunpack.c.h.b16 %v58
  %v561 = vunpack.c.l.b16 %v59
  %v562 = vunpack.c.h.b16 %v59
  %v563 = vunpack.c.l.b16 %v60
  %v564 = vunpack.c.h.b16 %v60
  %v565 = vunpack.c.l.b16 %v61
  %v566 = vunpack.c.h.b16 %v61
  %v567 = vunpack.c.l.b16 %v62
  %v568 = vunpack.c.h.b16 %v62
  %v569 = vunpack.c.l.b16 %v63
  %v570 = vunpack.c.h.b16 %v63
  %v571 = vunpack.c.l.b16 %v64
  %v572 = vunpack.c.h.b16 %v64
  %v573 = vunpack.c.l.b16 %v65
  %v574 = vunpack.c.h.b16 %v65
  %v575 = vunpack.c.l.b16 %v66
  %v576 = vunpack.c.h.b16 %v66
  %v577 = vunpack.c.l.b16 %v67
  %v578 = vunpack.c.h.b16 %v67
  %v579 = vunpack.c.l.b16 %v68
  %v580 = vunpack.c.h.b16 %v68
  %v581 = vunpack.c.l.b16 %v69
  %v582 = vunpack.c.h.b16 %v69
  %v583 = vunpack.c.l.b16 %v70
  %v584 = vunpack.c.h.b16 %v70
  %v585 = vpack.c.b16 %v523, %v521
  %v586 = vpack.c.b16 %v524, %v522
  %v587 = vpack.c.b16 %v527, %v525
  %v588 = vpack.c.b16 %v528, %v526
  %v589 = vpack.c.b16 %v531, %v529
  %v590 = vpack.c.b16 %v532, %v530
  %v591 = vpack.c.b16 %v535, %v533
  %v592 = vpack.c.b16 %v536, %v534
  %v593 = vpack.c.b16 %v539, %v537
  %v594 = vpack.c.b16 %v540, %v538
  %v595 = vpack.c.b16 %v543, %v541
  %v596 = vpack.c.b16 %v544, %v542
  %v597 = vpack.c.b16 %v547, %v545
  %v598 = vpack.c.b16 %v548, %v546
  %v599 = vpack.c.b16 %v551, %v549
  %v600 = vpack.c.b16 %v552, %v550
  %v601 = vpack.c.b16 %v555, %v553
  %v602 = vpack.c.b16 %v556, %v554
  %v603 = vpack.c.b16 %v559, %v557
  %v604 = vpack.c.b16 %v560, %v558
  %v605 = vpack.c.b16 %v563, %v561
  %v606 = vpack.c.b16 %v564, %v562
  %v607 = vpack.c.b16 %v567, %v565
  %v608 = vpack.c.b16 %v568, %v566
  %v609 = vpack.c.b16 %v571, %v569
  %v610 = vpack.c.b16 %v572, %v570
  %v611 = vpack.c.b16 %v575, %v573
  %v612 = vpack.c.b16 %v576, %v574
  %v613 = vpack.c.b16 %v579, %v577
  %v614 = vpack.c.b16 %v580, %v578
  %v615 = vpack.c.b16 %v583, %v581
  %v616 = vpack.c.b16 %v584, %v582
  %649 = vmatprep.subr.bf16.mxu0 0
  %650 = vmatpush1.bf16.msra.mxu0 %v480
  %651 = vmatprep.subr.bf16.mxu0 0
  %652 = vmatpush1.bf16.msra.mxu0 %v479
  %653 = vmatprep.subr.bf16.mxu0 0
  %654 = vmatpush1.bf16.msra.mxu0 %v478
  %655 = vmatprep.subr.bf16.mxu0 0
  %656 = vmatpush1.bf16.msra.mxu0 %v477
  %657 = vmatprep.subr.bf16.mxu0 0
  %658 = vmatpush1.bf16.msra.mxu0 %v476
  %659 = vmatprep.subr.bf16.mxu0 0
  %660 = vmatpush1.bf16.msra.mxu0 %v475
  %661 = vmatprep.subr.bf16.mxu0 0
  %662 = vmatpush1.bf16.msra.mxu0 %v474
  %663 = vmatprep.subr.bf16.mxu0 0
  %664 = vmatpush1.bf16.msra.mxu0 %v473
  %665 = vmatprep.subr.bf16.mxu0 0
  %666 = vmatpush2.bf16.msra.mxu0 %v488
  %667 = vmatprep.subr.bf16.mxu0 0
  %668 = vmatpush2.bf16.msra.mxu0 %v487
  %669 = vmatprep.subr.bf16.mxu0 0
  %670 = vmatpush2.bf16.msra.mxu0 %v486
  %671 = vmatprep.subr.bf16.mxu0 0
  %672 = vmatpush2.bf16.msra.mxu0 %v485
  %673 = vmatprep.subr.bf16.mxu0 0
  %674 = vmatpush2.bf16.msra.mxu0 %v484
  %675 = vmatprep.subr.bf16.mxu0 0
  %676 = vmatpush2.bf16.msra.mxu0 %v483
  %677 = vmatprep.subr.bf16.mxu0 0
  %678 = vmatpush2.bf16.msra.mxu0 %v482
  %679 = vmatprep.subr.bf16.mxu0 0
  %680 = vmatpush2.bf16.msra.mxu0 %v481
  %681 = vmatprep.mubr.bf16.mxu0 %v586
  %682 = vmatmul.mubr.bf16.gmra.mxu0 %v585
  %v683 = vpop.f32.mrf.mxu0
  %v684 = vadd.f32 0.0, %v683
  %v685 = vpop.f32.mrf.mxu0
  %v686 = vpop.f32.mrf.mxu0
  %v687 = vadd.f32 0.0, %v686
  %v688 = vpop.f32.mrf.mxu0
  %689 = vmatprep.mubr.bf16.mxu0 %v588
  %690 = vmatmul.mubr.bf16.gmra.mxu0 %v587
  %v691 = vpop.f32.mrf.mxu0
  %v692 = vadd.f32 0.0, %v691
  %v693 = vpop.f32.mrf.mxu0
  %v694 = vpop.f32.mrf.mxu0
  %v695 = vadd.f32 0.0, %v694
  %v696 = vpop.f32.mrf.mxu0
  %697 = vmatprep.mubr.bf16.mxu0 %v590
  %698 = vmatmul.mubr.bf16.gmra.mxu0 %v589
  %v699 = vpop.f32.mrf.mxu0
  %v700 = vadd.f32 0.0, %v699
  %v701 = vpop.f32.mrf.mxu0
  %v702 = vpop.f32.mrf.mxu0
  %v703 = vadd.f32 0.0, %v702
  %v704 = vpop.f32.mrf.mxu0
  %705 = vmatprep.mubr.bf16.mxu0 %v592
  %706 = vmatmul.mubr.bf16.gmra.mxu0 %v591
  %v707 = vpop.f32.mrf.mxu0
  %v708 = vadd.f32 0.0, %v707
  %v709 = vpop.f32.mrf.mxu0
  %v710 = vpop.f32.mrf.mxu0
  %v711 = vadd.f32 0.0, %v710
  %v712 = vpop.f32.mrf.mxu0
  %713 = vmatprep.mubr.bf16.mxu0 %v594
  %714 = vmatmul.mubr.bf16.gmra.mxu0 %v593
  %v715 = vpop.f32.mrf.mxu0
  %v716 = vadd.f32 0.0, %v715
  %v717 = vpop.f32.mrf.mxu0
  %v718 = vpop.f32.mrf.mxu0
  %v719 = vadd.f32 0.0, %v718
  %v720 = vpop.f32.mrf.mxu0
  %721 = vmatprep.mubr.bf16.mxu0 %v596
  %722 = vmatmul.mubr.bf16.gmra.mxu0 %v595
  %v723 = vpop.f32.mrf.mxu0
  %v724 = vadd.f32 0.0, %v723
  %v725 = vpop.f32.mrf.mxu0
  %v726 = vpop.f32.mrf.mxu0
  %v727 = vadd.f32 0.0, %v726
  %v728 = vpop.f32.mrf.mxu0
  %729 = vmatprep.mubr.bf16.mxu0 %v598
  %730 = vmatmul.mubr.bf16.gmra.mxu0 %v597
  %v731 = vpop.f32.mrf.mxu0
  %v732 = vadd.f32 0.0, %v731
  %v733 = vpop.f32.mrf.mxu0
  %v734 = vpop.f32.mrf.mxu0
  %v735 = vadd.f32 0.0, %v734
  %v736 = vpop.f32.mrf.mxu0
  %737 = vmatprep.mubr.bf16.mxu0 %v600
  %738 = vmatmul.mubr.bf16.gmra.mxu0 %v599
  %v739 = vpop.f32.mrf.mxu0
  %v740 = vadd.f32 0.0, %v739
  %v741 = vpop.f32.mrf.mxu0
  %v742 = vpop.f32.mrf.mxu0
  %v743 = vadd.f32 0.0, %v742
  %v744 = vpop.f32.mrf.mxu0
  %745 = vmatprep.mubr.bf16.mxu0 %v602
  %746 = vmatmul.mubr.bf16.gmra.mxu0 %v601
  %v747 = vpop.f32.mrf.mxu0
  %v748 = vadd.f32 0.0, %v747
  %v749 = vpop.f32.mrf.mxu0
  %v750 = vpop.f32.mrf.mxu0
  %v751 = vadd.f32 0.0, %v750
  %v752 = vpop.f32.mrf.mxu0
  %753 = vmatprep.mubr.bf16.mxu0 %v604
  %754 = vmatmul.mubr.bf16.gmra.mxu0 %v603
  %v755 = vpop.f32.mrf.mxu0
  %v756 = vadd.f32 0.0, %v755
  %v757 = vpop.f32.mrf.mxu0
  %v758 = vpop.f32.mrf.mxu0
  %v759 = vadd.f32 0.0, %v758
  %v760 = vpop.f32.mrf.mxu0
  %761 = vmatprep.mubr.bf16.mxu0 %v606
  %762 = vmatmul.mubr.bf16.gmra.mxu0 %v605
  %v763 = vpop.f32.mrf.mxu0
  %v764 = vadd.f32 0.0, %v763
  %v765 = vpop.f32.mrf.mxu0
  %v766 = vpop.f32.mrf.mxu0
  %v767 = vadd.f32 0.0, %v766
  %v768 = vpop.f32.mrf.mxu0
  %769 = vmatprep.mubr.bf16.mxu0 %v608
  %770 = vmatmul.mubr.bf16.gmra.mxu0 %v607
  %v771 = vpop.f32.mrf.mxu0
  %v772 = vadd.f32 0.0, %v771
  %v773 = vpop.f32.mrf.mxu0
  %v774 = vpop.f32.mrf.mxu0
  %v775 = vadd.f32 0.0, %v774
  %v776 = vpop.f32.mrf.mxu0
  %777 = vmatprep.mubr.bf16.mxu0 %v610
  %778 = vmatmul.mubr.bf16.gmra.mxu0 %v609
  %v779 = vpop.f32.mrf.mxu0
  %v780 = vadd.f32 0.0, %v779
  %v781 = vpop.f32.mrf.mxu0
  %v782 = vpop.f32.mrf.mxu0
  %v783 = vadd.f32 0.0, %v782
  %v784 = vpop.f32.mrf.mxu0
  %785 = vmatprep.mubr.bf16.mxu0 %v612
  %786 = vmatmul.mubr.bf16.gmra.mxu0 %v611
  %v787 = vpop.f32.mrf.mxu0
  %v788 = vadd.f32 0.0, %v787
  %v789 = vpop.f32.mrf.mxu0
  %v790 = vpop.f32.mrf.mxu0
  %v791 = vadd.f32 0.0, %v790
  %v792 = vpop.f32.mrf.mxu0
  %793 = vmatprep.mubr.bf16.mxu0 %v614
  %794 = vmatmul.mubr.bf16.gmra.mxu0 %v613
  %v795 = vpop.f32.mrf.mxu0
  %v796 = vadd.f32 0.0, %v795
  %v797 = vpop.f32.mrf.mxu0
  %v798 = vpop.f32.mrf.mxu0
  %v799 = vadd.f32 0.0, %v798
  %v800 = vpop.f32.mrf.mxu0
  %801 = vmatprep.mubr.bf16.mxu0 %v616
  %802 = vmatmul.mubr.bf16.gmra.mxu0 %v615
  %v803 = vpop.f32.mrf.mxu0
  %v804 = vadd.f32 0.0, %v803
  %v805 = vpop.f32.mrf.mxu0
  %v806 = vpop.f32.mrf.mxu0
  %v807 = vadd.f32 0.0, %v806
  %v808 = vpop.f32.mrf.mxu0
  %809 = vdwg.mxu0
  %v810 = vadd.f32 %v684, %v687
  %v811 = vadd.f32 %v810, %v692
  %v812 = vadd.f32 %v811, %v695
  %v813 = vadd.f32 %v812, %v700
  %v814 = vadd.f32 %v813, %v703
  %v815 = vadd.f32 %v814, %v708
  %v816 = vadd.f32 %v815, %v711
  %v817 = vadd.f32 %v816, %v716
  %v818 = vadd.f32 %v817, %v719
  %v819 = vadd.f32 %v818, %v724
  %v820 = vadd.f32 %v819, %v727
  %v821 = vadd.f32 %v820, %v732
  %v822 = vadd.f32 %v821, %v735
  %v823 = vadd.f32 %v822, %v740
  %v824 = vadd.f32 %v823, %v743
  %v825 = vadd.f32 %v824, %v748
  %v826 = vadd.f32 %v825, %v751
  %v827 = vadd.f32 %v826, %v756
  %v828 = vadd.f32 %v827, %v759
  %v829 = vadd.f32 %v828, %v764
  %v830 = vadd.f32 %v829, %v767
  %v831 = vadd.f32 %v830, %v772
  %v832 = vadd.f32 %v831, %v775
  %v833 = vadd.f32 %v832, %v780
  %v834 = vadd.f32 %v833, %v783
  %v835 = vadd.f32 %v834, %v788
  %v836 = vadd.f32 %v835, %v791
  %v837 = vadd.f32 %v836, %v796
  %v838 = vadd.f32 %v837, %v799
  %v839 = vadd.f32 %v838, %v804
  %v840 = vadd.f32 %v839, %v807
  %v841 = vrot.slane %v840, 4
  %v842 = vadd.f32 %v840, %v841
  %v843 = vrot.slane %v842, 2
  %v844 = vadd.f32 %v842, %v843
  %v845 = vrot.slane %v844, 1
  %v846 = vadd.f32 %v844, %v845
  %v847 = vmul.f32 %v846, 0.0625
  %v848 = vsub.f32 %v684, %v847
  %v849 = vsub.f32 %v687, %v847
  %v850 = vsub.f32 %v692, %v847
  %v851 = vsub.f32 %v695, %v847
  %v852 = vsub.f32 %v700, %v847
  %v853 = vsub.f32 %v703, %v847
  %v854 = vsub.f32 %v708, %v847
  %v855 = vsub.f32 %v711, %v847
  %v856 = vsub.f32 %v716, %v847
  %v857 = vsub.f32 %v719, %v847
  %v858 = vsub.f32 %v724, %v847
  %v859 = vsub.f32 %v727, %v847
  %v860 = vsub.f32 %v732, %v847
  %v861 = vsub.f32 %v735, %v847
  %v862 = vsub.f32 %v740, %v847
  %v863 = vsub.f32 %v743, %v847
  %v864 = vsub.f32 %v748, %v847
  %v865 = vsub.f32 %v751, %v847
  %v866 = vsub.f32 %v756, %v847
  %v867 = vsub.f32 %v759, %v847
  %v868 = vsub.f32 %v764, %v847
  %v869 = vsub.f32 %v767, %v847
  %v870 = vsub.f32 %v772, %v847
  %v871 = vsub.f32 %v775, %v847
  %v872 = vsub.f32 %v780, %v847
  %v873 = vsub.f32 %v783, %v847
  %v874 = vsub.f32 %v788, %v847
  %v875 = vsub.f32 %v791, %v847
  %v876 = vsub.f32 %v796, %v847
  %v877 = vsub.f32 %v799, %v847
  %v878 = vsub.f32 %v804, %v847
  %v879 = vsub.f32 %v807, %v847
  %v880 = vmul.f32 %v848, %v168
  %v881 = vmul.f32 %v849, %v169
  %v882 = vmul.f32 %v850, %v170
  %v883 = vmul.f32 %v851, %v171
  %v884 = vmul.f32 %v852, %v172
  %v885 = vmul.f32 %v853, %v173
  %v886 = vmul.f32 %v854, %v174
  %v887 = vmul.f32 %v855, %v175
  %v888 = vmul.f32 %v856, %v176
  %v889 = vmul.f32 %v857, %v177
  %v890 = vmul.f32 %v858, %v178
  %v891 = vmul.f32 %v859, %v179
  %v892 = vmul.f32 %v860, %v180
  %v893 = vmul.f32 %v861, %v181
  %v894 = vmul.f32 %v862, %v182
  %v895 = vmul.f32 %v863, %v183
  %v896 = vmul.f32 %v864, %v184
  %v897 = vmul.f32 %v865, %v185
  %v898 = vmul.f32 %v866, %v186
  %v899 = vmul.f32 %v867, %v187
  %v900 = vmul.f32 %v868, %v188
  %v901 = vmul.f32 %v869, %v189
  %v902 = vmul.f32 %v870, %v190
  %v903 = vmul.f32 %v871, %v191
  %v904 = vmul.f32 %v872, %v192
  %v905 = vmul.f32 %v873, %v193
  %v906 = vmul.f32 %v874, %v194
  %v907 = vmul.f32 %v875, %v195
  %v908 = vmul.f32 %v876, %v196
  %v909 = vmul.f32 %v877, %v197
  %v910 = vmul.f32 %v878, %v198
  %v911 = vmul.f32 %v879, %v199
  %v912 = vmul.f32 %v880, %v880
  %v913 = vmul.f32 %v881, %v881
  %v914 = vmul.f32 %v882, %v882
  %v915 = vmul.f32 %v883, %v883
  %v916 = vmul.f32 %v884, %v884
  %v917 = vmul.f32 %v885, %v885
  %v918 = vmul.f32 %v886, %v886
  %v919 = vmul.f32 %v887, %v887
  %v920 = vmul.f32 %v888, %v888
  %v921 = vmul.f32 %v889, %v889
  %v922 = vmul.f32 %v890, %v890
  %v923 = vmul.f32 %v891, %v891
  %v924 = vmul.f32 %v892, %v892
  %v925 = vmul.f32 %v893, %v893
  %v926 = vmul.f32 %v894, %v894
  %v927 = vmul.f32 %v895, %v895
  %v928 = vmul.f32 %v896, %v896
  %v929 = vmul.f32 %v897, %v897
  %v930 = vmul.f32 %v898, %v898
  %v931 = vmul.f32 %v899, %v899
  %v932 = vmul.f32 %v900, %v900
  %v933 = vmul.f32 %v901, %v901
  %v934 = vmul.f32 %v902, %v902
  %v935 = vmul.f32 %v903, %v903
  %v936 = vmul.f32 %v904, %v904
  %v937 = vmul.f32 %v905, %v905
  %v938 = vmul.f32 %v906, %v906
  %v939 = vmul.f32 %v907, %v907
  %v940 = vmul.f32 %v908, %v908
  %v941 = vmul.f32 %v909, %v909
  %v942 = vmul.f32 %v910, %v910
  %v943 = vmul.f32 %v911, %v911
  %v944 = vadd.f32 %v912, %v913
  %v945 = vadd.f32 %v944, %v914
  %v946 = vadd.f32 %v945, %v915
  %v947 = vadd.f32 %v946, %v916
  %v948 = vadd.f32 %v947, %v917
  %v949 = vadd.f32 %v948, %v918
  %v950 = vadd.f32 %v949, %v919
  %v951 = vadd.f32 %v950, %v920
  %v952 = vadd.f32 %v951, %v921
  %v953 = vadd.f32 %v952, %v922
  %v954 = vadd.f32 %v953, %v923
  %v955 = vadd.f32 %v954, %v924
  %v956 = vadd.f32 %v955, %v925
  %v957 = vadd.f32 %v956, %v926
  %v958 = vadd.f32 %v957, %v927
  %v959 = vadd.f32 %v958, %v928
  %v960 = vadd.f32 %v959, %v929
  %v961 = vadd.f32 %v960, %v930
  %v962 = vadd.f32 %v961, %v931
  %v963 = vadd.f32 %v962, %v932
  %v964 = vadd.f32 %v963, %v933
  %v965 = vadd.f32 %v964, %v934
  %v966 = vadd.f32 %v965, %v935
  %v967 = vadd.f32 %v966, %v936
  %v968 = vadd.f32 %v967, %v937
  %v969 = vadd.f32 %v968, %v938
  %v970 = vadd.f32 %v969, %v939
  %v971 = vadd.f32 %v970, %v940
  %v972 = vadd.f32 %v971, %v941
  %v973 = vadd.f32 %v972, %v942
  %v974 = vadd.f32 %v973, %v943
  %v975 = vrot.slane %v974, 4
  %v976 = vadd.f32 %v974, %v975
  %v977 = vrot.slane %v976, 2
  %v978 = vadd.f32 %v976, %v977
  %v979 = vrot.slane %v978, 1
  %v980 = vadd.f32 %v978, %v979
  %v981 = vmul.f32 %v980, 0.0625
  %v982 = vld [vmem:[%s9] sm:$0x1]
  %v983 = vadd.f32 %v981, 1e-05
  %v984 = vrsqrt.pop %v983
  %v985 = vmul.f32 %v982, %v984
  %v986 = vld [vmem:[%s10] sm:$0x1]
  %v987 = vmul.f32 %v847, %v985
  %v988 = vsub.f32 %v986, %v987
  %v989 = vlaneseq
  %v990 = vshrl.u32 %v989, 7
  %v991 = vsub.s32 0, %v990
  %v992 = vrot.slane %v985, %v991
  %v993 = vmul.f32 %v684, %v992
  %v994 = vmul.f32 %v687, %v992
  %v995 = vmul.f32 %v692, %v992
  %v996 = vmul.f32 %v695, %v992
  %v997 = vmul.f32 %v700, %v992
  %v998 = vmul.f32 %v703, %v992
  %v999 = vmul.f32 %v708, %v992
  %v1000 = vmul.f32 %v711, %v992
  %v1001 = vmul.f32 %v716, %v992
  %v1002 = vmul.f32 %v719, %v992
  %v1003 = vmul.f32 %v724, %v992
  %v1004 = vmul.f32 %v727, %v992
  %v1005 = vmul.f32 %v732, %v992
  %v1006 = vmul.f32 %v735, %v992
  %v1007 = vmul.f32 %v740, %v992
  %v1008 = vmul.f32 %v743, %v992
  %v1009 = vmul.f32 %v748, %v992
  %v1010 = vmul.f32 %v751, %v992
  %v1011 = vmul.f32 %v756, %v992
  %v1012 = vmul.f32 %v759, %v992
  %v1013 = vmul.f32 %v764, %v992
  %v1014 = vmul.f32 %v767, %v992
  %v1015 = vmul.f32 %v772, %v992
  %v1016 = vmul.f32 %v775, %v992
  %v1017 = vmul.f32 %v780, %v992
  %v1018 = vmul.f32 %v783, %v992
  %v1019 = vmul.f32 %v788, %v992
  %v1020 = vmul.f32 %v791, %v992
  %v1021 = vmul.f32 %v796, %v992
  %v1022 = vmul.f32 %v799, %v992
  %v1023 = vmul.f32 %v804, %v992
  %v1024 = vmul.f32 %v807, %v992
  %v1025 = vlaneseq
  %v1026 = vshrl.u32 %v1025, 7
  %v1027 = vsub.s32 0, %v1026
  %v1028 = vrot.slane %v988, %v1027
  %v1029 = vadd.f32 %v993, %v1028
  %v1030 = vadd.f32 %v994, %v1028
  %v1031 = vadd.f32 %v995, %v1028
  %v1032 = vadd.f32 %v996, %v1028
  %v1033 = vadd.f32 %v997, %v1028
  %v1034 = vadd.f32 %v998, %v1028
  %v1035 = vadd.f32 %v999, %v1028
  %v1036 = vadd.f32 %v1000, %v1028
  %v1037 = vadd.f32 %v1001, %v1028
  %v1038 = vadd.f32 %v1002, %v1028
  %v1039 = vadd.f32 %v1003, %v1028
  %v1040 = vadd.f32 %v1004, %v1028
  %v1041 = vadd.f32 %v1005, %v1028
  %v1042 = vadd.f32 %v1006, %v1028
  %v1043 = vadd.f32 %v1007, %v1028
  %v1044 = vadd.f32 %v1008, %v1028
  %v1045 = vadd.f32 %v1009, %v1028
  %v1046 = vadd.f32 %v1010, %v1028
  %v1047 = vadd.f32 %v1011, %v1028
  %v1048 = vadd.f32 %v1012, %v1028
  %v1049 = vadd.f32 %v1013, %v1028
  %v1050 = vadd.f32 %v1014, %v1028
  %v1051 = vadd.f32 %v1015, %v1028
  %v1052 = vadd.f32 %v1016, %v1028
  %v1053 = vadd.f32 %v1017, %v1028
  %v1054 = vadd.f32 %v1018, %v1028
  %v1055 = vadd.f32 %v1019, %v1028
  %v1056 = vadd.f32 %v1020, %v1028
  %v1057 = vadd.f32 %v1021, %v1028
  %v1058 = vadd.f32 %v1022, %v1028
  %v1059 = vadd.f32 %v1023, %v1028
  %v1060 = vadd.f32 %v1024, %v1028
  %v1061 = vmax.f32 %v1029, 0.0
  %v1062 = vmax.f32 %v1030, 0.0
  %v1063 = vmax.f32 %v1031, 0.0
  %v1064 = vmax.f32 %v1032, 0.0
  %v1065 = vmax.f32 %v1033, 0.0
  %v1066 = vmax.f32 %v1034, 0.0
  %v1067 = vmax.f32 %v1035, 0.0
  %v1068 = vmax.f32 %v1036, 0.0
  %v1069 = vmax.f32 %v1037, 0.0
  %v1070 = vmax.f32 %v1038, 0.0
  %v1071 = vmax.f32 %v1039, 0.0
  %v1072 = vmax.f32 %v1040, 0.0
  %v1073 = vmax.f32 %v1041, 0.0
  %v1074 = vmax.f32 %v1042, 0.0
  %v1075 = vmax.f32 %v1043, 0.0
  %v1076 = vmax.f32 %v1044, 0.0
  %v1077 = vmax.f32 %v1045, 0.0
  %v1078 = vmax.f32 %v1046, 0.0
  %v1079 = vmax.f32 %v1047, 0.0
  %v1080 = vmax.f32 %v1048, 0.0
  %v1081 = vmax.f32 %v1049, 0.0
  %v1082 = vmax.f32 %v1050, 0.0
  %v1083 = vmax.f32 %v1051, 0.0
  %v1084 = vmax.f32 %v1052, 0.0
  %v1085 = vmax.f32 %v1053, 0.0
  %v1086 = vmax.f32 %v1054, 0.0
  %v1087 = vmax.f32 %v1055, 0.0
  %v1088 = vmax.f32 %v1056, 0.0
  %v1089 = vmax.f32 %v1057, 0.0
  %v1090 = vmax.f32 %v1058, 0.0
  %v1091 = vmax.f32 %v1059, 0.0
  %v1092 = vmax.f32 %v1060, 0.0
  %v1093 = vpack.c.bf16 %v1062, %v1061
  %v1094 = vpack.c.bf16 %v1064, %v1063
  %v1095 = vpack.c.bf16 %v1066, %v1065
  %v1096 = vpack.c.bf16 %v1068, %v1067
  %v1097 = vpack.c.bf16 %v1070, %v1069
  %v1098 = vpack.c.bf16 %v1072, %v1071
  %v1099 = vpack.c.bf16 %v1074, %v1073
  %v1100 = vpack.c.bf16 %v1076, %v1075
  %v1101 = vpack.c.bf16 %v1078, %v1077
  %v1102 = vpack.c.bf16 %v1080, %v1079
  %v1103 = vpack.c.bf16 %v1082, %v1081
  %v1104 = vpack.c.bf16 %v1084, %v1083
  %v1105 = vpack.c.bf16 %v1086, %v1085
  %v1106 = vpack.c.bf16 %v1088, %v1087
  %v1107 = vpack.c.bf16 %v1090, %v1089
  %v1108 = vpack.c.bf16 %v1092, %v1091
  %v1109 = vld [vmem:[%s3] sm:$0xf]
  %v1110 = vld [vmem:[%s3 + $0x4] sm:$0xf]
  %v1111 = vld [vmem:[%s3 + $0x8] sm:$0xf]
  %v1112 = vld [vmem:[%s3 + $0xc] sm:$0xf]
  %v1113 = vld [vmem:[%s3 + $0x10] sm:$0xf]
  %v1114 = vld [vmem:[%s3 + $0x14] sm:$0xf]
  %v1115 = vld [vmem:[%s3 + $0x18] sm:$0xf]
  %v1116 = vld [vmem:[%s3 + $0x1c] sm:$0xf]
  %v1117 = vld [vmem:[%s3 + $0x20] sm:$0xf]
  %v1118 = vld [vmem:[%s3 + $0x24] sm:$0xf]
  %v1119 = vld [vmem:[%s3 + $0x28] sm:$0xf]
  %v1120 = vld [vmem:[%s3 + $0x2c] sm:$0xf]
  %v1121 = vld [vmem:[%s3 + $0x30] sm:$0xf]
  %v1122 = vld [vmem:[%s3 + $0x34] sm:$0xf]
  %v1123 = vld [vmem:[%s3 + $0x38] sm:$0xf]
  %v1124 = vld [vmem:[%s3 + $0x3c] sm:$0xf]
  %v1141 = vunpack.c.l.b16 %v1109
  %v1142 = vunpack.c.l.b16 %v1110
  %v1143 = vunpack.c.l.b16 %v1111
  %v1144 = vunpack.c.l.b16 %v1112
  %v1145 = vunpack.c.l.b16 %v1113
  %v1146 = vunpack.c.l.b16 %v1114
  %v1147 = vunpack.c.l.b16 %v1115
  %v1148 = vunpack.c.l.b16 %v1116
  %v1149 = vunpack.c.l.b16 %v1117
  %v1150 = vunpack.c.l.b16 %v1118
  %v1151 = vunpack.c.l.b16 %v1119
  %v1152 = vunpack.c.l.b16 %v1120
  %v1153 = vunpack.c.l.b16 %v1121
  %v1154 = vunpack.c.l.b16 %v1122
  %v1155 = vunpack.c.l.b16 %v1123
  %v1156 = vunpack.c.l.b16 %v1124
  %v1157 = vpack.c.b16 %v1142, %v1141
  %v1158 = vpack.c.b16 %v1144, %v1143
  %v1159 = vpack.c.b16 %v1146, %v1145
  %v1160 = vpack.c.b16 %v1148, %v1147
  %v1161 = vpack.c.b16 %v1150, %v1149
  %v1162 = vpack.c.b16 %v1152, %v1151
  %v1163 = vpack.c.b16 %v1154, %v1153
  %v1164 = vpack.c.b16 %v1156, %v1155
  %1173 = vmatprep.subr.bf16.mxu0 0
  %1174 = vmatpush1.bf16.msra.mxu0 %v1164
  %1175 = vmatprep.subr.bf16.mxu0 0
  %1176 = vmatpush1.bf16.msra.mxu0 %v1163
  %1177 = vmatprep.subr.bf16.mxu0 0
  %1178 = vmatpush1.bf16.msra.mxu0 %v1162
  %1179 = vmatprep.subr.bf16.mxu0 0
  %1180 = vmatpush1.bf16.msra.mxu0 %v1161
  %1181 = vmatprep.subr.bf16.mxu0 0
  %1182 = vmatpush1.bf16.msra.mxu0 %v1160
  %1183 = vmatprep.subr.bf16.mxu0 0
  %1184 = vmatpush1.bf16.msra.mxu0 %v1159
  %1185 = vmatprep.subr.bf16.mxu0 0
  %1186 = vmatpush1.bf16.msra.mxu0 %v1158
  %1187 = vmatprep.subr.bf16.mxu0 0
  %1188 = vmatpush1.bf16.msra.mxu0 %v1157
  %1189 = vmatprep.subr.bf16.mxu0 0
  %1190 = vmatpush2.bf16.msra.mxu0 0
  %1191 = vmatprep.subr.bf16.mxu0 0
  %1192 = vmatpush2.bf16.msra.mxu0 0
  %1193 = vmatprep.subr.bf16.mxu0 0
  %1194 = vmatpush2.bf16.msra.mxu0 0
  %1195 = vmatprep.subr.bf16.mxu0 0
  %1196 = vmatpush2.bf16.msra.mxu0 0
  %1197 = vmatprep.subr.bf16.mxu0 0
  %1198 = vmatpush2.bf16.msra.mxu0 0
  %1199 = vmatprep.subr.bf16.mxu0 0
  %1200 = vmatpush2.bf16.msra.mxu0 0
  %1201 = vmatprep.subr.bf16.mxu0 0
  %1202 = vmatpush2.bf16.msra.mxu0 0
  %1203 = vmatprep.subr.bf16.mxu0 0
  %1204 = vmatpush2.bf16.msra.mxu0 0
  %1205 = vmatprep.mubr.bf16.mxu0 0
  %1206 = vmatmul.mubr.bf16.gmra.mxu0 %v1093
  %v1207 = vpop.f32.mrf.mxu0
  %v1208 = vadd.f32 0.0, %v1207
  %v1209 = vpop.f32.mrf.mxu0
  %v1210 = vpop.f32.mrf.mxu0
  %v1211 = vadd.f32 0.0, %v1210
  %v1212 = vpop.f32.mrf.mxu0
  %1213 = vmatprep.mubr.bf16.mxu0 0
  %1214 = vmatmul.mubr.bf16.gmra.mxu0 %v1094
  %v1215 = vpop.f32.mrf.mxu0
  %v1216 = vadd.f32 0.0, %v1215
  %v1217 = vpop.f32.mrf.mxu0
  %v1218 = vpop.f32.mrf.mxu0
  %v1219 = vadd.f32 0.0, %v1218
  %v1220 = vpop.f32.mrf.mxu0
  %1221 = vmatprep.mubr.bf16.mxu0 0
  %1222 = vmatmul.mubr.bf16.gmra.mxu0 %v1095
  %v1223 = vpop.f32.mrf.mxu0
  %v1224 = vadd.f32 0.0, %v1223
  %v1225 = vpop.f32.mrf.mxu0
  %v1226 = vpop.f32.mrf.mxu0
  %v1227 = vadd.f32 0.0, %v1226
  %v1228 = vpop.f32.mrf.mxu0
  %1229 = vmatprep.mubr.bf16.mxu0 0
  %1230 = vmatmul.mubr.bf16.gmra.mxu0 %v1096
  %v1231 = vpop.f32.mrf.mxu0
  %v1232 = vadd.f32 0.0, %v1231
  %v1233 = vpop.f32.mrf.mxu0
  %v1234 = vpop.f32.mrf.mxu0
  %v1235 = vadd.f32 0.0, %v1234
  %v1236 = vpop.f32.mrf.mxu0
  %1237 = vmatprep.mubr.bf16.mxu0 0
  %1238 = vmatmul.mubr.bf16.gmra.mxu0 %v1097
  %v1239 = vpop.f32.mrf.mxu0
  %v1240 = vadd.f32 0.0, %v1239
  %v1241 = vpop.f32.mrf.mxu0
  %v1242 = vpop.f32.mrf.mxu0
  %v1243 = vadd.f32 0.0, %v1242
  %v1244 = vpop.f32.mrf.mxu0
  %1245 = vmatprep.mubr.bf16.mxu0 0
  %1246 = vmatmul.mubr.bf16.gmra.mxu0 %v1098
  %v1247 = vpop.f32.mrf.mxu0
  %v1248 = vadd.f32 0.0, %v1247
  %v1249 = vpop.f32.mrf.mxu0
  %v1250 = vpop.f32.mrf.mxu0
  %v1251 = vadd.f32 0.0, %v1250
  %v1252 = vpop.f32.mrf.mxu0
  %1253 = vmatprep.mubr.bf16.mxu0 0
  %1254 = vmatmul.mubr.bf16.gmra.mxu0 %v1099
  %v1255 = vpop.f32.mrf.mxu0
  %v1256 = vadd.f32 0.0, %v1255
  %v1257 = vpop.f32.mrf.mxu0
  %v1258 = vpop.f32.mrf.mxu0
  %v1259 = vadd.f32 0.0, %v1258
  %v1260 = vpop.f32.mrf.mxu0
  %1261 = vmatprep.mubr.bf16.mxu0 0
  %1262 = vmatmul.mubr.bf16.gmra.mxu0 %v1100
  %v1263 = vpop.f32.mrf.mxu0
  %v1264 = vadd.f32 0.0, %v1263
  %v1265 = vpop.f32.mrf.mxu0
  %v1266 = vpop.f32.mrf.mxu0
  %v1267 = vadd.f32 0.0, %v1266
  %v1268 = vpop.f32.mrf.mxu0
  %1269 = vmatprep.mubr.bf16.mxu0 0
  %1270 = vmatmul.mubr.bf16.gmra.mxu0 %v1101
  %v1271 = vpop.f32.mrf.mxu0
  %v1272 = vadd.f32 0.0, %v1271
  %v1273 = vpop.f32.mrf.mxu0
  %v1274 = vpop.f32.mrf.mxu0
  %v1275 = vadd.f32 0.0, %v1274
  %v1276 = vpop.f32.mrf.mxu0
  %1277 = vmatprep.mubr.bf16.mxu0 0
  %1278 = vmatmul.mubr.bf16.gmra.mxu0 %v1102
  %v1279 = vpop.f32.mrf.mxu0
  %v1280 = vadd.f32 0.0, %v1279
  %v1281 = vpop.f32.mrf.mxu0
  %v1282 = vpop.f32.mrf.mxu0
  %v1283 = vadd.f32 0.0, %v1282
  %v1284 = vpop.f32.mrf.mxu0
  %1285 = vmatprep.mubr.bf16.mxu0 0
  %1286 = vmatmul.mubr.bf16.gmra.mxu0 %v1103
  %v1287 = vpop.f32.mrf.mxu0
  %v1288 = vadd.f32 0.0, %v1287
  %v1289 = vpop.f32.mrf.mxu0
  %v1290 = vpop.f32.mrf.mxu0
  %v1291 = vadd.f32 0.0, %v1290
  %v1292 = vpop.f32.mrf.mxu0
  %1293 = vmatprep.mubr.bf16.mxu0 0
  %1294 = vmatmul.mubr.bf16.gmra.mxu0 %v1104
  %v1295 = vpop.f32.mrf.mxu0
  %v1296 = vadd.f32 0.0, %v1295
  %v1297 = vpop.f32.mrf.mxu0
  %v1298 = vpop.f32.mrf.mxu0
  %v1299 = vadd.f32 0.0, %v1298
  %v1300 = vpop.f32.mrf.mxu0
  %1301 = vmatprep.mubr.bf16.mxu0 0
  %1302 = vmatmul.mubr.bf16.gmra.mxu0 %v1105
  %v1303 = vpop.f32.mrf.mxu0
  %v1304 = vadd.f32 0.0, %v1303
  %v1305 = vpop.f32.mrf.mxu0
  %v1306 = vpop.f32.mrf.mxu0
  %v1307 = vadd.f32 0.0, %v1306
  %v1308 = vpop.f32.mrf.mxu0
  %1309 = vmatprep.mubr.bf16.mxu0 0
  %1310 = vmatmul.mubr.bf16.gmra.mxu0 %v1106
  %v1311 = vpop.f32.mrf.mxu0
  %v1312 = vadd.f32 0.0, %v1311
  %v1313 = vpop.f32.mrf.mxu0
  %v1314 = vpop.f32.mrf.mxu0
  %v1315 = vadd.f32 0.0, %v1314
  %v1316 = vpop.f32.mrf.mxu0
  %1317 = vmatprep.mubr.bf16.mxu0 0
  %1318 = vmatmul.mubr.bf16.gmra.mxu0 %v1107
  %v1319 = vpop.f32.mrf.mxu0
  %v1320 = vadd.f32 0.0, %v1319
  %v1321 = vpop.f32.mrf.mxu0
  %v1322 = vpop.f32.mrf.mxu0
  %v1323 = vadd.f32 0.0, %v1322
  %v1324 = vpop.f32.mrf.mxu0
  %1325 = vmatprep.mubr.bf16.mxu0 0
  %1326 = vmatmul.mubr.bf16.gmra.mxu0 %v1108
  %v1327 = vpop.f32.mrf.mxu0
  %v1328 = vadd.f32 0.0, %v1327
  %v1329 = vpop.f32.mrf.mxu0
  %v1330 = vpop.f32.mrf.mxu0
  %v1331 = vadd.f32 0.0, %v1330
  %v1332 = vpop.f32.mrf.mxu0
  %1333 = vdwg.mxu0
  %v1334 = vpack.c.bf16 %v1211, %v1208
  %v1335 = vpack.c.bf16 %v1219, %v1216
  %v1336 = vpack.c.bf16 %v1227, %v1224
  %v1337 = vpack.c.bf16 %v1235, %v1232
  %v1338 = vpack.c.bf16 %v1243, %v1240
  %v1339 = vpack.c.bf16 %v1251, %v1248
  %v1340 = vpack.c.bf16 %v1259, %v1256
  %v1341 = vpack.c.bf16 %v1267, %v1264
  %v1342 = vpack.c.bf16 %v1275, %v1272
  %v1343 = vpack.c.bf16 %v1283, %v1280
  %v1344 = vpack.c.bf16 %v1291, %v1288
  %v1345 = vpack.c.bf16 %v1299, %v1296
  %v1346 = vpack.c.bf16 %v1307, %v1304
  %v1347 = vpack.c.bf16 %v1315, %v1312
  %v1348 = vpack.c.bf16 %v1323, %v1320
  %v1349 = vpack.c.bf16 %v1331, %v1328
  %1350 = vmatprep.subr.bf16.mxu0 0
  %1351 = vmatpush1.bf16.msra.mxu0 %v1341
  %1352 = vmatprep.subr.bf16.mxu0 0
  %1353 = vmatpush1.bf16.msra.mxu0 %v1340
  %1354 = vmatprep.subr.bf16.mxu0 0
  %1355 = vmatpush1.bf16.msra.mxu0 %v1339
  %1356 = vmatprep.subr.bf16.mxu0 0
  %1357 = vmatpush1.bf16.msra.mxu0 %v1338
  %1358 = vmatprep.subr.bf16.mxu0 0
  %1359 = vmatpush1.bf16.msra.mxu0 %v1337
  %1360 = vmatprep.subr.bf16.mxu0 0
  %1361 = vmatpush1.bf16.msra.mxu0 %v1336
  %1362 = vmatprep.subr.bf16.mxu0 0
  %1363 = vmatpush1.bf16.msra.mxu0 %v1335
  %1364 = vmatprep.subr.bf16.mxu0 0
  %1365 = vmatpush1.bf16.msra.mxu0 %v1334
  %1366 = vmatprep.subr.bf16.mxu0 0
  %1367 = vmatpush2.bf16.msra.mxu0 %v1349
  %1368 = vmatprep.subr.bf16.mxu0 0
  %1369 = vmatpush2.bf16.msra.mxu0 %v1348
  %1370 = vmatprep.subr.bf16.mxu0 0
  %1371 = vmatpush2.bf16.msra.mxu0 %v1347
  %1372 = vmatprep.subr.bf16.mxu0 0
  %1373 = vmatpush2.bf16.msra.mxu0 %v1346
  %1374 = vmatprep.subr.bf16.mxu0 0
  %1375 = vmatpush2.bf16.msra.mxu0 %v1345
  %1376 = vmatprep.subr.bf16.mxu0 0
  %1377 = vmatpush2.bf16.msra.mxu0 %v1344
  %1378 = vmatprep.subr.bf16.mxu0 0
  %1379 = vmatpush2.bf16.msra.mxu0 %v1343
  %1380 = vmatprep.subr.bf16.mxu0 0
  %1381 = vmatpush2.bf16.msra.mxu0 %v1342
  %1382 = vmatprep.mubr.bf16.mxu0 %v586
  %1383 = vmatmul.mubr.bf16.gmra.mxu0 %v585
  %v1384 = vpop.f32.mrf.mxu0
  %v1385 = vadd.f32 0.0, %v1384
  %v1386 = vpop.f32.mrf.mxu0
  %v1387 = vpop.f32.mrf.mxu0
  %v1388 = vadd.f32 0.0, %v1387
  %v1389 = vpop.f32.mrf.mxu0
  %1390 = vmatprep.mubr.bf16.mxu0 %v588
  %1391 = vmatmul.mubr.bf16.gmra.mxu0 %v587
  %v1392 = vpop.f32.mrf.mxu0
  %v1393 = vadd.f32 0.0, %v1392
  %v1394 = vpop.f32.mrf.mxu0
  %v1395 = vpop.f32.mrf.mxu0
  %v1396 = vadd.f32 0.0, %v1395
  %v1397 = vpop.f32.mrf.mxu0
  %1398 = vmatprep.mubr.bf16.mxu0 %v590
  %1399 = vmatmul.mubr.bf16.gmra.mxu0 %v589
  %v1400 = vpop.f32.mrf.mxu0
  %v1401 = vadd.f32 0.0, %v1400
  %v1402 = vpop.f32.mrf.mxu0
  %v1403 = vpop.f32.mrf.mxu0
  %v1404 = vadd.f32 0.0, %v1403
  %v1405 = vpop.f32.mrf.mxu0
  %1406 = vmatprep.mubr.bf16.mxu0 %v592
  %1407 = vmatmul.mubr.bf16.gmra.mxu0 %v591
  %v1408 = vpop.f32.mrf.mxu0
  %v1409 = vadd.f32 0.0, %v1408
  %v1410 = vpop.f32.mrf.mxu0
  %v1411 = vpop.f32.mrf.mxu0
  %v1412 = vadd.f32 0.0, %v1411
  %v1413 = vpop.f32.mrf.mxu0
  %1414 = vmatprep.mubr.bf16.mxu0 %v594
  %1415 = vmatmul.mubr.bf16.gmra.mxu0 %v593
  %v1416 = vpop.f32.mrf.mxu0
  %v1417 = vadd.f32 0.0, %v1416
  %v1418 = vpop.f32.mrf.mxu0
  %v1419 = vpop.f32.mrf.mxu0
  %v1420 = vadd.f32 0.0, %v1419
  %v1421 = vpop.f32.mrf.mxu0
  %1422 = vmatprep.mubr.bf16.mxu0 %v596
  %1423 = vmatmul.mubr.bf16.gmra.mxu0 %v595
  %v1424 = vpop.f32.mrf.mxu0
  %v1425 = vadd.f32 0.0, %v1424
  %v1426 = vpop.f32.mrf.mxu0
  %v1427 = vpop.f32.mrf.mxu0
  %v1428 = vadd.f32 0.0, %v1427
  %v1429 = vpop.f32.mrf.mxu0
  %1430 = vmatprep.mubr.bf16.mxu0 %v598
  %1431 = vmatmul.mubr.bf16.gmra.mxu0 %v597
  %v1432 = vpop.f32.mrf.mxu0
  %v1433 = vadd.f32 0.0, %v1432
  %v1434 = vpop.f32.mrf.mxu0
  %v1435 = vpop.f32.mrf.mxu0
  %v1436 = vadd.f32 0.0, %v1435
  %v1437 = vpop.f32.mrf.mxu0
  %1438 = vmatprep.mubr.bf16.mxu0 %v600
  %1439 = vmatmul.mubr.bf16.gmra.mxu0 %v599
  %v1440 = vpop.f32.mrf.mxu0
  %v1441 = vadd.f32 0.0, %v1440
  %v1442 = vpop.f32.mrf.mxu0
  %v1443 = vpop.f32.mrf.mxu0
  %v1444 = vadd.f32 0.0, %v1443
  %v1445 = vpop.f32.mrf.mxu0
  %1446 = vmatprep.mubr.bf16.mxu0 %v602
  %1447 = vmatmul.mubr.bf16.gmra.mxu0 %v601
  %v1448 = vpop.f32.mrf.mxu0
  %v1449 = vadd.f32 0.0, %v1448
  %v1450 = vpop.f32.mrf.mxu0
  %v1451 = vpop.f32.mrf.mxu0
  %v1452 = vadd.f32 0.0, %v1451
  %v1453 = vpop.f32.mrf.mxu0
  %1454 = vmatprep.mubr.bf16.mxu0 %v604
  %1455 = vmatmul.mubr.bf16.gmra.mxu0 %v603
  %v1456 = vpop.f32.mrf.mxu0
  %v1457 = vadd.f32 0.0, %v1456
  %v1458 = vpop.f32.mrf.mxu0
  %v1459 = vpop.f32.mrf.mxu0
  %v1460 = vadd.f32 0.0, %v1459
  %v1461 = vpop.f32.mrf.mxu0
  %1462 = vmatprep.mubr.bf16.mxu0 %v606
  %1463 = vmatmul.mubr.bf16.gmra.mxu0 %v605
  %v1464 = vpop.f32.mrf.mxu0
  %v1465 = vadd.f32 0.0, %v1464
  %v1466 = vpop.f32.mrf.mxu0
  %v1467 = vpop.f32.mrf.mxu0
  %v1468 = vadd.f32 0.0, %v1467
  %v1469 = vpop.f32.mrf.mxu0
  %1470 = vmatprep.mubr.bf16.mxu0 %v608
  %1471 = vmatmul.mubr.bf16.gmra.mxu0 %v607
  %v1472 = vpop.f32.mrf.mxu0
  %v1473 = vadd.f32 0.0, %v1472
  %v1474 = vpop.f32.mrf.mxu0
  %v1475 = vpop.f32.mrf.mxu0
  %v1476 = vadd.f32 0.0, %v1475
  %v1477 = vpop.f32.mrf.mxu0
  %1478 = vmatprep.mubr.bf16.mxu0 %v610
  %1479 = vmatmul.mubr.bf16.gmra.mxu0 %v609
  %v1480 = vpop.f32.mrf.mxu0
  %v1481 = vadd.f32 0.0, %v1480
  %v1482 = vpop.f32.mrf.mxu0
  %v1483 = vpop.f32.mrf.mxu0
  %v1484 = vadd.f32 0.0, %v1483
  %v1485 = vpop.f32.mrf.mxu0
  %1486 = vmatprep.mubr.bf16.mxu0 %v612
  %1487 = vmatmul.mubr.bf16.gmra.mxu0 %v611
  %v1488 = vpop.f32.mrf.mxu0
  %v1489 = vadd.f32 0.0, %v1488
  %v1490 = vpop.f32.mrf.mxu0
  %v1491 = vpop.f32.mrf.mxu0
  %v1492 = vadd.f32 0.0, %v1491
  %v1493 = vpop.f32.mrf.mxu0
  %1494 = vmatprep.mubr.bf16.mxu0 %v614
  %1495 = vmatmul.mubr.bf16.gmra.mxu0 %v613
  %v1496 = vpop.f32.mrf.mxu0
  %v1497 = vadd.f32 0.0, %v1496
  %v1498 = vpop.f32.mrf.mxu0
  %v1499 = vpop.f32.mrf.mxu0
  %v1500 = vadd.f32 0.0, %v1499
  %v1501 = vpop.f32.mrf.mxu0
  %1502 = vmatprep.mubr.bf16.mxu0 %v616
  %1503 = vmatmul.mubr.bf16.gmra.mxu0 %v615
  %v1504 = vpop.f32.mrf.mxu0
  %v1505 = vadd.f32 0.0, %v1504
  %v1506 = vpop.f32.mrf.mxu0
  %v1507 = vpop.f32.mrf.mxu0
  %v1508 = vadd.f32 0.0, %v1507
  %v1509 = vpop.f32.mrf.mxu0
  %1510 = vdwg.mxu0
  %v1511 = vadd.f32 %v1385, %v1388
  %v1512 = vadd.f32 %v1511, %v1393
  %v1513 = vadd.f32 %v1512, %v1396
  %v1514 = vadd.f32 %v1513, %v1401
  %v1515 = vadd.f32 %v1514, %v1404
  %v1516 = vadd.f32 %v1515, %v1409
  %v1517 = vadd.f32 %v1516, %v1412
  %v1518 = vadd.f32 %v1517, %v1417
  %v1519 = vadd.f32 %v1518, %v1420
  %v1520 = vadd.f32 %v1519, %v1425
  %v1521 = vadd.f32 %v1520, %v1428
  %v1522 = vadd.f32 %v1521, %v1433
  %v1523 = vadd.f32 %v1522, %v1436
  %v1524 = vadd.f32 %v1523, %v1441
  %v1525 = vadd.f32 %v1524, %v1444
  %v1526 = vadd.f32 %v1525, %v1449
  %v1527 = vadd.f32 %v1526, %v1452
  %v1528 = vadd.f32 %v1527, %v1457
  %v1529 = vadd.f32 %v1528, %v1460
  %v1530 = vadd.f32 %v1529, %v1465
  %v1531 = vadd.f32 %v1530, %v1468
  %v1532 = vadd.f32 %v1531, %v1473
  %v1533 = vadd.f32 %v1532, %v1476
  %v1534 = vadd.f32 %v1533, %v1481
  %v1535 = vadd.f32 %v1534, %v1484
  %v1536 = vadd.f32 %v1535, %v1489
  %v1537 = vadd.f32 %v1536, %v1492
  %v1538 = vadd.f32 %v1537, %v1497
  %v1539 = vadd.f32 %v1538, %v1500
  %v1540 = vadd.f32 %v1539, %v1505
  %v1541 = vadd.f32 %v1540, %v1508
  %v1542 = vrot.slane %v1541, 4
  %v1543 = vadd.f32 %v1541, %v1542
  %v1544 = vrot.slane %v1543, 2
  %v1545 = vadd.f32 %v1543, %v1544
  %v1546 = vrot.slane %v1545, 1
  %v1547 = vadd.f32 %v1545, %v1546
  %v1548 = vmul.f32 %v1547, 0.0625
  %v1549 = vsub.f32 %v1385, %v1548
  %v1550 = vsub.f32 %v1388, %v1548
  %v1551 = vsub.f32 %v1393, %v1548
  %v1552 = vsub.f32 %v1396, %v1548
  %v1553 = vsub.f32 %v1401, %v1548
  %v1554 = vsub.f32 %v1404, %v1548
  %v1555 = vsub.f32 %v1409, %v1548
  %v1556 = vsub.f32 %v1412, %v1548
  %v1557 = vsub.f32 %v1417, %v1548
  %v1558 = vsub.f32 %v1420, %v1548
  %v1559 = vsub.f32 %v1425, %v1548
  %v1560 = vsub.f32 %v1428, %v1548
  %v1561 = vsub.f32 %v1433, %v1548
  %v1562 = vsub.f32 %v1436, %v1548
  %v1563 = vsub.f32 %v1441, %v1548
  %v1564 = vsub.f32 %v1444, %v1548
  %v1565 = vsub.f32 %v1449, %v1548
  %v1566 = vsub.f32 %v1452, %v1548
  %v1567 = vsub.f32 %v1457, %v1548
  %v1568 = vsub.f32 %v1460, %v1548
  %v1569 = vsub.f32 %v1465, %v1548
  %v1570 = vsub.f32 %v1468, %v1548
  %v1571 = vsub.f32 %v1473, %v1548
  %v1572 = vsub.f32 %v1476, %v1548
  %v1573 = vsub.f32 %v1481, %v1548
  %v1574 = vsub.f32 %v1484, %v1548
  %v1575 = vsub.f32 %v1489, %v1548
  %v1576 = vsub.f32 %v1492, %v1548
  %v1577 = vsub.f32 %v1497, %v1548
  %v1578 = vsub.f32 %v1500, %v1548
  %v1579 = vsub.f32 %v1505, %v1548
  %v1580 = vsub.f32 %v1508, %v1548
  %v1581 = vmul.f32 %v1549, %v168
  %v1582 = vmul.f32 %v1550, %v169
  %v1583 = vmul.f32 %v1551, %v170
  %v1584 = vmul.f32 %v1552, %v171
  %v1585 = vmul.f32 %v1553, %v172
  %v1586 = vmul.f32 %v1554, %v173
  %v1587 = vmul.f32 %v1555, %v174
  %v1588 = vmul.f32 %v1556, %v175
  %v1589 = vmul.f32 %v1557, %v176
  %v1590 = vmul.f32 %v1558, %v177
  %v1591 = vmul.f32 %v1559, %v178
  %v1592 = vmul.f32 %v1560, %v179
  %v1593 = vmul.f32 %v1561, %v180
  %v1594 = vmul.f32 %v1562, %v181
  %v1595 = vmul.f32 %v1563, %v182
  %v1596 = vmul.f32 %v1564, %v183
  %v1597 = vmul.f32 %v1565, %v184
  %v1598 = vmul.f32 %v1566, %v185
  %v1599 = vmul.f32 %v1567, %v186
  %v1600 = vmul.f32 %v1568, %v187
  %v1601 = vmul.f32 %v1569, %v188
  %v1602 = vmul.f32 %v1570, %v189
  %v1603 = vmul.f32 %v1571, %v190
  %v1604 = vmul.f32 %v1572, %v191
  %v1605 = vmul.f32 %v1573, %v192
  %v1606 = vmul.f32 %v1574, %v193
  %v1607 = vmul.f32 %v1575, %v194
  %v1608 = vmul.f32 %v1576, %v195
  %v1609 = vmul.f32 %v1577, %v196
  %v1610 = vmul.f32 %v1578, %v197
  %v1611 = vmul.f32 %v1579, %v198
  %v1612 = vmul.f32 %v1580, %v199
  %v1613 = vmul.f32 %v1581, %v1581
  %v1614 = vmul.f32 %v1582, %v1582
  %v1615 = vmul.f32 %v1583, %v1583
  %v1616 = vmul.f32 %v1584, %v1584
  %v1617 = vmul.f32 %v1585, %v1585
  %v1618 = vmul.f32 %v1586, %v1586
  %v1619 = vmul.f32 %v1587, %v1587
  %v1620 = vmul.f32 %v1588, %v1588
  %v1621 = vmul.f32 %v1589, %v1589
  %v1622 = vmul.f32 %v1590, %v1590
  %v1623 = vmul.f32 %v1591, %v1591
  %v1624 = vmul.f32 %v1592, %v1592
  %v1625 = vmul.f32 %v1593, %v1593
  %v1626 = vmul.f32 %v1594, %v1594
  %v1627 = vmul.f32 %v1595, %v1595
  %v1628 = vmul.f32 %v1596, %v1596
  %v1629 = vmul.f32 %v1597, %v1597
  %v1630 = vmul.f32 %v1598, %v1598
  %v1631 = vmul.f32 %v1599, %v1599
  %v1632 = vmul.f32 %v1600, %v1600
  %v1633 = vmul.f32 %v1601, %v1601
  %v1634 = vmul.f32 %v1602, %v1602
  %v1635 = vmul.f32 %v1603, %v1603
  %v1636 = vmul.f32 %v1604, %v1604
  %v1637 = vmul.f32 %v1605, %v1605
  %v1638 = vmul.f32 %v1606, %v1606
  %v1639 = vmul.f32 %v1607, %v1607
  %v1640 = vmul.f32 %v1608, %v1608
  %v1641 = vmul.f32 %v1609, %v1609
  %v1642 = vmul.f32 %v1610, %v1610
  %v1643 = vmul.f32 %v1611, %v1611
  %v1644 = vmul.f32 %v1612, %v1612
  %v1645 = vadd.f32 %v1613, %v1614
  %v1646 = vadd.f32 %v1645, %v1615
  %v1647 = vadd.f32 %v1646, %v1616
  %v1648 = vadd.f32 %v1647, %v1617
  %v1649 = vadd.f32 %v1648, %v1618
  %v1650 = vadd.f32 %v1649, %v1619
  %v1651 = vadd.f32 %v1650, %v1620
  %v1652 = vadd.f32 %v1651, %v1621
  %v1653 = vadd.f32 %v1652, %v1622
  %v1654 = vadd.f32 %v1653, %v1623
  %v1655 = vadd.f32 %v1654, %v1624
  %v1656 = vadd.f32 %v1655, %v1625
  %v1657 = vadd.f32 %v1656, %v1626
  %v1658 = vadd.f32 %v1657, %v1627
  %v1659 = vadd.f32 %v1658, %v1628
  %v1660 = vadd.f32 %v1659, %v1629
  %v1661 = vadd.f32 %v1660, %v1630
  %v1662 = vadd.f32 %v1661, %v1631
  %v1663 = vadd.f32 %v1662, %v1632
  %v1664 = vadd.f32 %v1663, %v1633
  %v1665 = vadd.f32 %v1664, %v1634
  %v1666 = vadd.f32 %v1665, %v1635
  %v1667 = vadd.f32 %v1666, %v1636
  %v1668 = vadd.f32 %v1667, %v1637
  %v1669 = vadd.f32 %v1668, %v1638
  %v1670 = vadd.f32 %v1669, %v1639
  %v1671 = vadd.f32 %v1670, %v1640
  %v1672 = vadd.f32 %v1671, %v1641
  %v1673 = vadd.f32 %v1672, %v1642
  %v1674 = vadd.f32 %v1673, %v1643
  %v1675 = vadd.f32 %v1674, %v1644
  %v1676 = vrot.slane %v1675, 4
  %v1677 = vadd.f32 %v1675, %v1676
  %v1678 = vrot.slane %v1677, 2
  %v1679 = vadd.f32 %v1677, %v1678
  %v1680 = vrot.slane %v1679, 1
  %v1681 = vadd.f32 %v1679, %v1680
  %v1682 = vmul.f32 %v1681, 0.0625
  %v1683 = vld [vmem:[%s9 + $0x1] sm:$0x1]
  %v1684 = vadd.f32 %v1682, 1e-05
  %v1685 = vrsqrt.pop %v1684
  %v1686 = vmul.f32 %v1683, %v1685
  %v1687 = vld [vmem:[%s10 + $0x1] sm:$0x1]
  %v1688 = vmul.f32 %v1548, %v1686
  %v1689 = vsub.f32 %v1687, %v1688
  %v1690 = vlaneseq
  %v1691 = vshrl.u32 %v1690, 7
  %v1692 = vsub.s32 0, %v1691
  %v1693 = vrot.slane %v1686, %v1692
  %v1694 = vmul.f32 %v1385, %v1693
  %v1695 = vmul.f32 %v1388, %v1693
  %v1696 = vmul.f32 %v1393, %v1693
  %v1697 = vmul.f32 %v1396, %v1693
  %v1698 = vmul.f32 %v1401, %v1693
  %v1699 = vmul.f32 %v1404, %v1693
  %v1700 = vmul.f32 %v1409, %v1693
  %v1701 = vmul.f32 %v1412, %v1693
  %v1702 = vmul.f32 %v1417, %v1693
  %v1703 = vmul.f32 %v1420, %v1693
  %v1704 = vmul.f32 %v1425, %v1693
  %v1705 = vmul.f32 %v1428, %v1693
  %v1706 = vmul.f32 %v1433, %v1693
  %v1707 = vmul.f32 %v1436, %v1693
  %v1708 = vmul.f32 %v1441, %v1693
  %v1709 = vmul.f32 %v1444, %v1693
  %v1710 = vmul.f32 %v1449, %v1693
  %v1711 = vmul.f32 %v1452, %v1693
  %v1712 = vmul.f32 %v1457, %v1693
  %v1713 = vmul.f32 %v1460, %v1693
  %v1714 = vmul.f32 %v1465, %v1693
  %v1715 = vmul.f32 %v1468, %v1693
  %v1716 = vmul.f32 %v1473, %v1693
  %v1717 = vmul.f32 %v1476, %v1693
  %v1718 = vmul.f32 %v1481, %v1693
  %v1719 = vmul.f32 %v1484, %v1693
  %v1720 = vmul.f32 %v1489, %v1693
  %v1721 = vmul.f32 %v1492, %v1693
  %v1722 = vmul.f32 %v1497, %v1693
  %v1723 = vmul.f32 %v1500, %v1693
  %v1724 = vmul.f32 %v1505, %v1693
  %v1725 = vmul.f32 %v1508, %v1693
  %v1726 = vlaneseq
  %v1727 = vshrl.u32 %v1726, 7
  %v1728 = vsub.s32 0, %v1727
  %v1729 = vrot.slane %v1689, %v1728
  %v1730 = vadd.f32 %v1694, %v1729
  %v1731 = vadd.f32 %v1695, %v1729
  %v1732 = vadd.f32 %v1696, %v1729
  %v1733 = vadd.f32 %v1697, %v1729
  %v1734 = vadd.f32 %v1698, %v1729
  %v1735 = vadd.f32 %v1699, %v1729
  %v1736 = vadd.f32 %v1700, %v1729
  %v1737 = vadd.f32 %v1701, %v1729
  %v1738 = vadd.f32 %v1702, %v1729
  %v1739 = vadd.f32 %v1703, %v1729
  %v1740 = vadd.f32 %v1704, %v1729
  %v1741 = vadd.f32 %v1705, %v1729
  %v1742 = vadd.f32 %v1706, %v1729
  %v1743 = vadd.f32 %v1707, %v1729
  %v1744 = vadd.f32 %v1708, %v1729
  %v1745 = vadd.f32 %v1709, %v1729
  %v1746 = vadd.f32 %v1710, %v1729
  %v1747 = vadd.f32 %v1711, %v1729
  %v1748 = vadd.f32 %v1712, %v1729
  %v1749 = vadd.f32 %v1713, %v1729
  %v1750 = vadd.f32 %v1714, %v1729
  %v1751 = vadd.f32 %v1715, %v1729
  %v1752 = vadd.f32 %v1716, %v1729
  %v1753 = vadd.f32 %v1717, %v1729
  %v1754 = vadd.f32 %v1718, %v1729
  %v1755 = vadd.f32 %v1719, %v1729
  %v1756 = vadd.f32 %v1720, %v1729
  %v1757 = vadd.f32 %v1721, %v1729
  %v1758 = vadd.f32 %v1722, %v1729
  %v1759 = vadd.f32 %v1723, %v1729
  %v1760 = vadd.f32 %v1724, %v1729
  %v1761 = vadd.f32 %v1725, %v1729
  %v1762 = vmax.f32 %v1730, 0.0
  %v1763 = vmax.f32 %v1731, 0.0
  %v1764 = vmax.f32 %v1732, 0.0
  %v1765 = vmax.f32 %v1733, 0.0
  %v1766 = vmax.f32 %v1734, 0.0
  %v1767 = vmax.f32 %v1735, 0.0
  %v1768 = vmax.f32 %v1736, 0.0
  %v1769 = vmax.f32 %v1737, 0.0
  %v1770 = vmax.f32 %v1738, 0.0
  %v1771 = vmax.f32 %v1739, 0.0
  %v1772 = vmax.f32 %v1740, 0.0
  %v1773 = vmax.f32 %v1741, 0.0
  %v1774 = vmax.f32 %v1742, 0.0
  %v1775 = vmax.f32 %v1743, 0.0
  %v1776 = vmax.f32 %v1744, 0.0
  %v1777 = vmax.f32 %v1745, 0.0
  %v1778 = vmax.f32 %v1746, 0.0
  %v1779 = vmax.f32 %v1747, 0.0
  %v1780 = vmax.f32 %v1748, 0.0
  %v1781 = vmax.f32 %v1749, 0.0
  %v1782 = vmax.f32 %v1750, 0.0
  %v1783 = vmax.f32 %v1751, 0.0
  %v1784 = vmax.f32 %v1752, 0.0
  %v1785 = vmax.f32 %v1753, 0.0
  %v1786 = vmax.f32 %v1754, 0.0
  %v1787 = vmax.f32 %v1755, 0.0
  %v1788 = vmax.f32 %v1756, 0.0
  %v1789 = vmax.f32 %v1757, 0.0
  %v1790 = vmax.f32 %v1758, 0.0
  %v1791 = vmax.f32 %v1759, 0.0
  %v1792 = vmax.f32 %v1760, 0.0
  %v1793 = vmax.f32 %v1761, 0.0
  %v1794 = vpack.c.bf16 %v1763, %v1762
  %v1795 = vpack.c.bf16 %v1765, %v1764
  %v1796 = vpack.c.bf16 %v1767, %v1766
  %v1797 = vpack.c.bf16 %v1769, %v1768
  %v1798 = vpack.c.bf16 %v1771, %v1770
  %v1799 = vpack.c.bf16 %v1773, %v1772
  %v1800 = vpack.c.bf16 %v1775, %v1774
  %v1801 = vpack.c.bf16 %v1777, %v1776
  %v1802 = vpack.c.bf16 %v1779, %v1778
  %v1803 = vpack.c.bf16 %v1781, %v1780
  %v1804 = vpack.c.bf16 %v1783, %v1782
  %v1805 = vpack.c.bf16 %v1785, %v1784
  %v1806 = vpack.c.bf16 %v1787, %v1786
  %v1807 = vpack.c.bf16 %v1789, %v1788
  %v1808 = vpack.c.bf16 %v1791, %v1790
  %v1809 = vpack.c.bf16 %v1793, %v1792
  %v1810 = vld [vmem:[%s4] sm:$0xf]
  %v1811 = vld [vmem:[%s4 + $0x4] sm:$0xf]
  %v1812 = vld [vmem:[%s4 + $0x8] sm:$0xf]
  %v1813 = vld [vmem:[%s4 + $0xc] sm:$0xf]
  %v1814 = vld [vmem:[%s4 + $0x10] sm:$0xf]
  %v1815 = vld [vmem:[%s4 + $0x14] sm:$0xf]
  %v1816 = vld [vmem:[%s4 + $0x18] sm:$0xf]
  %v1817 = vld [vmem:[%s4 + $0x1c] sm:$0xf]
  %v1818 = vld [vmem:[%s4 + $0x20] sm:$0xf]
  %v1819 = vld [vmem:[%s4 + $0x24] sm:$0xf]
  %v1820 = vld [vmem:[%s4 + $0x28] sm:$0xf]
  %v1821 = vld [vmem:[%s4 + $0x2c] sm:$0xf]
  %v1822 = vld [vmem:[%s4 + $0x30] sm:$0xf]
  %v1823 = vld [vmem:[%s4 + $0x34] sm:$0xf]
  %v1824 = vld [vmem:[%s4 + $0x38] sm:$0xf]
  %v1825 = vld [vmem:[%s4 + $0x3c] sm:$0xf]
  %v1842 = vunpack.c.l.b16 %v1810
  %v1843 = vunpack.c.l.b16 %v1811
  %v1844 = vunpack.c.l.b16 %v1812
  %v1845 = vunpack.c.l.b16 %v1813
  %v1846 = vunpack.c.l.b16 %v1814
  %v1847 = vunpack.c.l.b16 %v1815
  %v1848 = vunpack.c.l.b16 %v1816
  %v1849 = vunpack.c.l.b16 %v1817
  %v1850 = vunpack.c.l.b16 %v1818
  %v1851 = vunpack.c.l.b16 %v1819
  %v1852 = vunpack.c.l.b16 %v1820
  %v1853 = vunpack.c.l.b16 %v1821
  %v1854 = vunpack.c.l.b16 %v1822
  %v1855 = vunpack.c.l.b16 %v1823
  %v1856 = vunpack.c.l.b16 %v1824
  %v1857 = vunpack.c.l.b16 %v1825
  %v1858 = vpack.c.b16 %v1843, %v1842
  %v1859 = vpack.c.b16 %v1845, %v1844
  %v1860 = vpack.c.b16 %v1847, %v1846
  %v1861 = vpack.c.b16 %v1849, %v1848
  %v1862 = vpack.c.b16 %v1851, %v1850
  %v1863 = vpack.c.b16 %v1853, %v1852
  %v1864 = vpack.c.b16 %v1855, %v1854
  %v1865 = vpack.c.b16 %v1857, %v1856
  %1874 = vmatprep.subr.bf16.mxu0 0
  %1875 = vmatpush1.bf16.msra.mxu0 %v1865
  %1876 = vmatprep.subr.bf16.mxu0 0
  %1877 = vmatpush1.bf16.msra.mxu0 %v1864
  %1878 = vmatprep.subr.bf16.mxu0 0
  %1879 = vmatpush1.bf16.msra.mxu0 %v1863
  %1880 = vmatprep.subr.bf16.mxu0 0
  %1881 = vmatpush1.bf16.msra.mxu0 %v1862
  %1882 = vmatprep.subr.bf16.mxu0 0
  %1883 = vmatpush1.bf16.msra.mxu0 %v1861
  %1884 = vmatprep.subr.bf16.mxu0 0
  %1885 = vmatpush1.bf16.msra.mxu0 %v1860
  %1886 = vmatprep.subr.bf16.mxu0 0
  %1887 = vmatpush1.bf16.msra.mxu0 %v1859
  %1888 = vmatprep.subr.bf16.mxu0 0
  %1889 = vmatpush1.bf16.msra.mxu0 %v1858
  %1890 = vmatprep.subr.bf16.mxu0 0
  %1891 = vmatpush2.bf16.msra.mxu0 0
  %1892 = vmatprep.subr.bf16.mxu0 0
  %1893 = vmatpush2.bf16.msra.mxu0 0
  %1894 = vmatprep.subr.bf16.mxu0 0
  %1895 = vmatpush2.bf16.msra.mxu0 0
  %1896 = vmatprep.subr.bf16.mxu0 0
  %1897 = vmatpush2.bf16.msra.mxu0 0
  %1898 = vmatprep.subr.bf16.mxu0 0
  %1899 = vmatpush2.bf16.msra.mxu0 0
  %1900 = vmatprep.subr.bf16.mxu0 0
  %1901 = vmatpush2.bf16.msra.mxu0 0
  %1902 = vmatprep.subr.bf16.mxu0 0
  %1903 = vmatpush2.bf16.msra.mxu0 0
  %1904 = vmatprep.subr.bf16.mxu0 0
  %1905 = vmatpush2.bf16.msra.mxu0 0
  %1906 = vmatprep.mubr.bf16.mxu0 0
  %1907 = vmatmul.mubr.bf16.gmra.mxu0 %v1794
  %v1908 = vpop.f32.mrf.mxu0
  %v1909 = vadd.f32 0.0, %v1908
  %v1910 = vpop.f32.mrf.mxu0
  %v1911 = vpop.f32.mrf.mxu0
  %v1912 = vadd.f32 0.0, %v1911
  %v1913 = vpop.f32.mrf.mxu0
  %1914 = vmatprep.mubr.bf16.mxu0 0
  %1915 = vmatmul.mubr.bf16.gmra.mxu0 %v1795
  %v1916 = vpop.f32.mrf.mxu0
  %v1917 = vadd.f32 0.0, %v1916
  %v1918 = vpop.f32.mrf.mxu0
  %v1919 = vpop.f32.mrf.mxu0
  %v1920 = vadd.f32 0.0, %v1919
  %v1921 = vpop.f32.mrf.mxu0
  %1922 = vmatprep.mubr.bf16.mxu0 0
  %1923 = vmatmul.mubr.bf16.gmra.mxu0 %v1796
  %v1924 = vpop.f32.mrf.mxu0
  %v1925 = vadd.f32 0.0, %v1924
  %v1926 = vpop.f32.mrf.mxu0
  %v1927 = vpop.f32.mrf.mxu0
  %v1928 = vadd.f32 0.0, %v1927
  %v1929 = vpop.f32.mrf.mxu0
  %1930 = vmatprep.mubr.bf16.mxu0 0
  %1931 = vmatmul.mubr.bf16.gmra.mxu0 %v1797
  %v1932 = vpop.f32.mrf.mxu0
  %v1933 = vadd.f32 0.0, %v1932
  %v1934 = vpop.f32.mrf.mxu0
  %v1935 = vpop.f32.mrf.mxu0
  %v1936 = vadd.f32 0.0, %v1935
  %v1937 = vpop.f32.mrf.mxu0
  %1938 = vmatprep.mubr.bf16.mxu0 0
  %1939 = vmatmul.mubr.bf16.gmra.mxu0 %v1798
  %v1940 = vpop.f32.mrf.mxu0
  %v1941 = vadd.f32 0.0, %v1940
  %v1942 = vpop.f32.mrf.mxu0
  %v1943 = vpop.f32.mrf.mxu0
  %v1944 = vadd.f32 0.0, %v1943
  %v1945 = vpop.f32.mrf.mxu0
  %1946 = vmatprep.mubr.bf16.mxu0 0
  %1947 = vmatmul.mubr.bf16.gmra.mxu0 %v1799
  %v1948 = vpop.f32.mrf.mxu0
  %v1949 = vadd.f32 0.0, %v1948
  %v1950 = vpop.f32.mrf.mxu0
  %v1951 = vpop.f32.mrf.mxu0
  %v1952 = vadd.f32 0.0, %v1951
  %v1953 = vpop.f32.mrf.mxu0
  %1954 = vmatprep.mubr.bf16.mxu0 0
  %1955 = vmatmul.mubr.bf16.gmra.mxu0 %v1800
  %v1956 = vpop.f32.mrf.mxu0
  %v1957 = vadd.f32 0.0, %v1956
  %v1958 = vpop.f32.mrf.mxu0
  %v1959 = vpop.f32.mrf.mxu0
  %v1960 = vadd.f32 0.0, %v1959
  %v1961 = vpop.f32.mrf.mxu0
  %1962 = vmatprep.mubr.bf16.mxu0 0
  %1963 = vmatmul.mubr.bf16.gmra.mxu0 %v1801
  %v1964 = vpop.f32.mrf.mxu0
  %v1965 = vadd.f32 0.0, %v1964
  %v1966 = vpop.f32.mrf.mxu0
  %v1967 = vpop.f32.mrf.mxu0
  %v1968 = vadd.f32 0.0, %v1967
  %v1969 = vpop.f32.mrf.mxu0
  %1970 = vmatprep.mubr.bf16.mxu0 0
  %1971 = vmatmul.mubr.bf16.gmra.mxu0 %v1802
  %v1972 = vpop.f32.mrf.mxu0
  %v1973 = vadd.f32 0.0, %v1972
  %v1974 = vpop.f32.mrf.mxu0
  %v1975 = vpop.f32.mrf.mxu0
  %v1976 = vadd.f32 0.0, %v1975
  %v1977 = vpop.f32.mrf.mxu0
  %1978 = vmatprep.mubr.bf16.mxu0 0
  %1979 = vmatmul.mubr.bf16.gmra.mxu0 %v1803
  %v1980 = vpop.f32.mrf.mxu0
  %v1981 = vadd.f32 0.0, %v1980
  %v1982 = vpop.f32.mrf.mxu0
  %v1983 = vpop.f32.mrf.mxu0
  %v1984 = vadd.f32 0.0, %v1983
  %v1985 = vpop.f32.mrf.mxu0
  %1986 = vmatprep.mubr.bf16.mxu0 0
  %1987 = vmatmul.mubr.bf16.gmra.mxu0 %v1804
  %v1988 = vpop.f32.mrf.mxu0
  %v1989 = vadd.f32 0.0, %v1988
  %v1990 = vpop.f32.mrf.mxu0
  %v1991 = vpop.f32.mrf.mxu0
  %v1992 = vadd.f32 0.0, %v1991
  %v1993 = vpop.f32.mrf.mxu0
  %1994 = vmatprep.mubr.bf16.mxu0 0
  %1995 = vmatmul.mubr.bf16.gmra.mxu0 %v1805
  %v1996 = vpop.f32.mrf.mxu0
  %v1997 = vadd.f32 0.0, %v1996
  %v1998 = vpop.f32.mrf.mxu0
  %v1999 = vpop.f32.mrf.mxu0
  %v2000 = vadd.f32 0.0, %v1999
  %v2001 = vpop.f32.mrf.mxu0
  %2002 = vmatprep.mubr.bf16.mxu0 0
  %2003 = vmatmul.mubr.bf16.gmra.mxu0 %v1806
  %v2004 = vpop.f32.mrf.mxu0
  %v2005 = vadd.f32 0.0, %v2004
  %v2006 = vpop.f32.mrf.mxu0
  %v2007 = vpop.f32.mrf.mxu0
  %v2008 = vadd.f32 0.0, %v2007
  %v2009 = vpop.f32.mrf.mxu0
  %2010 = vmatprep.mubr.bf16.mxu0 0
  %2011 = vmatmul.mubr.bf16.gmra.mxu0 %v1807
  %v2012 = vpop.f32.mrf.mxu0
  %v2013 = vadd.f32 0.0, %v2012
  %v2014 = vpop.f32.mrf.mxu0
  %v2015 = vpop.f32.mrf.mxu0
  %v2016 = vadd.f32 0.0, %v2015
  %v2017 = vpop.f32.mrf.mxu0
  %2018 = vmatprep.mubr.bf16.mxu0 0
  %2019 = vmatmul.mubr.bf16.gmra.mxu0 %v1808
  %v2020 = vpop.f32.mrf.mxu0
  %v2021 = vadd.f32 0.0, %v2020
  %v2022 = vpop.f32.mrf.mxu0
  %v2023 = vpop.f32.mrf.mxu0
  %v2024 = vadd.f32 0.0, %v2023
  %v2025 = vpop.f32.mrf.mxu0
  %2026 = vmatprep.mubr.bf16.mxu0 0
  %2027 = vmatmul.mubr.bf16.gmra.mxu0 %v1809
  %v2028 = vpop.f32.mrf.mxu0
  %v2029 = vadd.f32 0.0, %v2028
  %v2030 = vpop.f32.mrf.mxu0
  %v2031 = vpop.f32.mrf.mxu0
  %v2032 = vadd.f32 0.0, %v2031
  %v2033 = vpop.f32.mrf.mxu0
  %2034 = vdwg.mxu0
  %v2035 = vpack.c.bf16 %v1912, %v1909
  %v2036 = vpack.c.bf16 %v1920, %v1917
  %v2037 = vpack.c.bf16 %v1928, %v1925
  %v2038 = vpack.c.bf16 %v1936, %v1933
  %v2039 = vpack.c.bf16 %v1944, %v1941
  %v2040 = vpack.c.bf16 %v1952, %v1949
  %v2041 = vpack.c.bf16 %v1960, %v1957
  %v2042 = vpack.c.bf16 %v1968, %v1965
  %v2043 = vpack.c.bf16 %v1976, %v1973
  %v2044 = vpack.c.bf16 %v1984, %v1981
  %v2045 = vpack.c.bf16 %v1992, %v1989
  %v2046 = vpack.c.bf16 %v2000, %v1997
  %v2047 = vpack.c.bf16 %v2008, %v2005
  %v2048 = vpack.c.bf16 %v2016, %v2013
  %v2049 = vpack.c.bf16 %v2024, %v2021
  %v2050 = vpack.c.bf16 %v2032, %v2029
  %2051 = vmatprep.subr.bf16.mxu0 0
  %2052 = vmatpush1.bf16.msra.mxu0 %v2042
  %2053 = vmatprep.subr.bf16.mxu0 0
  %2054 = vmatpush1.bf16.msra.mxu0 %v2041
  %2055 = vmatprep.subr.bf16.mxu0 0
  %2056 = vmatpush1.bf16.msra.mxu0 %v2040
  %2057 = vmatprep.subr.bf16.mxu0 0
  %2058 = vmatpush1.bf16.msra.mxu0 %v2039
  %2059 = vmatprep.subr.bf16.mxu0 0
  %2060 = vmatpush1.bf16.msra.mxu0 %v2038
  %2061 = vmatprep.subr.bf16.mxu0 0
  %2062 = vmatpush1.bf16.msra.mxu0 %v2037
  %2063 = vmatprep.subr.bf16.mxu0 0
  %2064 = vmatpush1.bf16.msra.mxu0 %v2036
  %2065 = vmatprep.subr.bf16.mxu0 0
  %2066 = vmatpush1.bf16.msra.mxu0 %v2035
  %2067 = vmatprep.subr.bf16.mxu0 0
  %2068 = vmatpush2.bf16.msra.mxu0 %v2050
  %2069 = vmatprep.subr.bf16.mxu0 0
  %2070 = vmatpush2.bf16.msra.mxu0 %v2049
  %2071 = vmatprep.subr.bf16.mxu0 0
  %2072 = vmatpush2.bf16.msra.mxu0 %v2048
  %2073 = vmatprep.subr.bf16.mxu0 0
  %2074 = vmatpush2.bf16.msra.mxu0 %v2047
  %2075 = vmatprep.subr.bf16.mxu0 0
  %2076 = vmatpush2.bf16.msra.mxu0 %v2046
  %2077 = vmatprep.subr.bf16.mxu0 0
  %2078 = vmatpush2.bf16.msra.mxu0 %v2045
  %2079 = vmatprep.subr.bf16.mxu0 0
  %2080 = vmatpush2.bf16.msra.mxu0 %v2044
  %2081 = vmatprep.subr.bf16.mxu0 0
  %2082 = vmatpush2.bf16.msra.mxu0 %v2043
  %2083 = vmatprep.mubr.bf16.mxu0 %v586
  %2084 = vmatmul.mubr.bf16.gmra.mxu0 %v585
  %v2085 = vpop.f32.mrf.mxu0
  %v2086 = vadd.f32 0.0, %v2085
  %v2087 = vpop.f32.mrf.mxu0
  %v2088 = vpop.f32.mrf.mxu0
  %v2089 = vadd.f32 0.0, %v2088
  %v2090 = vpop.f32.mrf.mxu0
  %2091 = vmatprep.mubr.bf16.mxu0 %v588
  %2092 = vmatmul.mubr.bf16.gmra.mxu0 %v587
  %v2093 = vpop.f32.mrf.mxu0
  %v2094 = vadd.f32 0.0, %v2093
  %v2095 = vpop.f32.mrf.mxu0
  %v2096 = vpop.f32.mrf.mxu0
  %v2097 = vadd.f32 0.0, %v2096
  %v2098 = vpop.f32.mrf.mxu0
  %2099 = vmatprep.mubr.bf16.mxu0 %v590
  %2100 = vmatmul.mubr.bf16.gmra.mxu0 %v589
  %v2101 = vpop.f32.mrf.mxu0
  %v2102 = vadd.f32 0.0, %v2101
  %v2103 = vpop.f32.mrf.mxu0
  %v2104 = vpop.f32.mrf.mxu0
  %v2105 = vadd.f32 0.0, %v2104
  %v2106 = vpop.f32.mrf.mxu0
  %2107 = vmatprep.mubr.bf16.mxu0 %v592
  %2108 = vmatmul.mubr.bf16.gmra.mxu0 %v591
  %v2109 = vpop.f32.mrf.mxu0
  %v2110 = vadd.f32 0.0, %v2109
  %v2111 = vpop.f32.mrf.mxu0
  %v2112 = vpop.f32.mrf.mxu0
  %v2113 = vadd.f32 0.0, %v2112
  %v2114 = vpop.f32.mrf.mxu0
  %2115 = vmatprep.mubr.bf16.mxu0 %v594
  %2116 = vmatmul.mubr.bf16.gmra.mxu0 %v593
  %v2117 = vpop.f32.mrf.mxu0
  %v2118 = vadd.f32 0.0, %v2117
  %v2119 = vpop.f32.mrf.mxu0
  %v2120 = vpop.f32.mrf.mxu0
  %v2121 = vadd.f32 0.0, %v2120
  %v2122 = vpop.f32.mrf.mxu0
  %2123 = vmatprep.mubr.bf16.mxu0 %v596
  %2124 = vmatmul.mubr.bf16.gmra.mxu0 %v595
  %v2125 = vpop.f32.mrf.mxu0
  %v2126 = vadd.f32 0.0, %v2125
  %v2127 = vpop.f32.mrf.mxu0
  %v2128 = vpop.f32.mrf.mxu0
  %v2129 = vadd.f32 0.0, %v2128
  %v2130 = vpop.f32.mrf.mxu0
  %2131 = vmatprep.mubr.bf16.mxu0 %v598
  %2132 = vmatmul.mubr.bf16.gmra.mxu0 %v597
  %v2133 = vpop.f32.mrf.mxu0
  %v2134 = vadd.f32 0.0, %v2133
  %v2135 = vpop.f32.mrf.mxu0
  %v2136 = vpop.f32.mrf.mxu0
  %v2137 = vadd.f32 0.0, %v2136
  %v2138 = vpop.f32.mrf.mxu0
  %2139 = vmatprep.mubr.bf16.mxu0 %v600
  %2140 = vmatmul.mubr.bf16.gmra.mxu0 %v599
  %v2141 = vpop.f32.mrf.mxu0
  %v2142 = vadd.f32 0.0, %v2141
  %v2143 = vpop.f32.mrf.mxu0
  %v2144 = vpop.f32.mrf.mxu0
  %v2145 = vadd.f32 0.0, %v2144
  %v2146 = vpop.f32.mrf.mxu0
  %2147 = vmatprep.mubr.bf16.mxu0 %v602
  %2148 = vmatmul.mubr.bf16.gmra.mxu0 %v601
  %v2149 = vpop.f32.mrf.mxu0
  %v2150 = vadd.f32 0.0, %v2149
  %v2151 = vpop.f32.mrf.mxu0
  %v2152 = vpop.f32.mrf.mxu0
  %v2153 = vadd.f32 0.0, %v2152
  %v2154 = vpop.f32.mrf.mxu0
  %2155 = vmatprep.mubr.bf16.mxu0 %v604
  %2156 = vmatmul.mubr.bf16.gmra.mxu0 %v603
  %v2157 = vpop.f32.mrf.mxu0
  %v2158 = vadd.f32 0.0, %v2157
  %v2159 = vpop.f32.mrf.mxu0
  %v2160 = vpop.f32.mrf.mxu0
  %v2161 = vadd.f32 0.0, %v2160
  %v2162 = vpop.f32.mrf.mxu0
  %2163 = vmatprep.mubr.bf16.mxu0 %v606
  %2164 = vmatmul.mubr.bf16.gmra.mxu0 %v605
  %v2165 = vpop.f32.mrf.mxu0
  %v2166 = vadd.f32 0.0, %v2165
  %v2167 = vpop.f32.mrf.mxu0
  %v2168 = vpop.f32.mrf.mxu0
  %v2169 = vadd.f32 0.0, %v2168
  %v2170 = vpop.f32.mrf.mxu0
  %2171 = vmatprep.mubr.bf16.mxu0 %v608
  %2172 = vmatmul.mubr.bf16.gmra.mxu0 %v607
  %v2173 = vpop.f32.mrf.mxu0
  %v2174 = vadd.f32 0.0, %v2173
  %v2175 = vpop.f32.mrf.mxu0
  %v2176 = vpop.f32.mrf.mxu0
  %v2177 = vadd.f32 0.0, %v2176
  %v2178 = vpop.f32.mrf.mxu0
  %2179 = vmatprep.mubr.bf16.mxu0 %v610
  %2180 = vmatmul.mubr.bf16.gmra.mxu0 %v609
  %v2181 = vpop.f32.mrf.mxu0
  %v2182 = vadd.f32 0.0, %v2181
  %v2183 = vpop.f32.mrf.mxu0
  %v2184 = vpop.f32.mrf.mxu0
  %v2185 = vadd.f32 0.0, %v2184
  %v2186 = vpop.f32.mrf.mxu0
  %2187 = vmatprep.mubr.bf16.mxu0 %v612
  %2188 = vmatmul.mubr.bf16.gmra.mxu0 %v611
  %v2189 = vpop.f32.mrf.mxu0
  %v2190 = vadd.f32 0.0, %v2189
  %v2191 = vpop.f32.mrf.mxu0
  %v2192 = vpop.f32.mrf.mxu0
  %v2193 = vadd.f32 0.0, %v2192
  %v2194 = vpop.f32.mrf.mxu0
  %2195 = vmatprep.mubr.bf16.mxu0 %v614
  %2196 = vmatmul.mubr.bf16.gmra.mxu0 %v613
  %v2197 = vpop.f32.mrf.mxu0
  %v2198 = vadd.f32 0.0, %v2197
  %v2199 = vpop.f32.mrf.mxu0
  %v2200 = vpop.f32.mrf.mxu0
  %v2201 = vadd.f32 0.0, %v2200
  %v2202 = vpop.f32.mrf.mxu0
  %2203 = vmatprep.mubr.bf16.mxu0 %v616
  %2204 = vmatmul.mubr.bf16.gmra.mxu0 %v615
  %v2205 = vpop.f32.mrf.mxu0
  %v2206 = vadd.f32 0.0, %v2205
  %v2207 = vpop.f32.mrf.mxu0
  %v2208 = vpop.f32.mrf.mxu0
  %v2209 = vadd.f32 0.0, %v2208
  %v2210 = vpop.f32.mrf.mxu0
  %2211 = vdwg.mxu0
  %v2212 = vadd.f32 %v2086, %v2089
  %v2213 = vadd.f32 %v2212, %v2094
  %v2214 = vadd.f32 %v2213, %v2097
  %v2215 = vadd.f32 %v2214, %v2102
  %v2216 = vadd.f32 %v2215, %v2105
  %v2217 = vadd.f32 %v2216, %v2110
  %v2218 = vadd.f32 %v2217, %v2113
  %v2219 = vadd.f32 %v2218, %v2118
  %v2220 = vadd.f32 %v2219, %v2121
  %v2221 = vadd.f32 %v2220, %v2126
  %v2222 = vadd.f32 %v2221, %v2129
  %v2223 = vadd.f32 %v2222, %v2134
  %v2224 = vadd.f32 %v2223, %v2137
  %v2225 = vadd.f32 %v2224, %v2142
  %v2226 = vadd.f32 %v2225, %v2145
  %v2227 = vadd.f32 %v2226, %v2150
  %v2228 = vadd.f32 %v2227, %v2153
  %v2229 = vadd.f32 %v2228, %v2158
  %v2230 = vadd.f32 %v2229, %v2161
  %v2231 = vadd.f32 %v2230, %v2166
  %v2232 = vadd.f32 %v2231, %v2169
  %v2233 = vadd.f32 %v2232, %v2174
  %v2234 = vadd.f32 %v2233, %v2177
  %v2235 = vadd.f32 %v2234, %v2182
  %v2236 = vadd.f32 %v2235, %v2185
  %v2237 = vadd.f32 %v2236, %v2190
  %v2238 = vadd.f32 %v2237, %v2193
  %v2239 = vadd.f32 %v2238, %v2198
  %v2240 = vadd.f32 %v2239, %v2201
  %v2241 = vadd.f32 %v2240, %v2206
  %v2242 = vadd.f32 %v2241, %v2209
  %v2243 = vrot.slane %v2242, 4
  %v2244 = vadd.f32 %v2242, %v2243
  %v2245 = vrot.slane %v2244, 2
  %v2246 = vadd.f32 %v2244, %v2245
  %v2247 = vrot.slane %v2246, 1
  %v2248 = vadd.f32 %v2246, %v2247
  %v2249 = vmul.f32 %v2248, 0.0625
  %v2250 = vsub.f32 %v2086, %v2249
  %v2251 = vsub.f32 %v2089, %v2249
  %v2252 = vsub.f32 %v2094, %v2249
  %v2253 = vsub.f32 %v2097, %v2249
  %v2254 = vsub.f32 %v2102, %v2249
  %v2255 = vsub.f32 %v2105, %v2249
  %v2256 = vsub.f32 %v2110, %v2249
  %v2257 = vsub.f32 %v2113, %v2249
  %v2258 = vsub.f32 %v2118, %v2249
  %v2259 = vsub.f32 %v2121, %v2249
  %v2260 = vsub.f32 %v2126, %v2249
  %v2261 = vsub.f32 %v2129, %v2249
  %v2262 = vsub.f32 %v2134, %v2249
  %v2263 = vsub.f32 %v2137, %v2249
  %v2264 = vsub.f32 %v2142, %v2249
  %v2265 = vsub.f32 %v2145, %v2249
  %v2266 = vsub.f32 %v2150, %v2249
  %v2267 = vsub.f32 %v2153, %v2249
  %v2268 = vsub.f32 %v2158, %v2249
  %v2269 = vsub.f32 %v2161, %v2249
  %v2270 = vsub.f32 %v2166, %v2249
  %v2271 = vsub.f32 %v2169, %v2249
  %v2272 = vsub.f32 %v2174, %v2249
  %v2273 = vsub.f32 %v2177, %v2249
  %v2274 = vsub.f32 %v2182, %v2249
  %v2275 = vsub.f32 %v2185, %v2249
  %v2276 = vsub.f32 %v2190, %v2249
  %v2277 = vsub.f32 %v2193, %v2249
  %v2278 = vsub.f32 %v2198, %v2249
  %v2279 = vsub.f32 %v2201, %v2249
  %v2280 = vsub.f32 %v2206, %v2249
  %v2281 = vsub.f32 %v2209, %v2249
  %v2282 = vmul.f32 %v2250, %v168
  %v2283 = vmul.f32 %v2251, %v169
  %v2284 = vmul.f32 %v2252, %v170
  %v2285 = vmul.f32 %v2253, %v171
  %v2286 = vmul.f32 %v2254, %v172
  %v2287 = vmul.f32 %v2255, %v173
  %v2288 = vmul.f32 %v2256, %v174
  %v2289 = vmul.f32 %v2257, %v175
  %v2290 = vmul.f32 %v2258, %v176
  %v2291 = vmul.f32 %v2259, %v177
  %v2292 = vmul.f32 %v2260, %v178
  %v2293 = vmul.f32 %v2261, %v179
  %v2294 = vmul.f32 %v2262, %v180
  %v2295 = vmul.f32 %v2263, %v181
  %v2296 = vmul.f32 %v2264, %v182
  %v2297 = vmul.f32 %v2265, %v183
  %v2298 = vmul.f32 %v2266, %v184
  %v2299 = vmul.f32 %v2267, %v185
  %v2300 = vmul.f32 %v2268, %v186
  %v2301 = vmul.f32 %v2269, %v187
  %v2302 = vmul.f32 %v2270, %v188
  %v2303 = vmul.f32 %v2271, %v189
  %v2304 = vmul.f32 %v2272, %v190
  %v2305 = vmul.f32 %v2273, %v191
  %v2306 = vmul.f32 %v2274, %v192
  %v2307 = vmul.f32 %v2275, %v193
  %v2308 = vmul.f32 %v2276, %v194
  %v2309 = vmul.f32 %v2277, %v195
  %v2310 = vmul.f32 %v2278, %v196
  %v2311 = vmul.f32 %v2279, %v197
  %v2312 = vmul.f32 %v2280, %v198
  %v2313 = vmul.f32 %v2281, %v199
  %v2314 = vmul.f32 %v2282, %v2282
  %v2315 = vmul.f32 %v2283, %v2283
  %v2316 = vmul.f32 %v2284, %v2284
  %v2317 = vmul.f32 %v2285, %v2285
  %v2318 = vmul.f32 %v2286, %v2286
  %v2319 = vmul.f32 %v2287, %v2287
  %v2320 = vmul.f32 %v2288, %v2288
  %v2321 = vmul.f32 %v2289, %v2289
  %v2322 = vmul.f32 %v2290, %v2290
  %v2323 = vmul.f32 %v2291, %v2291
  %v2324 = vmul.f32 %v2292, %v2292
  %v2325 = vmul.f32 %v2293, %v2293
  %v2326 = vmul.f32 %v2294, %v2294
  %v2327 = vmul.f32 %v2295, %v2295
  %v2328 = vmul.f32 %v2296, %v2296
  %v2329 = vmul.f32 %v2297, %v2297
  %v2330 = vmul.f32 %v2298, %v2298
  %v2331 = vmul.f32 %v2299, %v2299
  %v2332 = vmul.f32 %v2300, %v2300
  %v2333 = vmul.f32 %v2301, %v2301
  %v2334 = vmul.f32 %v2302, %v2302
  %v2335 = vmul.f32 %v2303, %v2303
  %v2336 = vmul.f32 %v2304, %v2304
  %v2337 = vmul.f32 %v2305, %v2305
  %v2338 = vmul.f32 %v2306, %v2306
  %v2339 = vmul.f32 %v2307, %v2307
  %v2340 = vmul.f32 %v2308, %v2308
  %v2341 = vmul.f32 %v2309, %v2309
  %v2342 = vmul.f32 %v2310, %v2310
  %v2343 = vmul.f32 %v2311, %v2311
  %v2344 = vmul.f32 %v2312, %v2312
  %v2345 = vmul.f32 %v2313, %v2313
  %v2346 = vadd.f32 %v2314, %v2315
  %v2347 = vadd.f32 %v2346, %v2316
  %v2348 = vadd.f32 %v2347, %v2317
  %v2349 = vadd.f32 %v2348, %v2318
  %v2350 = vadd.f32 %v2349, %v2319
  %v2351 = vadd.f32 %v2350, %v2320
  %v2352 = vadd.f32 %v2351, %v2321
  %v2353 = vadd.f32 %v2352, %v2322
  %v2354 = vadd.f32 %v2353, %v2323
  %v2355 = vadd.f32 %v2354, %v2324
  %v2356 = vadd.f32 %v2355, %v2325
  %v2357 = vadd.f32 %v2356, %v2326
  %v2358 = vadd.f32 %v2357, %v2327
  %v2359 = vadd.f32 %v2358, %v2328
  %v2360 = vadd.f32 %v2359, %v2329
  %v2361 = vadd.f32 %v2360, %v2330
  %v2362 = vadd.f32 %v2361, %v2331
  %v2363 = vadd.f32 %v2362, %v2332
  %v2364 = vadd.f32 %v2363, %v2333
  %v2365 = vadd.f32 %v2364, %v2334
  %v2366 = vadd.f32 %v2365, %v2335
  %v2367 = vadd.f32 %v2366, %v2336
  %v2368 = vadd.f32 %v2367, %v2337
  %v2369 = vadd.f32 %v2368, %v2338
  %v2370 = vadd.f32 %v2369, %v2339
  %v2371 = vadd.f32 %v2370, %v2340
  %v2372 = vadd.f32 %v2371, %v2341
  %v2373 = vadd.f32 %v2372, %v2342
  %v2374 = vadd.f32 %v2373, %v2343
  %v2375 = vadd.f32 %v2374, %v2344
  %v2376 = vadd.f32 %v2375, %v2345
  %v2377 = vrot.slane %v2376, 4
  %v2378 = vadd.f32 %v2376, %v2377
  %v2379 = vrot.slane %v2378, 2
  %v2380 = vadd.f32 %v2378, %v2379
  %v2381 = vrot.slane %v2380, 1
  %v2382 = vadd.f32 %v2380, %v2381
  %v2383 = vmul.f32 %v2382, 0.0625
  %v2384 = vld [vmem:[%s9 + $0x2] sm:$0x1]
  %v2385 = vadd.f32 %v2383, 1e-05
  %v2386 = vrsqrt.pop %v2385
  %v2387 = vmul.f32 %v2384, %v2386
  %v2388 = vld [vmem:[%s10 + $0x2] sm:$0x1]
  %v2389 = vmul.f32 %v2249, %v2387
  %v2390 = vsub.f32 %v2388, %v2389
  %v2391 = vlaneseq
  %v2392 = vshrl.u32 %v2391, 7
  %v2393 = vsub.s32 0, %v2392
  %v2394 = vrot.slane %v2387, %v2393
  %v2395 = vmul.f32 %v2086, %v2394
  %v2396 = vmul.f32 %v2089, %v2394
  %v2397 = vmul.f32 %v2094, %v2394
  %v2398 = vmul.f32 %v2097, %v2394
  %v2399 = vmul.f32 %v2102, %v2394
  %v2400 = vmul.f32 %v2105, %v2394
  %v2401 = vmul.f32 %v2110, %v2394
  %v2402 = vmul.f32 %v2113, %v2394
  %v2403 = vmul.f32 %v2118, %v2394
  %v2404 = vmul.f32 %v2121, %v2394
  %v2405 = vmul.f32 %v2126, %v2394
  %v2406 = vmul.f32 %v2129, %v2394
  %v2407 = vmul.f32 %v2134, %v2394
  %v2408 = vmul.f32 %v2137, %v2394
  %v2409 = vmul.f32 %v2142, %v2394
  %v2410 = vmul.f32 %v2145, %v2394
  %v2411 = vmul.f32 %v2150, %v2394
  %v2412 = vmul.f32 %v2153, %v2394
  %v2413 = vmul.f32 %v2158, %v2394
  %v2414 = vmul.f32 %v2161, %v2394
  %v2415 = vmul.f32 %v2166, %v2394
  %v2416 = vmul.f32 %v2169, %v2394
  %v2417 = vmul.f32 %v2174, %v2394
  %v2418 = vmul.f32 %v2177, %v2394
  %v2419 = vmul.f32 %v2182, %v2394
  %v2420 = vmul.f32 %v2185, %v2394
  %v2421 = vmul.f32 %v2190, %v2394
  %v2422 = vmul.f32 %v2193, %v2394
  %v2423 = vmul.f32 %v2198, %v2394
  %v2424 = vmul.f32 %v2201, %v2394
  %v2425 = vmul.f32 %v2206, %v2394
  %v2426 = vmul.f32 %v2209, %v2394
  %v2427 = vlaneseq
  %v2428 = vshrl.u32 %v2427, 7
  %v2429 = vsub.s32 0, %v2428
  %v2430 = vrot.slane %v2390, %v2429
  %v2431 = vadd.f32 %v2395, %v2430
  %v2432 = vadd.f32 %v2396, %v2430
  %v2433 = vadd.f32 %v2397, %v2430
  %v2434 = vadd.f32 %v2398, %v2430
  %v2435 = vadd.f32 %v2399, %v2430
  %v2436 = vadd.f32 %v2400, %v2430
  %v2437 = vadd.f32 %v2401, %v2430
  %v2438 = vadd.f32 %v2402, %v2430
  %v2439 = vadd.f32 %v2403, %v2430
  %v2440 = vadd.f32 %v2404, %v2430
  %v2441 = vadd.f32 %v2405, %v2430
  %v2442 = vadd.f32 %v2406, %v2430
  %v2443 = vadd.f32 %v2407, %v2430
  %v2444 = vadd.f32 %v2408, %v2430
  %v2445 = vadd.f32 %v2409, %v2430
  %v2446 = vadd.f32 %v2410, %v2430
  %v2447 = vadd.f32 %v2411, %v2430
  %v2448 = vadd.f32 %v2412, %v2430
  %v2449 = vadd.f32 %v2413, %v2430
  %v2450 = vadd.f32 %v2414, %v2430
  %v2451 = vadd.f32 %v2415, %v2430
  %v2452 = vadd.f32 %v2416, %v2430
  %v2453 = vadd.f32 %v2417, %v2430
  %v2454 = vadd.f32 %v2418, %v2430
  %v2455 = vadd.f32 %v2419, %v2430
  %v2456 = vadd.f32 %v2420, %v2430
  %v2457 = vadd.f32 %v2421, %v2430
  %v2458 = vadd.f32 %v2422, %v2430
  %v2459 = vadd.f32 %v2423, %v2430
  %v2460 = vadd.f32 %v2424, %v2430
  %v2461 = vadd.f32 %v2425, %v2430
  %v2462 = vadd.f32 %v2426, %v2430
  %v2463 = vmax.f32 %v2431, 0.0
  %v2464 = vmax.f32 %v2432, 0.0
  %v2465 = vmax.f32 %v2433, 0.0
  %v2466 = vmax.f32 %v2434, 0.0
  %v2467 = vmax.f32 %v2435, 0.0
  %v2468 = vmax.f32 %v2436, 0.0
  %v2469 = vmax.f32 %v2437, 0.0
  %v2470 = vmax.f32 %v2438, 0.0
  %v2471 = vmax.f32 %v2439, 0.0
  %v2472 = vmax.f32 %v2440, 0.0
  %v2473 = vmax.f32 %v2441, 0.0
  %v2474 = vmax.f32 %v2442, 0.0
  %v2475 = vmax.f32 %v2443, 0.0
  %v2476 = vmax.f32 %v2444, 0.0
  %v2477 = vmax.f32 %v2445, 0.0
  %v2478 = vmax.f32 %v2446, 0.0
  %v2479 = vmax.f32 %v2447, 0.0
  %v2480 = vmax.f32 %v2448, 0.0
  %v2481 = vmax.f32 %v2449, 0.0
  %v2482 = vmax.f32 %v2450, 0.0
  %v2483 = vmax.f32 %v2451, 0.0
  %v2484 = vmax.f32 %v2452, 0.0
  %v2485 = vmax.f32 %v2453, 0.0
  %v2486 = vmax.f32 %v2454, 0.0
  %v2487 = vmax.f32 %v2455, 0.0
  %v2488 = vmax.f32 %v2456, 0.0
  %v2489 = vmax.f32 %v2457, 0.0
  %v2490 = vmax.f32 %v2458, 0.0
  %v2491 = vmax.f32 %v2459, 0.0
  %v2492 = vmax.f32 %v2460, 0.0
  %v2493 = vmax.f32 %v2461, 0.0
  %v2494 = vmax.f32 %v2462, 0.0
  %v2495 = vld [vmem:[%s5] sm:$0xf]
  %v2496 = vld [vmem:[%s5 + $0x4] sm:$0xf]
  %v2497 = vld [vmem:[%s5 + $0x8] sm:$0xf]
  %v2498 = vld [vmem:[%s5 + $0xc] sm:$0xf]
  %v2499 = vld [vmem:[%s5 + $0x10] sm:$0xf]
  %v2500 = vld [vmem:[%s5 + $0x14] sm:$0xf]
  %v2501 = vld [vmem:[%s5 + $0x18] sm:$0xf]
  %v2502 = vld [vmem:[%s5 + $0x1c] sm:$0xf]
  %v2503 = vld [vmem:[%s5 + $0x20] sm:$0xf]
  %v2504 = vld [vmem:[%s5 + $0x24] sm:$0xf]
  %v2505 = vld [vmem:[%s5 + $0x28] sm:$0xf]
  %v2506 = vld [vmem:[%s5 + $0x2c] sm:$0xf]
  %v2507 = vld [vmem:[%s5 + $0x30] sm:$0xf]
  %v2508 = vld [vmem:[%s5 + $0x34] sm:$0xf]
  %v2509 = vld [vmem:[%s5 + $0x38] sm:$0xf]
  %v2510 = vld [vmem:[%s5 + $0x3c] sm:$0xf]
  %v2511 = vld [vmem:[%s6] sm:$0xf]
  %v2512 = vld [vmem:[%s6 + $0x4] sm:$0xf]
  %v2513 = vld [vmem:[%s6 + $0x8] sm:$0xf]
  %v2514 = vld [vmem:[%s6 + $0xc] sm:$0xf]
  %v2515 = vld [vmem:[%s6 + $0x10] sm:$0xf]
  %v2516 = vld [vmem:[%s6 + $0x14] sm:$0xf]
  %v2517 = vld [vmem:[%s6 + $0x18] sm:$0xf]
  %v2518 = vld [vmem:[%s6 + $0x1c] sm:$0xf]
  %v2519 = vld [vmem:[%s6 + $0x20] sm:$0xf]
  %v2520 = vld [vmem:[%s6 + $0x24] sm:$0xf]
  %v2521 = vld [vmem:[%s6 + $0x28] sm:$0xf]
  %v2522 = vld [vmem:[%s6 + $0x2c] sm:$0xf]
  %v2523 = vld [vmem:[%s6 + $0x30] sm:$0xf]
  %v2524 = vld [vmem:[%s6 + $0x34] sm:$0xf]
  %v2525 = vld [vmem:[%s6 + $0x38] sm:$0xf]
  %v2526 = vld [vmem:[%s6 + $0x3c] sm:$0xf]
  %v2543 = vunpack.c.l.b16 %v2511
  %v2544 = vunpack.c.l.b16 %v2512
  %v2545 = vunpack.c.l.b16 %v2513
  %v2546 = vunpack.c.l.b16 %v2514
  %v2547 = vunpack.c.l.b16 %v2515
  %v2548 = vunpack.c.l.b16 %v2516
  %v2549 = vunpack.c.l.b16 %v2517
  %v2550 = vunpack.c.l.b16 %v2518
  %v2551 = vunpack.c.l.b16 %v2519
  %v2552 = vunpack.c.l.b16 %v2520
  %v2553 = vunpack.c.l.b16 %v2521
  %v2554 = vunpack.c.l.b16 %v2522
  %v2555 = vunpack.c.l.b16 %v2523
  %v2556 = vunpack.c.l.b16 %v2524
  %v2557 = vunpack.c.l.b16 %v2525
  %v2558 = vunpack.c.l.b16 %v2526
  %v2559 = vpack.c.b16 %v2544, %v2543
  %v2560 = vpack.c.b16 %v2546, %v2545
  %v2561 = vpack.c.b16 %v2548, %v2547
  %v2562 = vpack.c.b16 %v2550, %v2549
  %v2563 = vpack.c.b16 %v2552, %v2551
  %v2564 = vpack.c.b16 %v2554, %v2553
  %v2565 = vpack.c.b16 %v2556, %v2555
  %v2566 = vpack.c.b16 %v2558, %v2557
  %2575 = vmatprep.subr.bf16.mxu0 0
  %2576 = vmatpush1.bf16.msra.mxu0 %v2566
  %2577 = vmatprep.subr.bf16.mxu0 0
  %2578 = vmatpush1.bf16.msra.mxu0 %v2565
  %2579 = vmatprep.subr.bf16.mxu0 0
  %2580 = vmatpush1.bf16.msra.mxu0 %v2564
  %2581 = vmatprep.subr.bf16.mxu0 0
  %2582 = vmatpush1.bf16.msra.mxu0 %v2563
  %2583 = vmatprep.subr.bf16.mxu0 0
  %2584 = vmatpush1.bf16.msra.mxu0 %v2562
  %2585 = vmatprep.subr.bf16.mxu0 0
  %2586 = vmatpush1.bf16.msra.mxu0 %v2561
  %2587 = vmatprep.subr.bf16.mxu0 0
  %2588 = vmatpush1.bf16.msra.mxu0 %v2560
  %2589 = vmatprep.subr.bf16.mxu0 0
  %2590 = vmatpush1.bf16.msra.mxu0 %v2559
  %2591 = vmatprep.subr.bf16.mxu0 0
  %2592 = vmatpush2.bf16.msra.mxu0 0
  %2593 = vmatprep.subr.bf16.mxu0 0
  %2594 = vmatpush2.bf16.msra.mxu0 0
  %2595 = vmatprep.subr.bf16.mxu0 0
  %2596 = vmatpush2.bf16.msra.mxu0 0
  %2597 = vmatprep.subr.bf16.mxu0 0
  %2598 = vmatpush2.bf16.msra.mxu0 0
  %2599 = vmatprep.subr.bf16.mxu0 0
  %2600 = vmatpush2.bf16.msra.mxu0 0
  %2601 = vmatprep.subr.bf16.mxu0 0
  %2602 = vmatpush2.bf16.msra.mxu0 0
  %2603 = vmatprep.subr.bf16.mxu0 0
  %2604 = vmatpush2.bf16.msra.mxu0 0
  %2605 = vmatprep.subr.bf16.mxu0 0
  %2606 = vmatpush2.bf16.msra.mxu0 0
  %2607 = vmatprep.mubr.bf16.mxu0 0
  %2608 = vmatmul.mubr.bf16.gmra.mxu0 %v1794
  %v2609 = vpop.f32.mrf.mxu0
  %v2610 = vadd.f32 0.0, %v2609
  %v2611 = vpop.f32.mrf.mxu0
  %v2612 = vpop.f32.mrf.mxu0
  %v2613 = vadd.f32 0.0, %v2612
  %v2614 = vpop.f32.mrf.mxu0
  %2615 = vmatprep.mubr.bf16.mxu0 0
  %2616 = vmatmul.mubr.bf16.gmra.mxu0 %v1795
  %v2617 = vpop.f32.mrf.mxu0
  %v2618 = vadd.f32 0.0, %v2617
  %v2619 = vpop.f32.mrf.mxu0
  %v2620 = vpop.f32.mrf.mxu0
  %v2621 = vadd.f32 0.0, %v2620
  %v2622 = vpop.f32.mrf.mxu0
  %2623 = vmatprep.mubr.bf16.mxu0 0
  %2624 = vmatmul.mubr.bf16.gmra.mxu0 %v1796
  %v2625 = vpop.f32.mrf.mxu0
  %v2626 = vadd.f32 0.0, %v2625
  %v2627 = vpop.f32.mrf.mxu0
  %v2628 = vpop.f32.mrf.mxu0
  %v2629 = vadd.f32 0.0, %v2628
  %v2630 = vpop.f32.mrf.mxu0
  %2631 = vmatprep.mubr.bf16.mxu0 0
  %2632 = vmatmul.mubr.bf16.gmra.mxu0 %v1797
  %v2633 = vpop.f32.mrf.mxu0
  %v2634 = vadd.f32 0.0, %v2633
  %v2635 = vpop.f32.mrf.mxu0
  %v2636 = vpop.f32.mrf.mxu0
  %v2637 = vadd.f32 0.0, %v2636
  %v2638 = vpop.f32.mrf.mxu0
  %2639 = vmatprep.mubr.bf16.mxu0 0
  %2640 = vmatmul.mubr.bf16.gmra.mxu0 %v1798
  %v2641 = vpop.f32.mrf.mxu0
  %v2642 = vadd.f32 0.0, %v2641
  %v2643 = vpop.f32.mrf.mxu0
  %v2644 = vpop.f32.mrf.mxu0
  %v2645 = vadd.f32 0.0, %v2644
  %v2646 = vpop.f32.mrf.mxu0
  %2647 = vmatprep.mubr.bf16.mxu0 0
  %2648 = vmatmul.mubr.bf16.gmra.mxu0 %v1799
  %v2649 = vpop.f32.mrf.mxu0
  %v2650 = vadd.f32 0.0, %v2649
  %v2651 = vpop.f32.mrf.mxu0
  %v2652 = vpop.f32.mrf.mxu0
  %v2653 = vadd.f32 0.0, %v2652
  %v2654 = vpop.f32.mrf.mxu0
  %2655 = vmatprep.mubr.bf16.mxu0 0
  %2656 = vmatmul.mubr.bf16.gmra.mxu0 %v1800
  %v2657 = vpop.f32.mrf.mxu0
  %v2658 = vadd.f32 0.0, %v2657
  %v2659 = vpop.f32.mrf.mxu0
  %v2660 = vpop.f32.mrf.mxu0
  %v2661 = vadd.f32 0.0, %v2660
  %v2662 = vpop.f32.mrf.mxu0
  %2663 = vmatprep.mubr.bf16.mxu0 0
  %2664 = vmatmul.mubr.bf16.gmra.mxu0 %v1801
  %v2665 = vpop.f32.mrf.mxu0
  %v2666 = vadd.f32 0.0, %v2665
  %v2667 = vpop.f32.mrf.mxu0
  %v2668 = vpop.f32.mrf.mxu0
  %v2669 = vadd.f32 0.0, %v2668
  %v2670 = vpop.f32.mrf.mxu0
  %2671 = vmatprep.mubr.bf16.mxu0 0
  %2672 = vmatmul.mubr.bf16.gmra.mxu0 %v1802
  %v2673 = vpop.f32.mrf.mxu0
  %v2674 = vadd.f32 0.0, %v2673
  %v2675 = vpop.f32.mrf.mxu0
  %v2676 = vpop.f32.mrf.mxu0
  %v2677 = vadd.f32 0.0, %v2676
  %v2678 = vpop.f32.mrf.mxu0
  %2679 = vmatprep.mubr.bf16.mxu0 0
  %2680 = vmatmul.mubr.bf16.gmra.mxu0 %v1803
  %v2681 = vpop.f32.mrf.mxu0
  %v2682 = vadd.f32 0.0, %v2681
  %v2683 = vpop.f32.mrf.mxu0
  %v2684 = vpop.f32.mrf.mxu0
  %v2685 = vadd.f32 0.0, %v2684
  %v2686 = vpop.f32.mrf.mxu0
  %2687 = vmatprep.mubr.bf16.mxu0 0
  %2688 = vmatmul.mubr.bf16.gmra.mxu0 %v1804
  %v2689 = vpop.f32.mrf.mxu0
  %v2690 = vadd.f32 0.0, %v2689
  %v2691 = vpop.f32.mrf.mxu0
  %v2692 = vpop.f32.mrf.mxu0
  %v2693 = vadd.f32 0.0, %v2692
  %v2694 = vpop.f32.mrf.mxu0
  %2695 = vmatprep.mubr.bf16.mxu0 0
  %2696 = vmatmul.mubr.bf16.gmra.mxu0 %v1805
  %v2697 = vpop.f32.mrf.mxu0
  %v2698 = vadd.f32 0.0, %v2697
  %v2699 = vpop.f32.mrf.mxu0
  %v2700 = vpop.f32.mrf.mxu0
  %v2701 = vadd.f32 0.0, %v2700
  %v2702 = vpop.f32.mrf.mxu0
  %2703 = vmatprep.mubr.bf16.mxu0 0
  %2704 = vmatmul.mubr.bf16.gmra.mxu0 %v1806
  %v2705 = vpop.f32.mrf.mxu0
  %v2706 = vadd.f32 0.0, %v2705
  %v2707 = vpop.f32.mrf.mxu0
  %v2708 = vpop.f32.mrf.mxu0
  %v2709 = vadd.f32 0.0, %v2708
  %v2710 = vpop.f32.mrf.mxu0
  %2711 = vmatprep.mubr.bf16.mxu0 0
  %2712 = vmatmul.mubr.bf16.gmra.mxu0 %v1807
  %v2713 = vpop.f32.mrf.mxu0
  %v2714 = vadd.f32 0.0, %v2713
  %v2715 = vpop.f32.mrf.mxu0
  %v2716 = vpop.f32.mrf.mxu0
  %v2717 = vadd.f32 0.0, %v2716
  %v2718 = vpop.f32.mrf.mxu0
  %2719 = vmatprep.mubr.bf16.mxu0 0
  %2720 = vmatmul.mubr.bf16.gmra.mxu0 %v1808
  %v2721 = vpop.f32.mrf.mxu0
  %v2722 = vadd.f32 0.0, %v2721
  %v2723 = vpop.f32.mrf.mxu0
  %v2724 = vpop.f32.mrf.mxu0
  %v2725 = vadd.f32 0.0, %v2724
  %v2726 = vpop.f32.mrf.mxu0
  %2727 = vmatprep.mubr.bf16.mxu0 0
  %2728 = vmatmul.mubr.bf16.gmra.mxu0 %v1809
  %v2729 = vpop.f32.mrf.mxu0
  %v2730 = vadd.f32 0.0, %v2729
  %v2731 = vpop.f32.mrf.mxu0
  %v2732 = vpop.f32.mrf.mxu0
  %v2733 = vadd.f32 0.0, %v2732
  %v2734 = vpop.f32.mrf.mxu0
  %2735 = vdwg.mxu0
  %v2752 = vunpack.c.l.b16 %v2495
  %v2753 = vunpack.c.l.b16 %v2496
  %v2754 = vunpack.c.l.b16 %v2497
  %v2755 = vunpack.c.l.b16 %v2498
  %v2756 = vunpack.c.l.b16 %v2499
  %v2757 = vunpack.c.l.b16 %v2500
  %v2758 = vunpack.c.l.b16 %v2501
  %v2759 = vunpack.c.l.b16 %v2502
  %v2760 = vunpack.c.l.b16 %v2503
  %v2761 = vunpack.c.l.b16 %v2504
  %v2762 = vunpack.c.l.b16 %v2505
  %v2763 = vunpack.c.l.b16 %v2506
  %v2764 = vunpack.c.l.b16 %v2507
  %v2765 = vunpack.c.l.b16 %v2508
  %v2766 = vunpack.c.l.b16 %v2509
  %v2767 = vunpack.c.l.b16 %v2510
  %v2768 = vpack.c.b16 %v2753, %v2752
  %v2769 = vpack.c.b16 %v2755, %v2754
  %v2770 = vpack.c.b16 %v2757, %v2756
  %v2771 = vpack.c.b16 %v2759, %v2758
  %v2772 = vpack.c.b16 %v2761, %v2760
  %v2773 = vpack.c.b16 %v2763, %v2762
  %v2774 = vpack.c.b16 %v2765, %v2764
  %v2775 = vpack.c.b16 %v2767, %v2766
  %2784 = vmatprep.subr.bf16.mxu0 0
  %2785 = vmatpush1.bf16.msra.mxu0 %v2775
  %2786 = vmatprep.subr.bf16.mxu0 0
  %2787 = vmatpush1.bf16.msra.mxu0 %v2774
  %2788 = vmatprep.subr.bf16.mxu0 0
  %2789 = vmatpush1.bf16.msra.mxu0 %v2773
  %2790 = vmatprep.subr.bf16.mxu0 0
  %2791 = vmatpush1.bf16.msra.mxu0 %v2772
  %2792 = vmatprep.subr.bf16.mxu0 0
  %2793 = vmatpush1.bf16.msra.mxu0 %v2771
  %2794 = vmatprep.subr.bf16.mxu0 0
  %2795 = vmatpush1.bf16.msra.mxu0 %v2770
  %2796 = vmatprep.subr.bf16.mxu0 0
  %2797 = vmatpush1.bf16.msra.mxu0 %v2769
  %2798 = vmatprep.subr.bf16.mxu0 0
  %2799 = vmatpush1.bf16.msra.mxu0 %v2768
  %2800 = vmatprep.subr.bf16.mxu0 0
  %2801 = vmatpush2.bf16.msra.mxu0 0
  %2802 = vmatprep.subr.bf16.mxu0 0
  %2803 = vmatpush2.bf16.msra.mxu0 0
  %2804 = vmatprep.subr.bf16.mxu0 0
  %2805 = vmatpush2.bf16.msra.mxu0 0
  %2806 = vmatprep.subr.bf16.mxu0 0
  %2807 = vmatpush2.bf16.msra.mxu0 0
  %2808 = vmatprep.subr.bf16.mxu0 0
  %2809 = vmatpush2.bf16.msra.mxu0 0
  %2810 = vmatprep.subr.bf16.mxu0 0
  %2811 = vmatpush2.bf16.msra.mxu0 0
  %2812 = vmatprep.subr.bf16.mxu0 0
  %2813 = vmatpush2.bf16.msra.mxu0 0
  %2814 = vmatprep.subr.bf16.mxu0 0
  %2815 = vmatpush2.bf16.msra.mxu0 0
  %2816 = vmatprep.mubr.bf16.mxu0 0
  %2817 = vmatmul.mubr.bf16.gmra.mxu0 %v1093
  %v2818 = vpop.f32.mrf.mxu0
  %v2819 = vadd.f32 %v2610, %v2818
  %v2820 = vpop.f32.mrf.mxu0
  %v2821 = vpop.f32.mrf.mxu0
  %v2822 = vadd.f32 %v2613, %v2821
  %v2823 = vpop.f32.mrf.mxu0
  %2824 = vmatprep.mubr.bf16.mxu0 0
  %2825 = vmatmul.mubr.bf16.gmra.mxu0 %v1094
  %v2826 = vpop.f32.mrf.mxu0
  %v2827 = vadd.f32 %v2618, %v2826
  %v2828 = vpop.f32.mrf.mxu0
  %v2829 = vpop.f32.mrf.mxu0
  %v2830 = vadd.f32 %v2621, %v2829
  %v2831 = vpop.f32.mrf.mxu0
  %2832 = vmatprep.mubr.bf16.mxu0 0
  %2833 = vmatmul.mubr.bf16.gmra.mxu0 %v1095
  %v2834 = vpop.f32.mrf.mxu0
  %v2835 = vadd.f32 %v2626, %v2834
  %v2836 = vpop.f32.mrf.mxu0
  %v2837 = vpop.f32.mrf.mxu0
  %v2838 = vadd.f32 %v2629, %v2837
  %v2839 = vpop.f32.mrf.mxu0
  %2840 = vmatprep.mubr.bf16.mxu0 0
  %2841 = vmatmul.mubr.bf16.gmra.mxu0 %v1096
  %v2842 = vpop.f32.mrf.mxu0
  %v2843 = vadd.f32 %v2634, %v2842
  %v2844 = vpop.f32.mrf.mxu0
  %v2845 = vpop.f32.mrf.mxu0
  %v2846 = vadd.f32 %v2637, %v2845
  %v2847 = vpop.f32.mrf.mxu0
  %2848 = vmatprep.mubr.bf16.mxu0 0
  %2849 = vmatmul.mubr.bf16.gmra.mxu0 %v1097
  %v2850 = vpop.f32.mrf.mxu0
  %v2851 = vadd.f32 %v2642, %v2850
  %v2852 = vpop.f32.mrf.mxu0
  %v2853 = vpop.f32.mrf.mxu0
  %v2854 = vadd.f32 %v2645, %v2853
  %v2855 = vpop.f32.mrf.mxu0
  %2856 = vmatprep.mubr.bf16.mxu0 0
  %2857 = vmatmul.mubr.bf16.gmra.mxu0 %v1098
  %v2858 = vpop.f32.mrf.mxu0
  %v2859 = vadd.f32 %v2650, %v2858
  %v2860 = vpop.f32.mrf.mxu0
  %v2861 = vpop.f32.mrf.mxu0
  %v2862 = vadd.f32 %v2653, %v2861
  %v2863 = vpop.f32.mrf.mxu0
  %2864 = vmatprep.mubr.bf16.mxu0 0
  %2865 = vmatmul.mubr.bf16.gmra.mxu0 %v1099
  %v2866 = vpop.f32.mrf.mxu0
  %v2867 = vadd.f32 %v2658, %v2866
  %v2868 = vpop.f32.mrf.mxu0
  %v2869 = vpop.f32.mrf.mxu0
  %v2870 = vadd.f32 %v2661, %v2869
  %v2871 = vpop.f32.mrf.mxu0
  %2872 = vmatprep.mubr.bf16.mxu0 0
  %2873 = vmatmul.mubr.bf16.gmra.mxu0 %v1100
  %v2874 = vpop.f32.mrf.mxu0
  %v2875 = vadd.f32 %v2666, %v2874
  %v2876 = vpop.f32.mrf.mxu0
  %v2877 = vpop.f32.mrf.mxu0
  %v2878 = vadd.f32 %v2669, %v2877
  %v2879 = vpop.f32.mrf.mxu0
  %2880 = vmatprep.mubr.bf16.mxu0 0
  %2881 = vmatmul.mubr.bf16.gmra.mxu0 %v1101
  %v2882 = vpop.f32.mrf.mxu0
  %v2883 = vadd.f32 %v2674, %v2882
  %v2884 = vpop.f32.mrf.mxu0
  %v2885 = vpop.f32.mrf.mxu0
  %v2886 = vadd.f32 %v2677, %v2885
  %v2887 = vpop.f32.mrf.mxu0
  %2888 = vmatprep.mubr.bf16.mxu0 0
  %2889 = vmatmul.mubr.bf16.gmra.mxu0 %v1102
  %v2890 = vpop.f32.mrf.mxu0
  %v2891 = vadd.f32 %v2682, %v2890
  %v2892 = vpop.f32.mrf.mxu0
  %v2893 = vpop.f32.mrf.mxu0
  %v2894 = vadd.f32 %v2685, %v2893
  %v2895 = vpop.f32.mrf.mxu0
  %2896 = vmatprep.mubr.bf16.mxu0 0
  %2897 = vmatmul.mubr.bf16.gmra.mxu0 %v1103
  %v2898 = vpop.f32.mrf.mxu0
  %v2899 = vadd.f32 %v2690, %v2898
  %v2900 = vpop.f32.mrf.mxu0
  %v2901 = vpop.f32.mrf.mxu0
  %v2902 = vadd.f32 %v2693, %v2901
  %v2903 = vpop.f32.mrf.mxu0
  %2904 = vmatprep.mubr.bf16.mxu0 0
  %2905 = vmatmul.mubr.bf16.gmra.mxu0 %v1104
  %v2906 = vpop.f32.mrf.mxu0
  %v2907 = vadd.f32 %v2698, %v2906
  %v2908 = vpop.f32.mrf.mxu0
  %v2909 = vpop.f32.mrf.mxu0
  %v2910 = vadd.f32 %v2701, %v2909
  %v2911 = vpop.f32.mrf.mxu0
  %2912 = vmatprep.mubr.bf16.mxu0 0
  %2913 = vmatmul.mubr.bf16.gmra.mxu0 %v1105
  %v2914 = vpop.f32.mrf.mxu0
  %v2915 = vadd.f32 %v2706, %v2914
  %v2916 = vpop.f32.mrf.mxu0
  %v2917 = vpop.f32.mrf.mxu0
  %v2918 = vadd.f32 %v2709, %v2917
  %v2919 = vpop.f32.mrf.mxu0
  %2920 = vmatprep.mubr.bf16.mxu0 0
  %2921 = vmatmul.mubr.bf16.gmra.mxu0 %v1106
  %v2922 = vpop.f32.mrf.mxu0
  %v2923 = vadd.f32 %v2714, %v2922
  %v2924 = vpop.f32.mrf.mxu0
  %v2925 = vpop.f32.mrf.mxu0
  %v2926 = vadd.f32 %v2717, %v2925
  %v2927 = vpop.f32.mrf.mxu0
  %2928 = vmatprep.mubr.bf16.mxu0 0
  %2929 = vmatmul.mubr.bf16.gmra.mxu0 %v1107
  %v2930 = vpop.f32.mrf.mxu0
  %v2931 = vadd.f32 %v2722, %v2930
  %v2932 = vpop.f32.mrf.mxu0
  %v2933 = vpop.f32.mrf.mxu0
  %v2934 = vadd.f32 %v2725, %v2933
  %v2935 = vpop.f32.mrf.mxu0
  %2936 = vmatprep.mubr.bf16.mxu0 0
  %2937 = vmatmul.mubr.bf16.gmra.mxu0 %v1108
  %v2938 = vpop.f32.mrf.mxu0
  %v2939 = vadd.f32 %v2730, %v2938
  %v2940 = vpop.f32.mrf.mxu0
  %v2941 = vpop.f32.mrf.mxu0
  %v2942 = vadd.f32 %v2733, %v2941
  %v2943 = vpop.f32.mrf.mxu0
  %2944 = vdwg.mxu0
  %v2945 = vpack.c.bf16 %v2464, %v2463
  %v2946 = vpack.c.bf16 %v2466, %v2465
  %v2947 = vpack.c.bf16 %v2468, %v2467
  %v2948 = vpack.c.bf16 %v2470, %v2469
  %v2949 = vpack.c.bf16 %v2472, %v2471
  %v2950 = vpack.c.bf16 %v2474, %v2473
  %v2951 = vpack.c.bf16 %v2476, %v2475
  %v2952 = vpack.c.bf16 %v2478, %v2477
  %v2953 = vpack.c.bf16 %v2480, %v2479
  %v2954 = vpack.c.bf16 %v2482, %v2481
  %v2955 = vpack.c.bf16 %v2484, %v2483
  %v2956 = vpack.c.bf16 %v2486, %v2485
  %v2957 = vpack.c.bf16 %v2488, %v2487
  %v2958 = vpack.c.bf16 %v2490, %v2489
  %v2959 = vpack.c.bf16 %v2492, %v2491
  %v2960 = vpack.c.bf16 %v2494, %v2493
  %v2961 = vld [vmem:[%s7] sm:$0xf]
  %v2962 = vld [vmem:[%s7 + $0x4] sm:$0xf]
  %v2963 = vld [vmem:[%s7 + $0x8] sm:$0xf]
  %v2964 = vld [vmem:[%s7 + $0xc] sm:$0xf]
  %v2965 = vld [vmem:[%s7 + $0x10] sm:$0xf]
  %v2966 = vld [vmem:[%s7 + $0x14] sm:$0xf]
  %v2967 = vld [vmem:[%s7 + $0x18] sm:$0xf]
  %v2968 = vld [vmem:[%s7 + $0x1c] sm:$0xf]
  %v2969 = vld [vmem:[%s7 + $0x20] sm:$0xf]
  %v2970 = vld [vmem:[%s7 + $0x24] sm:$0xf]
  %v2971 = vld [vmem:[%s7 + $0x28] sm:$0xf]
  %v2972 = vld [vmem:[%s7 + $0x2c] sm:$0xf]
  %v2973 = vld [vmem:[%s7 + $0x30] sm:$0xf]
  %v2974 = vld [vmem:[%s7 + $0x34] sm:$0xf]
  %v2975 = vld [vmem:[%s7 + $0x38] sm:$0xf]
  %v2976 = vld [vmem:[%s7 + $0x3c] sm:$0xf]
  %v2993 = vunpack.c.l.b16 %v2961
  %v2994 = vunpack.c.l.b16 %v2962
  %v2995 = vunpack.c.l.b16 %v2963
  %v2996 = vunpack.c.l.b16 %v2964
  %v2997 = vunpack.c.l.b16 %v2965
  %v2998 = vunpack.c.l.b16 %v2966
  %v2999 = vunpack.c.l.b16 %v2967
  %v3000 = vunpack.c.l.b16 %v2968
  %v3001 = vunpack.c.l.b16 %v2969
  %v3002 = vunpack.c.l.b16 %v2970
  %v3003 = vunpack.c.l.b16 %v2971
  %v3004 = vunpack.c.l.b16 %v2972
  %v3005 = vunpack.c.l.b16 %v2973
  %v3006 = vunpack.c.l.b16 %v2974
  %v3007 = vunpack.c.l.b16 %v2975
  %v3008 = vunpack.c.l.b16 %v2976
  %v3009 = vpack.c.b16 %v2994, %v2993
  %v3010 = vpack.c.b16 %v2996, %v2995
  %v3011 = vpack.c.b16 %v2998, %v2997
  %v3012 = vpack.c.b16 %v3000, %v2999
  %v3013 = vpack.c.b16 %v3002, %v3001
  %v3014 = vpack.c.b16 %v3004, %v3003
  %v3015 = vpack.c.b16 %v3006, %v3005
  %v3016 = vpack.c.b16 %v3008, %v3007
  %3025 = vmatprep.subr.bf16.mxu0 0
  %3026 = vmatpush1.bf16.msra.mxu0 %v3016
  %3027 = vmatprep.subr.bf16.mxu0 0
  %3028 = vmatpush1.bf16.msra.mxu0 %v3015
  %3029 = vmatprep.subr.bf16.mxu0 0
  %3030 = vmatpush1.bf16.msra.mxu0 %v3014
  %3031 = vmatprep.subr.bf16.mxu0 0
  %3032 = vmatpush1.bf16.msra.mxu0 %v3013
  %3033 = vmatprep.subr.bf16.mxu0 0
  %3034 = vmatpush1.bf16.msra.mxu0 %v3012
  %3035 = vmatprep.subr.bf16.mxu0 0
  %3036 = vmatpush1.bf16.msra.mxu0 %v3011
  %3037 = vmatprep.subr.bf16.mxu0 0
  %3038 = vmatpush1.bf16.msra.mxu0 %v3010
  %3039 = vmatprep.subr.bf16.mxu0 0
  %3040 = vmatpush1.bf16.msra.mxu0 %v3009
  %3041 = vmatprep.subr.bf16.mxu0 0
  %3042 = vmatpush2.bf16.msra.mxu0 0
  %3043 = vmatprep.subr.bf16.mxu0 0
  %3044 = vmatpush2.bf16.msra.mxu0 0
  %3045 = vmatprep.subr.bf16.mxu0 0
  %3046 = vmatpush2.bf16.msra.mxu0 0
  %3047 = vmatprep.subr.bf16.mxu0 0
  %3048 = vmatpush2.bf16.msra.mxu0 0
  %3049 = vmatprep.subr.bf16.mxu0 0
  %3050 = vmatpush2.bf16.msra.mxu0 0
  %3051 = vmatprep.subr.bf16.mxu0 0
  %3052 = vmatpush2.bf16.msra.mxu0 0
  %3053 = vmatprep.subr.bf16.mxu0 0
  %3054 = vmatpush2.bf16.msra.mxu0 0
  %3055 = vmatprep.subr.bf16.mxu0 0
  %3056 = vmatpush2.bf16.msra.mxu0 0
  %3057 = vmatprep.mubr.bf16.mxu0 0
  %3058 = vmatmul.mubr.bf16.gmra.mxu0 %v2945
  %v3059 = vpop.f32.mrf.mxu0
  %v3060 = vadd.f32 0.0, %v3059
  %v3061 = vpop.f32.mrf.mxu0
  %v3062 = vpop.f32.mrf.mxu0
  %v3063 = vadd.f32 0.0, %v3062
  %v3064 = vpop.f32.mrf.mxu0
  %3065 = vmatprep.mubr.bf16.mxu0 0
  %3066 = vmatmul.mubr.bf16.gmra.mxu0 %v2946
  %v3067 = vpop.f32.mrf.mxu0
  %v3068 = vadd.f32 0.0, %v3067
  %v3069 = vpop.f32.mrf.mxu0
  %v3070 = vpop.f32.mrf.mxu0
  %v3071 = vadd.f32 0.0, %v3070
  %v3072 = vpop.f32.mrf.mxu0
  %3073 = vmatprep.mubr.bf16.mxu0 0
  %3074 = vmatmul.mubr.bf16.gmra.mxu0 %v2947
  %v3075 = vpop.f32.mrf.mxu0
  %v3076 = vadd.f32 0.0, %v3075
  %v3077 = vpop.f32.mrf.mxu0
  %v3078 = vpop.f32.mrf.mxu0
  %v3079 = vadd.f32 0.0, %v3078
  %v3080 = vpop.f32.mrf.mxu0
  %3081 = vmatprep.mubr.bf16.mxu0 0
  %3082 = vmatmul.mubr.bf16.gmra.mxu0 %v2948
  %v3083 = vpop.f32.mrf.mxu0
  %v3084 = vadd.f32 0.0, %v3083
  %v3085 = vpop.f32.mrf.mxu0
  %v3086 = vpop.f32.mrf.mxu0
  %v3087 = vadd.f32 0.0, %v3086
  %v3088 = vpop.f32.mrf.mxu0
  %3089 = vmatprep.mubr.bf16.mxu0 0
  %3090 = vmatmul.mubr.bf16.gmra.mxu0 %v2949
  %v3091 = vpop.f32.mrf.mxu0
  %v3092 = vadd.f32 0.0, %v3091
  %v3093 = vpop.f32.mrf.mxu0
  %v3094 = vpop.f32.mrf.mxu0
  %v3095 = vadd.f32 0.0, %v3094
  %v3096 = vpop.f32.mrf.mxu0
  %3097 = vmatprep.mubr.bf16.mxu0 0
  %3098 = vmatmul.mubr.bf16.gmra.mxu0 %v2950
  %v3099 = vpop.f32.mrf.mxu0
  %v3100 = vadd.f32 0.0, %v3099
  %v3101 = vpop.f32.mrf.mxu0
  %v3102 = vpop.f32.mrf.mxu0
  %v3103 = vadd.f32 0.0, %v3102
  %v3104 = vpop.f32.mrf.mxu0
  %3105 = vmatprep.mubr.bf16.mxu0 0
  %3106 = vmatmul.mubr.bf16.gmra.mxu0 %v2951
  %v3107 = vpop.f32.mrf.mxu0
  %v3108 = vadd.f32 0.0, %v3107
  %v3109 = vpop.f32.mrf.mxu0
  %v3110 = vpop.f32.mrf.mxu0
  %v3111 = vadd.f32 0.0, %v3110
  %v3112 = vpop.f32.mrf.mxu0
  %3113 = vmatprep.mubr.bf16.mxu0 0
  %3114 = vmatmul.mubr.bf16.gmra.mxu0 %v2952
  %v3115 = vpop.f32.mrf.mxu0
  %v3116 = vadd.f32 0.0, %v3115
  %v3117 = vpop.f32.mrf.mxu0
  %v3118 = vpop.f32.mrf.mxu0
  %v3119 = vadd.f32 0.0, %v3118
  %v3120 = vpop.f32.mrf.mxu0
  %3121 = vmatprep.mubr.bf16.mxu0 0
  %3122 = vmatmul.mubr.bf16.gmra.mxu0 %v2953
  %v3123 = vpop.f32.mrf.mxu0
  %v3124 = vadd.f32 0.0, %v3123
  %v3125 = vpop.f32.mrf.mxu0
  %v3126 = vpop.f32.mrf.mxu0
  %v3127 = vadd.f32 0.0, %v3126
  %v3128 = vpop.f32.mrf.mxu0
  %3129 = vmatprep.mubr.bf16.mxu0 0
  %3130 = vmatmul.mubr.bf16.gmra.mxu0 %v2954
  %v3131 = vpop.f32.mrf.mxu0
  %v3132 = vadd.f32 0.0, %v3131
  %v3133 = vpop.f32.mrf.mxu0
  %v3134 = vpop.f32.mrf.mxu0
  %v3135 = vadd.f32 0.0, %v3134
  %v3136 = vpop.f32.mrf.mxu0
  %3137 = vmatprep.mubr.bf16.mxu0 0
  %3138 = vmatmul.mubr.bf16.gmra.mxu0 %v2955
  %v3139 = vpop.f32.mrf.mxu0
  %v3140 = vadd.f32 0.0, %v3139
  %v3141 = vpop.f32.mrf.mxu0
  %v3142 = vpop.f32.mrf.mxu0
  %v3143 = vadd.f32 0.0, %v3142
  %v3144 = vpop.f32.mrf.mxu0
  %3145 = vmatprep.mubr.bf16.mxu0 0
  %3146 = vmatmul.mubr.bf16.gmra.mxu0 %v2956
  %v3147 = vpop.f32.mrf.mxu0
  %v3148 = vadd.f32 0.0, %v3147
  %v3149 = vpop.f32.mrf.mxu0
  %v3150 = vpop.f32.mrf.mxu0
  %v3151 = vadd.f32 0.0, %v3150
  %v3152 = vpop.f32.mrf.mxu0
  %3153 = vmatprep.mubr.bf16.mxu0 0
  %3154 = vmatmul.mubr.bf16.gmra.mxu0 %v2957
  %v3155 = vpop.f32.mrf.mxu0
  %v3156 = vadd.f32 0.0, %v3155
  %v3157 = vpop.f32.mrf.mxu0
  %v3158 = vpop.f32.mrf.mxu0
  %v3159 = vadd.f32 0.0, %v3158
  %v3160 = vpop.f32.mrf.mxu0
  %3161 = vmatprep.mubr.bf16.mxu0 0
  %3162 = vmatmul.mubr.bf16.gmra.mxu0 %v2958
  %v3163 = vpop.f32.mrf.mxu0
  %v3164 = vadd.f32 0.0, %v3163
  %v3165 = vpop.f32.mrf.mxu0
  %v3166 = vpop.f32.mrf.mxu0
  %v3167 = vadd.f32 0.0, %v3166
  %v3168 = vpop.f32.mrf.mxu0
  %3169 = vmatprep.mubr.bf16.mxu0 0
  %3170 = vmatmul.mubr.bf16.gmra.mxu0 %v2959
  %v3171 = vpop.f32.mrf.mxu0
  %v3172 = vadd.f32 0.0, %v3171
  %v3173 = vpop.f32.mrf.mxu0
  %v3174 = vpop.f32.mrf.mxu0
  %v3175 = vadd.f32 0.0, %v3174
  %v3176 = vpop.f32.mrf.mxu0
  %3177 = vmatprep.mubr.bf16.mxu0 0
  %3178 = vmatmul.mubr.bf16.gmra.mxu0 %v2960
  %v3179 = vpop.f32.mrf.mxu0
  %v3180 = vadd.f32 0.0, %v3179
  %v3181 = vpop.f32.mrf.mxu0
  %v3182 = vpop.f32.mrf.mxu0
  %v3183 = vadd.f32 0.0, %v3182
  %v3184 = vpop.f32.mrf.mxu0
  %3185 = vdwg.mxu0
  %v3186 = vadd.f32 %v2819, %v3060
  %v3187 = vadd.f32 %v2822, %v3063
  %v3188 = vadd.f32 %v2827, %v3068
  %v3189 = vadd.f32 %v2830, %v3071
  %v3190 = vadd.f32 %v2835, %v3076
  %v3191 = vadd.f32 %v2838, %v3079
  %v3192 = vadd.f32 %v2843, %v3084
  %v3193 = vadd.f32 %v2846, %v3087
  %v3194 = vadd.f32 %v2851, %v3092
  %v3195 = vadd.f32 %v2854, %v3095
  %v3196 = vadd.f32 %v2859, %v3100
  %v3197 = vadd.f32 %v2862, %v3103
  %v3198 = vadd.f32 %v2867, %v3108
  %v3199 = vadd.f32 %v2870, %v3111
  %v3200 = vadd.f32 %v2875, %v3116
  %v3201 = vadd.f32 %v2878, %v3119
  %v3202 = vadd.f32 %v2883, %v3124
  %v3203 = vadd.f32 %v2886, %v3127
  %v3204 = vadd.f32 %v2891, %v3132
  %v3205 = vadd.f32 %v2894, %v3135
  %v3206 = vadd.f32 %v2899, %v3140
  %v3207 = vadd.f32 %v2902, %v3143
  %v3208 = vadd.f32 %v2907, %v3148
  %v3209 = vadd.f32 %v2910, %v3151
  %v3210 = vadd.f32 %v2915, %v3156
  %v3211 = vadd.f32 %v2918, %v3159
  %v3212 = vadd.f32 %v2923, %v3164
  %v3213 = vadd.f32 %v2926, %v3167
  %v3214 = vadd.f32 %v2931, %v3172
  %v3215 = vadd.f32 %v2934, %v3175
  %v3216 = vadd.f32 %v2939, %v3180
  %v3217 = vadd.f32 %v2942, %v3183
  %v3218 = vld [vmem:[%s8] sm:$0x1]
  %v3220 = vlaneseq
  %v3221 = vshrl.u32 %v3220, 7
  %v3222 = vsub.s32 0, %v3221
  %v3223 = vrot.slane %v3218, %v3222
  %v3225 = vadd.f32 %v3186, %v3223
  %v3226 = vadd.f32 %v3187, %v3223
  %v3227 = vadd.f32 %v3188, %v3223
  %v3228 = vadd.f32 %v3189, %v3223
  %v3229 = vadd.f32 %v3190, %v3223
  %v3230 = vadd.f32 %v3191, %v3223
  %v3231 = vadd.f32 %v3192, %v3223
  %v3232 = vadd.f32 %v3193, %v3223
  %v3233 = vadd.f32 %v3194, %v3223
  %v3234 = vadd.f32 %v3195, %v3223
  %v3235 = vadd.f32 %v3196, %v3223
  %v3236 = vadd.f32 %v3197, %v3223
  %v3237 = vadd.f32 %v3198, %v3223
  %v3238 = vadd.f32 %v3199, %v3223
  %v3239 = vadd.f32 %v3200, %v3223
  %v3240 = vadd.f32 %v3201, %v3223
  %v3241 = vadd.f32 %v3202, %v3223
  %v3242 = vadd.f32 %v3203, %v3223
  %v3243 = vadd.f32 %v3204, %v3223
  %v3244 = vadd.f32 %v3205, %v3223
  %v3245 = vadd.f32 %v3206, %v3223
  %v3246 = vadd.f32 %v3207, %v3223
  %v3247 = vadd.f32 %v3208, %v3223
  %v3248 = vadd.f32 %v3209, %v3223
  %v3249 = vadd.f32 %v3210, %v3223
  %v3250 = vadd.f32 %v3211, %v3223
  %v3251 = vadd.f32 %v3212, %v3223
  %v3252 = vadd.f32 %v3213, %v3223
  %v3253 = vadd.f32 %v3214, %v3223
  %v3254 = vadd.f32 %v3215, %v3223
  %v3255 = vadd.f32 %v3216, %v3223
  %v3256 = vadd.f32 %v3217, %v3223
  %3257 = vst [vmem:[%s11] sm:$0xff] %v3225
  %3258 = vst [vmem:[%s11 + $0x8] sm:$0xff] %v3226
  %3259 = vst [vmem:[%s11 + $0x10] sm:$0xff] %v3227
  %3260 = vst [vmem:[%s11 + $0x18] sm:$0xff] %v3228
  %3261 = vst [vmem:[%s11 + $0x20] sm:$0xff] %v3229
  %3262 = vst [vmem:[%s11 + $0x28] sm:$0xff] %v3230
  %3263 = vst [vmem:[%s11 + $0x30] sm:$0xff] %v3231
  %3264 = vst [vmem:[%s11 + $0x38] sm:$0xff] %v3232
  %3265 = vst [vmem:[%s11 + $0x40] sm:$0xff] %v3233
  %3266 = vst [vmem:[%s11 + $0x48] sm:$0xff] %v3234
  %3267 = vst [vmem:[%s11 + $0x50] sm:$0xff] %v3235
  %3268 = vst [vmem:[%s11 + $0x58] sm:$0xff] %v3236
  %3269 = vst [vmem:[%s11 + $0x60] sm:$0xff] %v3237
  %3270 = vst [vmem:[%s11 + $0x68] sm:$0xff] %v3238
  %3271 = vst [vmem:[%s11 + $0x70] sm:$0xff] %v3239
  %3272 = vst [vmem:[%s11 + $0x78] sm:$0xff] %v3240
  %3273 = vst [vmem:[%s11 + $0x80] sm:$0xff] %v3241
  %3274 = vst [vmem:[%s11 + $0x88] sm:$0xff] %v3242
  %3275 = vst [vmem:[%s11 + $0x90] sm:$0xff] %v3243
  %3276 = vst [vmem:[%s11 + $0x98] sm:$0xff] %v3244
  %3277 = vst [vmem:[%s11 + $0xa0] sm:$0xff] %v3245
  %3278 = vst [vmem:[%s11 + $0xa8] sm:$0xff] %v3246
  %3279 = vst [vmem:[%s11 + $0xb0] sm:$0xff] %v3247
  %3280 = vst [vmem:[%s11 + $0xb8] sm:$0xff] %v3248
  %3281 = vst [vmem:[%s11 + $0xc0] sm:$0xff] %v3249
  %3282 = vst [vmem:[%s11 + $0xc8] sm:$0xff] %v3250
  %3283 = vst [vmem:[%s11 + $0xd0] sm:$0xff] %v3251
  %3284 = vst [vmem:[%s11 + $0xd8] sm:$0xff] %v3252
  %3285 = vst [vmem:[%s11 + $0xe0] sm:$0xff] %v3253
  %3286 = vst [vmem:[%s11 + $0xe8] sm:$0xff] %v3254
  %3287 = vst [vmem:[%s11 + $0xf0] sm:$0xff] %v3255
  %3288 = vst [vmem:[%s11 + $0xf8] sm:$0xff] %v3256
  // Predicated region
  $region46: #{_lambda_.1} parent=0 // pred_check
    _
  $region47: #{_lambda_.1} parent=0 // pred_check_branch
    %3290 = sbr.rel (0) target = $region49
  $region48: #{_lambda_.1} parent=0 // pred_region
    _
  $region49: #{_lambda_.1} parent=0 // pred_fallthru
    _
  // Predicated region
  $region50: #{_lambda_.1} parent=0 // pred_check
    _
  $region51: #{_lambda_.1} parent=0 // pred_check_branch
    %3292 = sbr.rel (0) target = $region53
  $region52: #{_lambda_.1} parent=0 // pred_region
    _
  $region53: #{_lambda_.1} parent=0 // pred_fallthru
    _

</llo_original>
